<compile_context>
chip_gen: v7x
topology: tpu7x:2x2x1
jax: 0.10.0
libtpu: 0.0.40
codegen_flags: <defaults>
</compile_context>

<pallas_src>
import jax
import jax.numpy as jnp
from jax.experimental import pallas as pl
from jax.experimental.pallas import tpu as pltpu

D_IN = 3072
H1 = 512
H2 = 256
D_OUT = 10
D_OUT_PAD = 128   # lane-aligned padded output width
TM_MAX = 512      # batch tile; amortizes per-step overhead, fits VMEM on all gens


def _round_up(n, m):
    return ((n + m - 1) // m) * m


def mlp_kernel(x_ref, w1_ref, b1_ref, w2_ref, b2_ref, w3_ref, b3_ref, o_ref):
    # In-kernel f32 -> bf16 cast of the streamed input tile (VPU, co-issues
    # under the MXU work); avoids an extra HBM pass in the wrapper.
    x = x_ref[...].astype(jnp.bfloat16)
    # fc1 + relu  (bf16 operands, f32 accumulation)
    h1 = jnp.dot(x, w1_ref[...], preferred_element_type=jnp.float32)
    h1 = jnp.maximum(h1 + b1_ref[...], 0.0).astype(jnp.bfloat16)
    # fc2 + relu
    h2 = jnp.dot(h1, w2_ref[...], preferred_element_type=jnp.float32)
    h2 = jnp.maximum(h2 + b2_ref[...], 0.0).astype(jnp.bfloat16)
    # fc3 (no activation)
    o = jnp.dot(h2, w3_ref[...], preferred_element_type=jnp.float32)
    o_ref[...] = (o + b3_ref[...]).astype(o_ref.dtype)


def prepare_params(params):
    """One-time param prep: bf16 weights, f32 biases as (1, H), fc3 padded to 128."""
    w1, b1, w2, b2, w3, b3 = params
    w3_p = jnp.zeros((H2, D_OUT_PAD), jnp.float32).at[:, :D_OUT].set(w3)
    b3_p = jnp.zeros((1, D_OUT_PAD), jnp.float32).at[:, :D_OUT].set(b3)
    return (
        w1.astype(jnp.bfloat16),
        b1.reshape(1, H1).astype(jnp.float32),
        w2.astype(jnp.bfloat16),
        b2.reshape(1, H2).astype(jnp.float32),
        w3_p.astype(jnp.bfloat16),
        b3_p,
    )


def mlp_forward(x_nchw, prepared):
    """x_nchw: [B, 3, 32, 32] float32 -> logits [B, 10] float32."""
    w1, b1, w2, b2, w3_p, b3_p = prepared
    B = x_nchw.shape[0]
    # Same flattening order as torch's x.view(B, -1); stays float32 (cast is
    # done inside the kernel).
    x = x_nchw.reshape(B, -1)

    # Batch tiling: TM rows per grid step.  TM shrinks to round_up(B, 8) for
    # small batches so no padding pass is needed; padding only happens for
    # ragged B (choose batch sizes that are multiples of 8 / TM to avoid it).
    TM = min(TM_MAX, _round_up(B, 8))
    B_pad = _round_up(B, TM)
    if B_pad != B:
        x = jnp.pad(x, ((0, B_pad - B), (0, 0)))
    grid = (B_pad // TM,)

    # Constant block index => weights/biases stay VMEM-resident across steps.
    resident = lambda shape: pl.BlockSpec(shape, lambda i: tuple(0 for _ in shape))

    out_pad = pl.pallas_call(
        mlp_kernel,
        out_shape=jax.ShapeDtypeStruct((B_pad, D_OUT_PAD), jnp.float32),
        grid_spec=pltpu.PrefetchScalarGridSpec(
            num_scalar_prefetch=0,
            grid=grid,
            in_specs=[
                pl.BlockSpec((TM, D_IN), lambda i: (i, 0)),   # f32 x tile streams
                resident((D_IN, H1)),                         # bf16 weights resident
                resident((1, H1)),
                resident((H1, H2)),
                resident((1, H2)),
                resident((H2, D_OUT_PAD)),
                resident((1, D_OUT_PAD)),
            ],
            out_specs=pl.BlockSpec((TM, D_OUT_PAD), lambda i: (i, 0)),
        ),
        compiler_params=pltpu.CompilerParams(
            dimension_semantics=("parallel",),
            vmem_limit_bytes=40 << 20,
        ),
    )(x, w1, b1, w2, b2, w3_p, b3_p)

    return out_pad[:B, :D_OUT]


def init_params(key):
    """Deterministic init mimicking nn.Linear's U(-1/sqrt(fan_in), 1/sqrt(fan_in))."""
    ks = jax.random.split(key, 6)

    def linear(kw, kb, fan_in, fan_out):
        bound = 1.0 / jnp.sqrt(fan_in)
        w = jax.random.uniform(kw, (fan_in, fan_out), jnp.float32, -bound, bound)
        b = jax.random.uniform(kb, (fan_out,), jnp.float32, -bound, bound)
        return w, b

    w1, b1 = linear(ks[0], ks[1], D_IN, H1)
    w2, b2 = linear(ks[2], ks[3], H1, H2)
    w3, b3 = linear(ks[4], ks[5], H2, D_OUT)
    return (w1, b1, w2, b2, w3, b3)


if __name__ == "__main__":
    key = jax.random.PRNGKey(0)
    kx, kp = jax.random.split(key)

    B = 8
    x = jax.random.normal(kx, (B, 3, 32, 32), jnp.float32)  # CIFAR-shaped NCHW input
    params = init_params(kp)
    prepared = prepare_params(params)

    fwd = jax.jit(mlp_forward)
    logits = fwd(x, prepared)
    jax.block_until_ready(logits)

    # Pure-JAX reference with matching bf16-operand / f32-accumulation math.
    w1, b1, w2, b2, w3, b3 = params
    xf = x.reshape(B, -1).astype(jnp.bfloat16)
    h1 = jnp.dot(xf, w1.astype(jnp.bfloat16), preferred_element_type=jnp.float32) + b1
    h1 = jnp.maximum(h1, 0.0).astype(jnp.bfloat16)
    h2 = jnp.dot(h1, w2.astype(jnp.bfloat16), preferred_element_type=jnp.float32) + b2
    h2 = jnp.maximum(h2, 0.0).astype(jnp.bfloat16)
    ref = jnp.dot(h2, w3.astype(jnp.bfloat16), preferred_element_type=jnp.float32) + b3

    assert logits.shape == (B, D_OUT)
    assert jnp.allclose(logits, ref, atol=2e-2, rtol=2e-2)

    # Sanity vs. full-f32 reference (looser: bf16 weight/activation rounding).
    ref32 = jnp.maximum(x.reshape(B, -1) @ w1 + b1, 0.0)
    ref32 = jnp.maximum(ref32 @ w2 + b2, 0.0)
    ref32 = ref32 @ w3 + b3
    assert jnp.allclose(logits, ref32, atol=1e-1, rtol=1e-1)

    print("KERNEL_OK")
</pallas_src>

<mosaic_0001>
module attributes {stable_mosaic.version = 11 : i64} {
  func.func @mlp_kernel(%arg0: i32, %arg1: memref<8x3072xf32, #tpu.memory_space<vmem>>, %arg2: memref<3072x512xbf16, #tpu.memory_space<vmem>>, %arg3: memref<1x512xf32, #tpu.memory_space<vmem>>, %arg4: memref<512x256xbf16, #tpu.memory_space<vmem>>, %arg5: memref<1x256xf32, #tpu.memory_space<vmem>>, %arg6: memref<256x128xbf16, #tpu.memory_space<vmem>>, %arg7: memref<1x128xf32, #tpu.memory_space<vmem>>, %arg8: memref<8x128xf32, #tpu.memory_space<vmem>>) attributes {dimension_semantics = [#tpu.dimension_semantics<parallel>], iteration_bounds = array<i64: 1>, scalar_prefetch = 0 : i64, scratch_operands = 0 : i64, tpu.core_type = #tpu.core_type<tc>, window_params = [{transform_indices = @transform_0, window_bounds = array<i64: 8, 3072>}, {pipeline_mode = #tpu.pipeline_mode<synchronous>, transform_indices = @transform_1, window_bounds = array<i64: 3072, 512>}, {pipeline_mode = #tpu.pipeline_mode<synchronous>, transform_indices = @transform_2, window_bounds = array<i64: 1, 512>}, {pipeline_mode = #tpu.pipeline_mode<synchronous>, transform_indices = @transform_3, window_bounds = array<i64: 512, 256>}, {pipeline_mode = #tpu.pipeline_mode<synchronous>, transform_indices = @transform_4, window_bounds = array<i64: 1, 256>}, {pipeline_mode = #tpu.pipeline_mode<synchronous>, transform_indices = @transform_5, window_bounds = array<i64: 256, 128>}, {pipeline_mode = #tpu.pipeline_mode<synchronous>, transform_indices = @transform_6, window_bounds = array<i64: 1, 128>}, {transform_indices = @transform_7, window_bounds = array<i64: 8, 128>}]} {
    %c0 = arith.constant 0 : index
    %c0_0 = arith.constant 0 : index
    %0 = vector.load %arg1[%c0, %c0_0] : memref<8x3072xf32, #tpu.memory_space<vmem>>, vector<8x3072xf32>
    %1 = arith.truncf %0 : vector<8x3072xf32> to vector<8x3072xbf16>
    %c0_1 = arith.constant 0 : index
    %c0_2 = arith.constant 0 : index
    %2 = vector.load %arg2[%c0_1, %c0_2] : memref<3072x512xbf16, #tpu.memory_space<vmem>>, vector<3072x512xbf16>
    %cst = arith.constant dense<0.000000e+00> : vector<8x512xf32>
    %3 = tpu.matmul %1, %2, %cst {dimension_numbers = #tpu.dot_dimension_numbers<[1], [0], [0], [1], [0, 0, 1, 1], [], []>} : vector<8x3072xbf16>, vector<3072x512xbf16>, vector<8x512xf32> -> vector<8x512xf32>
    %c0_3 = arith.constant 0 : index
    %c0_4 = arith.constant 0 : index
    %4 = vector.load %arg3[%c0_3, %c0_4] : memref<1x512xf32, #tpu.memory_space<vmem>>, vector<1x512xf32>
    %5 = vector.broadcast %4 : vector<1x512xf32> to vector<8x512xf32>
    %6 = arith.addf %3, %5 : vector<8x512xf32>
    %cst_5 = arith.constant 0.000000e+00 : f32
    %7 = vector.broadcast %cst_5 : f32 to vector<8x512xf32>
    %8 = arith.maximumf %6, %7 : vector<8x512xf32>
    %9 = arith.truncf %8 : vector<8x512xf32> to vector<8x512xbf16>
    %c0_6 = arith.constant 0 : index
    %c0_7 = arith.constant 0 : index
    %10 = vector.load %arg4[%c0_6, %c0_7] : memref<512x256xbf16, #tpu.memory_space<vmem>>, vector<512x256xbf16>
    %cst_8 = arith.constant dense<0.000000e+00> : vector<8x256xf32>
    %11 = tpu.matmul %9, %10, %cst_8 {dimension_numbers = #tpu.dot_dimension_numbers<[1], [0], [0], [1], [0, 0, 1, 1], [], []>} : vector<8x512xbf16>, vector<512x256xbf16>, vector<8x256xf32> -> vector<8x256xf32>
    %c0_9 = arith.constant 0 : index
    %c0_10 = arith.constant 0 : index
    %12 = vector.load %arg5[%c0_9, %c0_10] : memref<1x256xf32, #tpu.memory_space<vmem>>, vector<1x256xf32>
    %13 = vector.broadcast %12 : vector<1x256xf32> to vector<8x256xf32>
    %14 = arith.addf %11, %13 : vector<8x256xf32>
    %cst_11 = arith.constant 0.000000e+00 : f32
    %15 = vector.broadcast %cst_11 : f32 to vector<8x256xf32>
    %16 = arith.maximumf %14, %15 : vector<8x256xf32>
    %17 = arith.truncf %16 : vector<8x256xf32> to vector<8x256xbf16>
    %c0_12 = arith.constant 0 : index
    %c0_13 = arith.constant 0 : index
    %18 = vector.load %arg6[%c0_12, %c0_13] : memref<256x128xbf16, #tpu.memory_space<vmem>>, vector<256x128xbf16>
    %cst_14 = arith.constant dense<0.000000e+00> : vector<8x128xf32>
    %19 = tpu.matmul %17, %18, %cst_14 {dimension_numbers = #tpu.dot_dimension_numbers<[1], [0], [0], [1], [0, 0, 1, 1], [], []>} : vector<8x256xbf16>, vector<256x128xbf16>, vector<8x128xf32> -> vector<8x128xf32>
    %c0_15 = arith.constant 0 : index
    %c0_16 = arith.constant 0 : index
    %20 = vector.load %arg7[%c0_15, %c0_16] : memref<1x128xf32, #tpu.memory_space<vmem>>, vector<1x128xf32>
    %21 = vector.broadcast %20 : vector<1x128xf32> to vector<8x128xf32>
    %22 = arith.addf %19, %21 : vector<8x128xf32>
    %c0_17 = arith.constant 0 : index
    %c0_18 = arith.constant 0 : index
    %23 = vector.load %arg8[%c0_17, %c0_18] : memref<8x128xf32, #tpu.memory_space<vmem>>, vector<8x128xf32>
    tpu.vector_store %arg8[%c0_17, %c0_18], %22 {strides = array<i32>} : memref<8x128xf32, #tpu.memory_space<vmem>>, vector<8x128xf32>,
    return
  }
  func.func @transform_0(%arg0: i32) -> (i32, i32) {
    %c0_i32 = arith.constant 0 : i32
    %c0_i32_0 = arith.constant 0 : i32
    return %arg0, %c0_i32 : i32, i32
  }
  func.func @transform_1(%arg0: i32) -> (i32, i32) {
    %c0_i32 = arith.constant 0 : i32
    %c0_i32_0 = arith.constant 0 : i32
    %c0_i32_1 = arith.constant 0 : i32
    return %c0_i32, %c0_i32_0 : i32, i32
  }
  func.func @transform_2(%arg0: i32) -> (i32, i32) {
    %c0_i32 = arith.constant 0 : i32
    %c0_i32_0 = arith.constant 0 : i32
    %c0_i32_1 = arith.constant 0 : i32
    return %c0_i32, %c0_i32_0 : i32, i32
  }
  func.func @transform_3(%arg0: i32) -> (i32, i32) {
    %c0_i32 = arith.constant 0 : i32
    %c0_i32_0 = arith.constant 0 : i32
    %c0_i32_1 = arith.constant 0 : i32
    return %c0_i32, %c0_i32_0 : i32, i32
  }
  func.func @transform_4(%arg0: i32) -> (i32, i32) {
    %c0_i32 = arith.constant 0 : i32
    %c0_i32_0 = arith.constant 0 : i32
    %c0_i32_1 = arith.constant 0 : i32
    return %c0_i32, %c0_i32_0 : i32, i32
  }
  func.func @transform_5(%arg0: i32) -> (i32, i32) {
    %c0_i32 = arith.constant 0 : i32
    %c0_i32_0 = arith.constant 0 : i32
    %c0_i32_1 = arith.constant 0 : i32
    return %c0_i32, %c0_i32_0 : i32, i32
  }
  func.func @transform_6(%arg0: i32) -> (i32, i32) {
    %c0_i32 = arith.constant 0 : i32
    %c0_i32_0 = arith.constant 0 : i32
    %c0_i32_1 = arith.constant 0 : i32
    return %c0_i32, %c0_i32_0 : i32, i32
  }
  func.func @transform_7(%arg0: i32) -> (i32, i32) {
    %c0_i32 = arith.constant 0 : i32
    %c0_i32_0 = arith.constant 0 : i32
    return %arg0, %c0_i32 : i32, i32
  }
}

</mosaic_0001>

<llo_original>
// kernel: mlp_forward.1
$region0: #{mlp_forward.1}
  #allocation0 [shape = 'u32[]', space=smem, size = 0x4, offset = 0x4, fixed_abs, tag = 'smem constant byte address 0x4 - core index']
  #allocation1 [shape = 'u32[144,128]{1,0:T(1,128)}', space=vmem, size = 0x12000, scoped, tag = 'internal scratch']
  %s0 = inlined_call_operand.vmem [shape: f32[8,3072], index: 0, kind: input, shape index: {}]
  %s1 = inlined_call_operand.hbm [shape: bf16[3072,512], index: 1, kind: input, shape index: {}]
  %s2 = inlined_call_operand.hbm [shape: f32[1,512], index: 2, kind: input, shape index: {}]
  %s3 = inlined_call_operand.hbm [shape: bf16[512,256], index: 3, kind: input, shape index: {}]
  %s4 = inlined_call_operand.hbm [shape: f32[1,256], index: 4, kind: input, shape index: {}]
  %s5 = inlined_call_operand.hbm [shape: bf16[256,128], index: 5, kind: input, shape index: {}]
  %s6 = inlined_call_operand.hbm [shape: f32[1,128], index: 6, kind: input, shape index: {}]
  %s7 = inlined_call_operand.hbm [shape: f32[8,128], index: 7, kind: output, shape index: {}]
  %s8 = sld [smem:[#allocation0]]
  $region62: #{mlp_forward.1} parent=0
    _
  %s10 = ssub.s32 1, %s8
  %s11 = scalar_select 0, %s10, %s8
  $region1: #{mlp_forward.1} parent=0
    #allocation2 [shape = 'u8[3145728]{0}', space=vmem, size = 0x300000, scoped, tag = 'input window, operand 1, single buffered']
    #allocation3 [shape = 's32[1]{0}', space=sflag, size = 0x4, scoped, tag = 'scoped memory for mlp_forward.1']
    #allocation4 [shape = 's32[1]{0}', space=sflag, size = 0x4, scoped, tag = 'scoped memory for mlp_forward.1']
    #allocation5 [shape = 'u8[2048]{0}', space=vmem, size = 0x800, scoped, tag = 'input window, operand 2, single buffered']
    #allocation6 [shape = 's32[1]{0}', space=sflag, size = 0x4, scoped, tag = 'scoped memory for mlp_forward.1']
    #allocation7 [shape = 'u8[262144]{0}', space=vmem, size = 0x40000, scoped, tag = 'input window, operand 3, single buffered']
    #allocation8 [shape = 'u8[1024]{0}', space=vmem, size = 0x400, scoped, tag = 'input window, operand 4, single buffered']
    #allocation9 [shape = 's32[1]{0}', space=sflag, size = 0x4, scoped, tag = 'scoped memory for mlp_forward.1']
    #allocation10 [shape = 'u8[65536]{0}', space=vmem, size = 0x10000, scoped, tag = 'input window, operand 5, single buffered']
    #allocation11 [shape = 'u8[512]{0}', space=vmem, size = 0x400, scoped, tag = 'input window, operand 6, single buffered']
    #allocation12 [shape = 's32[1]{0}', space=sflag, size = 0x4, scoped, tag = 'scoped memory for mlp_forward.1']
    #allocation13 [shape = 'u8[4096]{0}', space=vmem, size = 0x1000, scoped, tag = 'output window, operand 0, single buffered']
    %12 = vsyncpa [#allocation3], 0
    %13 = vsyncpa [#allocation6], 0
    %14 = vsyncpa [#allocation9], 0
    %15 = vsyncpa [#allocation12], 0
    %16 = vsyncpa [#allocation4], 0
    // Predicated region
    $region2: #{mlp_forward.1} parent=1 // pred_check
      _
    $region3: #{mlp_forward.1} parent=1 // pred_check_branch
      %18 = sbr.rel (0) target = $region5
    $region4: #{mlp_forward.1} parent=1 // pred_region
      _
    $region5: #{mlp_forward.1} parent=1 // pred_fallthru
      _
    // Predicated region
    $region6: #{mlp_forward.1} parent=1 // pred_check
      _
    $region7: #{mlp_forward.1} parent=1 // pred_check_branch
      %20 = sbr.rel (0) target = $region9
    $region8: #{mlp_forward.1} parent=1 // pred_region
      %s22 = ssub.s32 98304, 98304
      %23 = vsyncadd [#allocation3], %s22
      %s24 = sshll.u32 [#allocation2], 4
      %s25 = int_to_ptr.vmem [resolvable:$true] %s24
      %30 = dma.hbm_to_vmem [thread:$0]  %s1, 98304, %s25, [#allocation3], 256, 256, 16
    $region9: #{mlp_forward.1} parent=1 // pred_fallthru
      _
    // Predicated region
    $region10: #{mlp_forward.1} parent=1 // pred_check
      _
    $region11: #{mlp_forward.1} parent=1 // pred_check_branch
      %32 = sbr.rel (0) target = $region13
    $region12: #{mlp_forward.1} parent=1 // pred_region
      %s34 = ssub.s32 64, 64
      %35 = vsyncadd [#allocation6], %s34
      %s37 = sshll.u32 [#allocation5], 4
      %s38 = int_to_ptr.vmem [resolvable:$true] %s37
      %40 = dma.hbm_to_vmem [thread:$0]  %s2, 64, %s38, [#allocation6]
    $region13: #{mlp_forward.1} parent=1 // pred_fallthru
      _
    // Predicated region
    $region14: #{mlp_forward.1} parent=1 // pred_check
      _
    $region15: #{mlp_forward.1} parent=1 // pred_check_branch
      %42 = sbr.rel (0) target = $region17
    $region16: #{mlp_forward.1} parent=1 // pred_region
      %s44 = ssub.s32 8192, 8192
      %45 = vsyncadd [#allocation6], %s44
      %s46 = sshll.u32 [#allocation7], 4
      %s47 = int_to_ptr.vmem [resolvable:$true] %s46
      %52 = dma.hbm_to_vmem [thread:$0]  %s3, 8192, %s47, [#allocation6], 128, 128, 8
    $region17: #{mlp_forward.1} parent=1 // pred_fallthru
      _
    // Predicated region
    $region18: #{mlp_forward.1} parent=1 // pred_check
      _
    $region19: #{mlp_forward.1} parent=1 // pred_check_branch
      %54 = sbr.rel (0) target = $region21
    $region20: #{mlp_forward.1} parent=1 // pred_region
      %s56 = ssub.s32 32, 32
      %57 = vsyncadd [#allocation9], %s56
      %s59 = sshll.u32 [#allocation8], 4
      %s60 = int_to_ptr.vmem [resolvable:$true] %s59
      %62 = dma.hbm_to_vmem [thread:$0]  %s4, 32, %s60, [#allocation9]
    $region21: #{mlp_forward.1} parent=1 // pred_fallthru
      _
    // Predicated region
    $region22: #{mlp_forward.1} parent=1 // pred_check
      _
    $region23: #{mlp_forward.1} parent=1 // pred_check_branch
      %64 = sbr.rel (0) target = $region25
    $region24: #{mlp_forward.1} parent=1 // pred_region
      %s66 = ssub.s32 2048, 2048
      %67 = vsyncadd [#allocation9], %s66
      %s68 = sshll.u32 [#allocation10], 4
      %s69 = int_to_ptr.vmem [resolvable:$true] %s68
      %74 = dma.hbm_to_vmem [thread:$0]  %s5, 2048, %s69, [#allocation9], 64, 64, 4
    $region25: #{mlp_forward.1} parent=1 // pred_fallthru
      _
    // Predicated region
    $region26: #{mlp_forward.1} parent=1 // pred_check
      _
    $region27: #{mlp_forward.1} parent=1 // pred_check_branch
      %76 = sbr.rel (0) target = $region29
    $region28: #{mlp_forward.1} parent=1 // pred_region
      %s78 = ssub.s32 16, 16
      %79 = vsyncadd [#allocation12], %s78
      %s81 = sshll.u32 [#allocation11], 4
      %s82 = int_to_ptr.vmem [resolvable:$true] %s81
      %84 = dma.hbm_to_vmem [thread:$0]  %s6, 16, %s82, [#allocation12]
    $region29: #{mlp_forward.1} parent=1 // pred_fallthru
      _
    // Predicated region
    $region30: #{mlp_forward.1} parent=1 // pred_check
      _
    $region31: #{mlp_forward.1} parent=1 // pred_check_branch
      %86 = sbr.rel (0) target = $region33
    $region32: #{mlp_forward.1} parent=1 // pred_region
      %87 = dma.done [#allocation3], 98304
    $region33: #{mlp_forward.1} parent=1 // pred_fallthru
      _
    // Predicated region
    $region34: #{mlp_forward.1} parent=1 // pred_check
      _
    $region35: #{mlp_forward.1} parent=1 // pred_check_branch
      %89 = sbr.rel (0) target = $region37
    $region36: #{mlp_forward.1} parent=1 // pred_region
      %90 = dma.done [#allocation6], 64
    $region37: #{mlp_forward.1} parent=1 // pred_fallthru
      _
    // Predicated region
    $region38: #{mlp_forward.1} parent=1 // pred_check
      _
    $region39: #{mlp_forward.1} parent=1 // pred_check_branch
      %92 = sbr.rel (0) target = $region41
    $region40: #{mlp_forward.1} parent=1 // pred_region
      %93 = dma.done [#allocation6], 8192
    $region41: #{mlp_forward.1} parent=1 // pred_fallthru
      _
    // Predicated region
    $region42: #{mlp_forward.1} parent=1 // pred_check
      _
    $region43: #{mlp_forward.1} parent=1 // pred_check_branch
      %95 = sbr.rel (0) target = $region45
    $region44: #{mlp_forward.1} parent=1 // pred_region
      %96 = dma.done [#allocation9], 32
    $region45: #{mlp_forward.1} parent=1 // pred_fallthru
      _
    // Predicated region
    $region46: #{mlp_forward.1} parent=1 // pred_check
      _
    $region47: #{mlp_forward.1} parent=1 // pred_check_branch
      %98 = sbr.rel (0) target = $region49
    $region48: #{mlp_forward.1} parent=1 // pred_region
      %99 = dma.done [#allocation9], 2048
    $region49: #{mlp_forward.1} parent=1 // pred_fallthru
      _
    // Predicated region
    $region50: #{mlp_forward.1} parent=1 // pred_check
      _
    $region51: #{mlp_forward.1} parent=1 // pred_check_branch
      %101 = sbr.rel (0) target = $region53
    $region52: #{mlp_forward.1} parent=1 // pred_region
      %102 = dma.done [#allocation12], 16
    $region53: #{mlp_forward.1} parent=1 // pred_fallthru
      _
    %v104 = vld [vmem:[%s0] sm:$0xff]
    %v105 = vld [vmem:[%s0 + $0x8] sm:$0xff]
    %v106 = vld [vmem:[%s0 + $0x10] sm:$0xff]
    %v107 = vld [vmem:[%s0 + $0x18] sm:$0xff]
    %v108 = vld [vmem:[%s0 + $0x20] sm:$0xff]
    %v109 = vld [vmem:[%s0 + $0x28] sm:$0xff]
    %v110 = vld [vmem:[%s0 + $0x30] sm:$0xff]
    %v111 = vld [vmem:[%s0 + $0x38] sm:$0xff]
    %v112 = vld [vmem:[%s0 + $0x40] sm:$0xff]
    %v113 = vld [vmem:[%s0 + $0x48] sm:$0xff]
    %v114 = vld [vmem:[%s0 + $0x50] sm:$0xff]
    %v115 = vld [vmem:[%s0 + $0x58] sm:$0xff]
    %v116 = vld [vmem:[%s0 + $0x60] sm:$0xff]
    %v117 = vld [vmem:[%s0 + $0x68] sm:$0xff]
    %v118 = vld [vmem:[%s0 + $0x70] sm:$0xff]
    %v119 = vld [vmem:[%s0 + $0x78] sm:$0xff]
    %v120 = vld [vmem:[%s0 + $0x80] sm:$0xff]
    %v121 = vld [vmem:[%s0 + $0x88] sm:$0xff]
    %v122 = vld [vmem:[%s0 + $0x90] sm:$0xff]
    %v123 = vld [vmem:[%s0 + $0x98] sm:$0xff]
    %v124 = vld [vmem:[%s0 + $0xa0] sm:$0xff]
    %v125 = vld [vmem:[%s0 + $0xa8] sm:$0xff]
    %v126 = vld [vmem:[%s0 + $0xb0] sm:$0xff]
    %v127 = vld [vmem:[%s0 + $0xb8] sm:$0xff]
    %v128 = vpack.c.bf16 %v104, %v104
    %v129 = vpack.c.bf16 %v105, %v105
    %v130 = vpack.c.bf16 %v106, %v106
    %v131 = vpack.c.bf16 %v107, %v107
    %v132 = vpack.c.bf16 %v108, %v108
    %v133 = vpack.c.bf16 %v109, %v109
    %v134 = vpack.c.bf16 %v110, %v110
    %v135 = vpack.c.bf16 %v111, %v111
    %v136 = vpack.c.bf16 %v112, %v112
    %v137 = vpack.c.bf16 %v113, %v113
    %v138 = vpack.c.bf16 %v114, %v114
    %v139 = vpack.c.bf16 %v115, %v115
    %v140 = vpack.c.bf16 %v116, %v116
    %v141 = vpack.c.bf16 %v117, %v117
    %v142 = vpack.c.bf16 %v118, %v118
    %v143 = vpack.c.bf16 %v119, %v119
    %v144 = vpack.c.bf16 %v120, %v120
    %v145 = vpack.c.bf16 %v121, %v121
    %v146 = vpack.c.bf16 %v122, %v122
    %v147 = vpack.c.bf16 %v123, %v123
    %v148 = vpack.c.bf16 %v124, %v124
    %v149 = vpack.c.bf16 %v125, %v125
    %v150 = vpack.c.bf16 %v126, %v126
    %v151 = vpack.c.bf16 %v127, %v127
    %v152 = vld [vmem:[#allocation2] sm:$0xff]
    %v153 = vld [vmem:[#allocation2 + $0x8] sm:$0xff]
    %v154 = vld [vmem:[#allocation2 + $0x10] sm:$0xff]
    %v155 = vld [vmem:[#allocation2 + $0x18] sm:$0xff]
    %v156 = vld [vmem:[#allocation2 + $0x20] sm:$0xff]
    %v157 = vld [vmem:[#allocation2 + $0x28] sm:$0xff]
    %v158 = vld [vmem:[#allocation2 + $0x30] sm:$0xff]
    %v159 = vld [vmem:[#allocation2 + $0x38] sm:$0xff]
    %v160 = vld [vmem:[#allocation2 + $0x40] sm:$0xff]
    %v161 = vld [vmem:[#allocation2 + $0x48] sm:$0xff]
    %v162 = vld [vmem:[#allocation2 + $0x50] sm:$0xff]
    %v163 = vld [vmem:[#allocation2 + $0x58] sm:$0xff]
    %v164 = vld [vmem:[#allocation2 + $0x60] sm:$0xff]
    %v165 = vld [vmem:[#allocation2 + $0x68] sm:$0xff]
    %v166 = vld [vmem:[#allocation2 + $0x70] sm:$0xff]
    %v167 = vld [vmem:[#allocation2 + $0x78] sm:$0xff]
    %v168 = vld [vmem:[#allocation2 + $0x80] sm:$0xff]
    %v169 = vld [vmem:[#allocation2 + $0x88] sm:$0xff]
    %v170 = vld [vmem:[#allocation2 + $0x90] sm:$0xff]
    %v171 = vld [vmem:[#allocation2 + $0x98] sm:$0xff]
    %v172 = vld [vmem:[#allocation2 + $0xa0] sm:$0xff]
    %v173 = vld [vmem:[#allocation2 + $0xa8] sm:$0xff]
    %v174 = vld [vmem:[#allocation2 + $0xb0] sm:$0xff]
    %v175 = vld [vmem:[#allocation2 + $0xb8] sm:$0xff]
    %v176 = vld [vmem:[#allocation2 + $0xc0] sm:$0xff]
    %v177 = vld [vmem:[#allocation2 + $0xc8] sm:$0xff]
    %v178 = vld [vmem:[#allocation2 + $0xd0] sm:$0xff]
    %v179 = vld [vmem:[#allocation2 + $0xd8] sm:$0xff]
    %v180 = vld [vmem:[#allocation2 + $0xe0] sm:$0xff]
    %v181 = vld [vmem:[#allocation2 + $0xe8] sm:$0xff]
    %v182 = vld [vmem:[#allocation2 + $0xf0] sm:$0xff]
    %v183 = vld [vmem:[#allocation2 + $0xf8] sm:$0xff]
    %v184 = vld [vmem:[#allocation2 + $0x100] sm:$0xff]
    %v185 = vld [vmem:[#allocation2 + $0x108] sm:$0xff]
    %v186 = vld [vmem:[#allocation2 + $0x110] sm:$0xff]
    %v187 = vld [vmem:[#allocation2 + $0x118] sm:$0xff]
    %v188 = vld [vmem:[#allocation2 + $0x120] sm:$0xff]
    %v189 = vld [vmem:[#allocation2 + $0x128] sm:$0xff]
    %v190 = vld [vmem:[#allocation2 + $0x130] sm:$0xff]
    %v191 = vld [vmem:[#allocation2 + $0x138] sm:$0xff]
    %v192 = vld [vmem:[#allocation2 + $0x140] sm:$0xff]
    %v193 = vld [vmem:[#allocation2 + $0x148] sm:$0xff]
    %v194 = vld [vmem:[#allocation2 + $0x150] sm:$0xff]
    %v195 = vld [vmem:[#allocation2 + $0x158] sm:$0xff]
    %v196 = vld [vmem:[#allocation2 + $0x160] sm:$0xff]
    %v197 = vld [vmem:[#allocation2 + $0x168] sm:$0xff]
    %v198 = vld [vmem:[#allocation2 + $0x170] sm:$0xff]
    %v199 = vld [vmem:[#allocation2 + $0x178] sm:$0xff]
    %v200 = vld [vmem:[#allocation2 + $0x180] sm:$0xff]
    %v201 = vld [vmem:[#allocation2 + $0x188] sm:$0xff]
    %v202 = vld [vmem:[#allocation2 + $0x190] sm:$0xff]
    %v203 = vld [vmem:[#allocation2 + $0x198] sm:$0xff]
    %v204 = vld [vmem:[#allocation2 + $0x1a0] sm:$0xff]
    %v205 = vld [vmem:[#allocation2 + $0x1a8] sm:$0xff]
    %v206 = vld [vmem:[#allocation2 + $0x1b0] sm:$0xff]
    %v207 = vld [vmem:[#allocation2 + $0x1b8] sm:$0xff]
    %v208 = vld [vmem:[#allocation2 + $0x1c0] sm:$0xff]
    %v209 = vld [vmem:[#allocation2 + $0x1c8] sm:$0xff]
    %v210 = vld [vmem:[#allocation2 + $0x1d0] sm:$0xff]
    %v211 = vld [vmem:[#allocation2 + $0x1d8] sm:$0xff]
    %v212 = vld [vmem:[#allocation2 + $0x1e0] sm:$0xff]
    %v213 = vld [vmem:[#allocation2 + $0x1e8] sm:$0xff]
    %v214 = vld [vmem:[#allocation2 + $0x1f0] sm:$0xff]
    %v215 = vld [vmem:[#allocation2 + $0x1f8] sm:$0xff]
    %v216 = vld [vmem:[#allocation2 + $0x200] sm:$0xff]
    %v217 = vld [vmem:[#allocation2 + $0x208] sm:$0xff]
    %v218 = vld [vmem:[#allocation2 + $0x210] sm:$0xff]
    %v219 = vld [vmem:[#allocation2 + $0x218] sm:$0xff]
    %v220 = vld [vmem:[#allocation2 + $0x220] sm:$0xff]
    %v221 = vld [vmem:[#allocation2 + $0x228] sm:$0xff]
    %v222 = vld [vmem:[#allocation2 + $0x230] sm:$0xff]
    %v223 = vld [vmem:[#allocation2 + $0x238] sm:$0xff]
    %v224 = vld [vmem:[#allocation2 + $0x240] sm:$0xff]
    %v225 = vld [vmem:[#allocation2 + $0x248] sm:$0xff]
    %v226 = vld [vmem:[#allocation2 + $0x250] sm:$0xff]
    %v227 = vld [vmem:[#allocation2 + $0x258] sm:$0xff]
    %v228 = vld [vmem:[#allocation2 + $0x260] sm:$0xff]
    %v229 = vld [vmem:[#allocation2 + $0x268] sm:$0xff]
    %v230 = vld [vmem:[#allocation2 + $0x270] sm:$0xff]
    %v231 = vld [vmem:[#allocation2 + $0x278] sm:$0xff]
    %v232 = vld [vmem:[#allocation2 + $0x280] sm:$0xff]
    %v233 = vld [vmem:[#allocation2 + $0x288] sm:$0xff]
    %v234 = vld [vmem:[#allocation2 + $0x290] sm:$0xff]
    %v235 = vld [vmem:[#allocation2 + $0x298] sm:$0xff]
    %v236 = vld [vmem:[#allocation2 + $0x2a0] sm:$0xff]
    %v237 = vld [vmem:[#allocation2 + $0x2a8] sm:$0xff]
    %v238 = vld [vmem:[#allocation2 + $0x2b0] sm:$0xff]
    %v239 = vld [vmem:[#allocation2 + $0x2b8] sm:$0xff]
    %v240 = vld [vmem:[#allocation2 + $0x2c0] sm:$0xff]
    %v241 = vld [vmem:[#allocation2 + $0x2c8] sm:$0xff]
    %v242 = vld [vmem:[#allocation2 + $0x2d0] sm:$0xff]
    %v243 = vld [vmem:[#allocation2 + $0x2d8] sm:$0xff]
    %v244 = vld [vmem:[#allocation2 + $0x2e0] sm:$0xff]
    %v245 = vld [vmem:[#allocation2 + $0x2e8] sm:$0xff]
    %v246 = vld [vmem:[#allocation2 + $0x2f0] sm:$0xff]
    %v247 = vld [vmem:[#allocation2 + $0x2f8] sm:$0xff]
    %v248 = vld [vmem:[#allocation2 + $0x300] sm:$0xff]
    %v249 = vld [vmem:[#allocation2 + $0x308] sm:$0xff]
    %v250 = vld [vmem:[#allocation2 + $0x310] sm:$0xff]
    %v251 = vld [vmem:[#allocation2 + $0x318] sm:$0xff]
    %v252 = vld [vmem:[#allocation2 + $0x320] sm:$0xff]
    %v253 = vld [vmem:[#allocation2 + $0x328] sm:$0xff]
    %v254 = vld [vmem:[#allocation2 + $0x330] sm:$0xff]
    %v255 = vld [vmem:[#allocation2 + $0x338] sm:$0xff]
    %v256 = vld [vmem:[#allocation2 + $0x340] sm:$0xff]
    %v257 = vld [vmem:[#allocation2 + $0x348] sm:$0xff]
    %v258 = vld [vmem:[#allocation2 + $0x350] sm:$0xff]
    %v259 = vld [vmem:[#allocation2 + $0x358] sm:$0xff]
    %v260 = vld [vmem:[#allocation2 + $0x360] sm:$0xff]
    %v261 = vld [vmem:[#allocation2 + $0x368] sm:$0xff]
    %v262 = vld [vmem:[#allocation2 + $0x370] sm:$0xff]
    %v263 = vld [vmem:[#allocation2 + $0x378] sm:$0xff]
    %v264 = vld [vmem:[#allocation2 + $0x380] sm:$0xff]
    %v265 = vld [vmem:[#allocation2 + $0x388] sm:$0xff]
    %v266 = vld [vmem:[#allocation2 + $0x390] sm:$0xff]
    %v267 = vld [vmem:[#allocation2 + $0x398] sm:$0xff]
    %v268 = vld [vmem:[#allocation2 + $0x3a0] sm:$0xff]
    %v269 = vld [vmem:[#allocation2 + $0x3a8] sm:$0xff]
    %v270 = vld [vmem:[#allocation2 + $0x3b0] sm:$0xff]
    %v271 = vld [vmem:[#allocation2 + $0x3b8] sm:$0xff]
    %v272 = vld [vmem:[#allocation2 + $0x3c0] sm:$0xff]
    %v273 = vld [vmem:[#allocation2 + $0x3c8] sm:$0xff]
    %v274 = vld [vmem:[#allocation2 + $0x3d0] sm:$0xff]
    %v275 = vld [vmem:[#allocation2 + $0x3d8] sm:$0xff]
    %v276 = vld [vmem:[#allocation2 + $0x3e0] sm:$0xff]
    %v277 = vld [vmem:[#allocation2 + $0x3e8] sm:$0xff]
    %v278 = vld [vmem:[#allocation2 + $0x3f0] sm:$0xff]
    %v279 = vld [vmem:[#allocation2 + $0x3f8] sm:$0xff]
    %v280 = vld [vmem:[#allocation2 + $0x400] sm:$0xff]
    %v281 = vld [vmem:[#allocation2 + $0x408] sm:$0xff]
    %v282 = vld [vmem:[#allocation2 + $0x410] sm:$0xff]
    %v283 = vld [vmem:[#allocation2 + $0x418] sm:$0xff]
    %v284 = vld [vmem:[#allocation2 + $0x420] sm:$0xff]
    %v285 = vld [vmem:[#allocation2 + $0x428] sm:$0xff]
    %v286 = vld [vmem:[#allocation2 + $0x430] sm:$0xff]
    %v287 = vld [vmem:[#allocation2 + $0x438] sm:$0xff]
    %v288 = vld [vmem:[#allocation2 + $0x440] sm:$0xff]
    %v289 = vld [vmem:[#allocation2 + $0x448] sm:$0xff]
    %v290 = vld [vmem:[#allocation2 + $0x450] sm:$0xff]
    %v291 = vld [vmem:[#allocation2 + $0x458] sm:$0xff]
    %v292 = vld [vmem:[#allocation2 + $0x460] sm:$0xff]
    %v293 = vld [vmem:[#allocation2 + $0x468] sm:$0xff]
    %v294 = vld [vmem:[#allocation2 + $0x470] sm:$0xff]
    %v295 = vld [vmem:[#allocation2 + $0x478] sm:$0xff]
    %v296 = vld [vmem:[#allocation2 + $0x480] sm:$0xff]
    %v297 = vld [vmem:[#allocation2 + $0x488] sm:$0xff]
    %v298 = vld [vmem:[#allocation2 + $0x490] sm:$0xff]
    %v299 = vld [vmem:[#allocation2 + $0x498] sm:$0xff]
    %v300 = vld [vmem:[#allocation2 + $0x4a0] sm:$0xff]
    %v301 = vld [vmem:[#allocation2 + $0x4a8] sm:$0xff]
    %v302 = vld [vmem:[#allocation2 + $0x4b0] sm:$0xff]
    %v303 = vld [vmem:[#allocation2 + $0x4b8] sm:$0xff]
    %v304 = vld [vmem:[#allocation2 + $0x4c0] sm:$0xff]
    %v305 = vld [vmem:[#allocation2 + $0x4c8] sm:$0xff]
    %v306 = vld [vmem:[#allocation2 + $0x4d0] sm:$0xff]
    %v307 = vld [vmem:[#allocation2 + $0x4d8] sm:$0xff]
    %v308 = vld [vmem:[#allocation2 + $0x4e0] sm:$0xff]
    %v309 = vld [vmem:[#allocation2 + $0x4e8] sm:$0xff]
    %v310 = vld [vmem:[#allocation2 + $0x4f0] sm:$0xff]
    %v311 = vld [vmem:[#allocation2 + $0x4f8] sm:$0xff]
    %v312 = vld [vmem:[#allocation2 + $0x500] sm:$0xff]
    %v313 = vld [vmem:[#allocation2 + $0x508] sm:$0xff]
    %v314 = vld [vmem:[#allocation2 + $0x510] sm:$0xff]
    %v315 = vld [vmem:[#allocation2 + $0x518] sm:$0xff]
    %v316 = vld [vmem:[#allocation2 + $0x520] sm:$0xff]
    %v317 = vld [vmem:[#allocation2 + $0x528] sm:$0xff]
    %v318 = vld [vmem:[#allocation2 + $0x530] sm:$0xff]
    %v319 = vld [vmem:[#allocation2 + $0x538] sm:$0xff]
    %v320 = vld [vmem:[#allocation2 + $0x540] sm:$0xff]
    %v321 = vld [vmem:[#allocation2 + $0x548] sm:$0xff]
    %v322 = vld [vmem:[#allocation2 + $0x550] sm:$0xff]
    %v323 = vld [vmem:[#allocation2 + $0x558] sm:$0xff]
    %v324 = vld [vmem:[#allocation2 + $0x560] sm:$0xff]
    %v325 = vld [vmem:[#allocation2 + $0x568] sm:$0xff]
    %v326 = vld [vmem:[#allocation2 + $0x570] sm:$0xff]
    %v327 = vld [vmem:[#allocation2 + $0x578] sm:$0xff]
    %v328 = vld [vmem:[#allocation2 + $0x580] sm:$0xff]
    %v329 = vld [vmem:[#allocation2 + $0x588] sm:$0xff]
    %v330 = vld [vmem:[#allocation2 + $0x590] sm:$0xff]
    %v331 = vld [vmem:[#allocation2 + $0x598] sm:$0xff]
    %v332 = vld [vmem:[#allocation2 + $0x5a0] sm:$0xff]
    %v333 = vld [vmem:[#allocation2 + $0x5a8] sm:$0xff]
    %v334 = vld [vmem:[#allocation2 + $0x5b0] sm:$0xff]
    %v335 = vld [vmem:[#allocation2 + $0x5b8] sm:$0xff]
    %v336 = vld [vmem:[#allocation2 + $0x5c0] sm:$0xff]
    %v337 = vld [vmem:[#allocation2 + $0x5c8] sm:$0xff]
    %v338 = vld [vmem:[#allocation2 + $0x5d0] sm:$0xff]
    %v339 = vld [vmem:[#allocation2 + $0x5d8] sm:$0xff]
    %v340 = vld [vmem:[#allocation2 + $0x5e0] sm:$0xff]
    %v341 = vld [vmem:[#allocation2 + $0x5e8] sm:$0xff]
    %v342 = vld [vmem:[#allocation2 + $0x5f0] sm:$0xff]
    %v343 = vld [vmem:[#allocation2 + $0x5f8] sm:$0xff]
    %v344 = vld [vmem:[#allocation2 + $0x600] sm:$0xff]
    %v345 = vld [vmem:[#allocation2 + $0x608] sm:$0xff]
    %v346 = vld [vmem:[#allocation2 + $0x610] sm:$0xff]
    %v347 = vld [vmem:[#allocation2 + $0x618] sm:$0xff]
    %v348 = vld [vmem:[#allocation2 + $0x620] sm:$0xff]
    %v349 = vld [vmem:[#allocation2 + $0x628] sm:$0xff]
    %v350 = vld [vmem:[#allocation2 + $0x630] sm:$0xff]
    %v351 = vld [vmem:[#allocation2 + $0x638] sm:$0xff]
    %v352 = vld [vmem:[#allocation2 + $0x640] sm:$0xff]
    %v353 = vld [vmem:[#allocation2 + $0x648] sm:$0xff]
    %v354 = vld [vmem:[#allocation2 + $0x650] sm:$0xff]
    %v355 = vld [vmem:[#allocation2 + $0x658] sm:$0xff]
    %v356 = vld [vmem:[#allocation2 + $0x660] sm:$0xff]
    %v357 = vld [vmem:[#allocation2 + $0x668] sm:$0xff]
    %v358 = vld [vmem:[#allocation2 + $0x670] sm:$0xff]
    %v359 = vld [vmem:[#allocation2 + $0x678] sm:$0xff]
    %v360 = vld [vmem:[#allocation2 + $0x680] sm:$0xff]
    %v361 = vld [vmem:[#allocation2 + $0x688] sm:$0xff]
    %v362 = vld [vmem:[#allocation2 + $0x690] sm:$0xff]
    %v363 = vld [vmem:[#allocation2 + $0x698] sm:$0xff]
    %v364 = vld [vmem:[#allocation2 + $0x6a0] sm:$0xff]
    %v365 = vld [vmem:[#allocation2 + $0x6a8] sm:$0xff]
    %v366 = vld [vmem:[#allocation2 + $0x6b0] sm:$0xff]
    %v367 = vld [vmem:[#allocation2 + $0x6b8] sm:$0xff]
    %v368 = vld [vmem:[#allocation2 + $0x6c0] sm:$0xff]
    %v369 = vld [vmem:[#allocation2 + $0x6c8] sm:$0xff]
    %v370 = vld [vmem:[#allocation2 + $0x6d0] sm:$0xff]
    %v371 = vld [vmem:[#allocation2 + $0x6d8] sm:$0xff]
    %v372 = vld [vmem:[#allocation2 + $0x6e0] sm:$0xff]
    %v373 = vld [vmem:[#allocation2 + $0x6e8] sm:$0xff]
    %v374 = vld [vmem:[#allocation2 + $0x6f0] sm:$0xff]
    %v375 = vld [vmem:[#allocation2 + $0x6f8] sm:$0xff]
    %v376 = vld [vmem:[#allocation2 + $0x700] sm:$0xff]
    %v377 = vld [vmem:[#allocation2 + $0x708] sm:$0xff]
    %v378 = vld [vmem:[#allocation2 + $0x710] sm:$0xff]
    %v379 = vld [vmem:[#allocation2 + $0x718] sm:$0xff]
    %v380 = vld [vmem:[#allocation2 + $0x720] sm:$0xff]
    %v381 = vld [vmem:[#allocation2 + $0x728] sm:$0xff]
    %v382 = vld [vmem:[#allocation2 + $0x730] sm:$0xff]
    %v383 = vld [vmem:[#allocation2 + $0x738] sm:$0xff]
    %v384 = vld [vmem:[#allocation2 + $0x740] sm:$0xff]
    %v385 = vld [vmem:[#allocation2 + $0x748] sm:$0xff]
    %v386 = vld [vmem:[#allocation2 + $0x750] sm:$0xff]
    %v387 = vld [vmem:[#allocation2 + $0x758] sm:$0xff]
    %v388 = vld [vmem:[#allocation2 + $0x760] sm:$0xff]
    %v389 = vld [vmem:[#allocation2 + $0x768] sm:$0xff]
    %v390 = vld [vmem:[#allocation2 + $0x770] sm:$0xff]
    %v391 = vld [vmem:[#allocation2 + $0x778] sm:$0xff]
    %v392 = vld [vmem:[#allocation2 + $0x780] sm:$0xff]
    %v393 = vld [vmem:[#allocation2 + $0x788] sm:$0xff]
    %v394 = vld [vmem:[#allocation2 + $0x790] sm:$0xff]
    %v395 = vld [vmem:[#allocation2 + $0x798] sm:$0xff]
    %v396 = vld [vmem:[#allocation2 + $0x7a0] sm:$0xff]
    %v397 = vld [vmem:[#allocation2 + $0x7a8] sm:$0xff]
    %v398 = vld [vmem:[#allocation2 + $0x7b0] sm:$0xff]
    %v399 = vld [vmem:[#allocation2 + $0x7b8] sm:$0xff]
    %v400 = vld [vmem:[#allocation2 + $0x7c0] sm:$0xff]
    %v401 = vld [vmem:[#allocation2 + $0x7c8] sm:$0xff]
    %v402 = vld [vmem:[#allocation2 + $0x7d0] sm:$0xff]
    %v403 = vld [vmem:[#allocation2 + $0x7d8] sm:$0xff]
    %v404 = vld [vmem:[#allocation2 + $0x7e0] sm:$0xff]
    %v405 = vld [vmem:[#allocation2 + $0x7e8] sm:$0xff]
    %v406 = vld [vmem:[#allocation2 + $0x7f0] sm:$0xff]
    %v407 = vld [vmem:[#allocation2 + $0x7f8] sm:$0xff]
    %v408 = vld [vmem:[#allocation2 + $0x800] sm:$0xff]
    %v409 = vld [vmem:[#allocation2 + $0x808] sm:$0xff]
    %v410 = vld [vmem:[#allocation2 + $0x810] sm:$0xff]
    %v411 = vld [vmem:[#allocation2 + $0x818] sm:$0xff]
    %v412 = vld [vmem:[#allocation2 + $0x820] sm:$0xff]
    %v413 = vld [vmem:[#allocation2 + $0x828] sm:$0xff]
    %v414 = vld [vmem:[#allocation2 + $0x830] sm:$0xff]
    %v415 = vld [vmem:[#allocation2 + $0x838] sm:$0xff]
    %v416 = vld [vmem:[#allocation2 + $0x840] sm:$0xff]
    %v417 = vld [vmem:[#allocation2 + $0x848] sm:$0xff]
    %v418 = vld [vmem:[#allocation2 + $0x850] sm:$0xff]
    %v419 = vld [vmem:[#allocation2 + $0x858] sm:$0xff]
    %v420 = vld [vmem:[#allocation2 + $0x860] sm:$0xff]
    %v421 = vld [vmem:[#allocation2 + $0x868] sm:$0xff]
    %v422 = vld [vmem:[#allocation2 + $0x870] sm:$0xff]
    %v423 = vld [vmem:[#allocation2 + $0x878] sm:$0xff]
    %v424 = vld [vmem:[#allocation2 + $0x880] sm:$0xff]
    %v425 = vld [vmem:[#allocation2 + $0x888] sm:$0xff]
    %v426 = vld [vmem:[#allocation2 + $0x890] sm:$0xff]
    %v427 = vld [vmem:[#allocation2 + $0x898] sm:$0xff]
    %v428 = vld [vmem:[#allocation2 + $0x8a0] sm:$0xff]
    %v429 = vld [vmem:[#allocation2 + $0x8a8] sm:$0xff]
    %v430 = vld [vmem:[#allocation2 + $0x8b0] sm:$0xff]
    %v431 = vld [vmem:[#allocation2 + $0x8b8] sm:$0xff]
    %v432 = vld [vmem:[#allocation2 + $0x8c0] sm:$0xff]
    %v433 = vld [vmem:[#allocation2 + $0x8c8] sm:$0xff]
    %v434 = vld [vmem:[#allocation2 + $0x8d0] sm:$0xff]
    %v435 = vld [vmem:[#allocation2 + $0x8d8] sm:$0xff]
    %v436 = vld [vmem:[#allocation2 + $0x8e0] sm:$0xff]
    %v437 = vld [vmem:[#allocation2 + $0x8e8] sm:$0xff]
    %v438 = vld [vmem:[#allocation2 + $0x8f0] sm:$0xff]
    %v439 = vld [vmem:[#allocation2 + $0x8f8] sm:$0xff]
    %v440 = vld [vmem:[#allocation2 + $0x900] sm:$0xff]
    %v441 = vld [vmem:[#allocation2 + $0x908] sm:$0xff]
    %v442 = vld [vmem:[#allocation2 + $0x910] sm:$0xff]
    %v443 = vld [vmem:[#allocation2 + $0x918] sm:$0xff]
    %v444 = vld [vmem:[#allocation2 + $0x920] sm:$0xff]
    %v445 = vld [vmem:[#allocation2 + $0x928] sm:$0xff]
    %v446 = vld [vmem:[#allocation2 + $0x930] sm:$0xff]
    %v447 = vld [vmem:[#allocation2 + $0x938] sm:$0xff]
    %v448 = vld [vmem:[#allocation2 + $0x940] sm:$0xff]
    %v449 = vld [vmem:[#allocation2 + $0x948] sm:$0xff]
    %v450 = vld [vmem:[#allocation2 + $0x950] sm:$0xff]
    %v451 = vld [vmem:[#allocation2 + $0x958] sm:$0xff]
    %v452 = vld [vmem:[#allocation2 + $0x960] sm:$0xff]
    %v453 = vld [vmem:[#allocation2 + $0x968] sm:$0xff]
    %v454 = vld [vmem:[#allocation2 + $0x970] sm:$0xff]
    %v455 = vld [vmem:[#allocation2 + $0x978] sm:$0xff]
    %v456 = vld [vmem:[#allocation2 + $0x980] sm:$0xff]
    %v457 = vld [vmem:[#allocation2 + $0x988] sm:$0xff]
    %v458 = vld [vmem:[#allocation2 + $0x990] sm:$0xff]
    %v459 = vld [vmem:[#allocation2 + $0x998] sm:$0xff]
    %v460 = vld [vmem:[#allocation2 + $0x9a0] sm:$0xff]
    %v461 = vld [vmem:[#allocation2 + $0x9a8] sm:$0xff]
    %v462 = vld [vmem:[#allocation2 + $0x9b0] sm:$0xff]
    %v463 = vld [vmem:[#allocation2 + $0x9b8] sm:$0xff]
    %v464 = vld [vmem:[#allocation2 + $0x9c0] sm:$0xff]
    %v465 = vld [vmem:[#allocation2 + $0x9c8] sm:$0xff]
    %v466 = vld [vmem:[#allocation2 + $0x9d0] sm:$0xff]
    %v467 = vld [vmem:[#allocation2 + $0x9d8] sm:$0xff]
    %v468 = vld [vmem:[#allocation2 + $0x9e0] sm:$0xff]
    %v469 = vld [vmem:[#allocation2 + $0x9e8] sm:$0xff]
    %v470 = vld [vmem:[#allocation2 + $0x9f0] sm:$0xff]
    %v471 = vld [vmem:[#allocation2 + $0x9f8] sm:$0xff]
    %v472 = vld [vmem:[#allocation2 + $0xa00] sm:$0xff]
    %v473 = vld [vmem:[#allocation2 + $0xa08] sm:$0xff]
    %v474 = vld [vmem:[#allocation2 + $0xa10] sm:$0xff]
    %v475 = vld [vmem:[#allocation2 + $0xa18] sm:$0xff]
    %v476 = vld [vmem:[#allocation2 + $0xa20] sm:$0xff]
    %v477 = vld [vmem:[#allocation2 + $0xa28] sm:$0xff]
    %v478 = vld [vmem:[#allocation2 + $0xa30] sm:$0xff]
    %v479 = vld [vmem:[#allocation2 + $0xa38] sm:$0xff]
    %v480 = vld [vmem:[#allocation2 + $0xa40] sm:$0xff]
    %v481 = vld [vmem:[#allocation2 + $0xa48] sm:$0xff]
    %v482 = vld [vmem:[#allocation2 + $0xa50] sm:$0xff]
    %v483 = vld [vmem:[#allocation2 + $0xa58] sm:$0xff]
    %v484 = vld [vmem:[#allocation2 + $0xa60] sm:$0xff]
    %v485 = vld [vmem:[#allocation2 + $0xa68] sm:$0xff]
    %v486 = vld [vmem:[#allocation2 + $0xa70] sm:$0xff]
    %v487 = vld [vmem:[#allocation2 + $0xa78] sm:$0xff]
    %v488 = vld [vmem:[#allocation2 + $0xa80] sm:$0xff]
    %v489 = vld [vmem:[#allocation2 + $0xa88] sm:$0xff]
    %v490 = vld [vmem:[#allocation2 + $0xa90] sm:$0xff]
    %v491 = vld [vmem:[#allocation2 + $0xa98] sm:$0xff]
    %v492 = vld [vmem:[#allocation2 + $0xaa0] sm:$0xff]
    %v493 = vld [vmem:[#allocation2 + $0xaa8] sm:$0xff]
    %v494 = vld [vmem:[#allocation2 + $0xab0] sm:$0xff]
    %v495 = vld [vmem:[#allocation2 + $0xab8] sm:$0xff]
    %v496 = vld [vmem:[#allocation2 + $0xac0] sm:$0xff]
    %v497 = vld [vmem:[#allocation2 + $0xac8] sm:$0xff]
    %v498 = vld [vmem:[#allocation2 + $0xad0] sm:$0xff]
    %v499 = vld [vmem:[#allocation2 + $0xad8] sm:$0xff]
    %v500 = vld [vmem:[#allocation2 + $0xae0] sm:$0xff]
    %v501 = vld [vmem:[#allocation2 + $0xae8] sm:$0xff]
    %v502 = vld [vmem:[#allocation2 + $0xaf0] sm:$0xff]
    %v503 = vld [vmem:[#allocation2 + $0xaf8] sm:$0xff]
    %v504 = vld [vmem:[#allocation2 + $0xb00] sm:$0xff]
    %v505 = vld [vmem:[#allocation2 + $0xb08] sm:$0xff]
    %v506 = vld [vmem:[#allocation2 + $0xb10] sm:$0xff]
    %v507 = vld [vmem:[#allocation2 + $0xb18] sm:$0xff]
    %v508 = vld [vmem:[#allocation2 + $0xb20] sm:$0xff]
    %v509 = vld [vmem:[#allocation2 + $0xb28] sm:$0xff]
    %v510 = vld [vmem:[#allocation2 + $0xb30] sm:$0xff]
    %v511 = vld [vmem:[#allocation2 + $0xb38] sm:$0xff]
    %v512 = vld [vmem:[#allocation2 + $0xb40] sm:$0xff]
    %v513 = vld [vmem:[#allocation2 + $0xb48] sm:$0xff]
    %v514 = vld [vmem:[#allocation2 + $0xb50] sm:$0xff]
    %v515 = vld [vmem:[#allocation2 + $0xb58] sm:$0xff]
    %v516 = vld [vmem:[#allocation2 + $0xb60] sm:$0xff]
    %v517 = vld [vmem:[#allocation2 + $0xb68] sm:$0xff]
    %v518 = vld [vmem:[#allocation2 + $0xb70] sm:$0xff]
    %v519 = vld [vmem:[#allocation2 + $0xb78] sm:$0xff]
    %v520 = vld [vmem:[#allocation2 + $0xb80] sm:$0xff]
    %v521 = vld [vmem:[#allocation2 + $0xb88] sm:$0xff]
    %v522 = vld [vmem:[#allocation2 + $0xb90] sm:$0xff]
    %v523 = vld [vmem:[#allocation2 + $0xb98] sm:$0xff]
    %v524 = vld [vmem:[#allocation2 + $0xba0] sm:$0xff]
    %v525 = vld [vmem:[#allocation2 + $0xba8] sm:$0xff]
    %v526 = vld [vmem:[#allocation2 + $0xbb0] sm:$0xff]
    %v527 = vld [vmem:[#allocation2 + $0xbb8] sm:$0xff]
    %v528 = vld [vmem:[#allocation2 + $0xbc0] sm:$0xff]
    %v529 = vld [vmem:[#allocation2 + $0xbc8] sm:$0xff]
    %v530 = vld [vmem:[#allocation2 + $0xbd0] sm:$0xff]
    %v531 = vld [vmem:[#allocation2 + $0xbd8] sm:$0xff]
    %v532 = vld [vmem:[#allocation2 + $0xbe0] sm:$0xff]
    %v533 = vld [vmem:[#allocation2 + $0xbe8] sm:$0xff]
    %v534 = vld [vmem:[#allocation2 + $0xbf0] sm:$0xff]
    %v535 = vld [vmem:[#allocation2 + $0xbf8] sm:$0xff]
    %v536 = vld [vmem:[#allocation2 + $0xc00] sm:$0xff]
    %v537 = vld [vmem:[#allocation2 + $0xc08] sm:$0xff]
    %v538 = vld [vmem:[#allocation2 + $0xc10] sm:$0xff]
    %v539 = vld [vmem:[#allocation2 + $0xc18] sm:$0xff]
    %v540 = vld [vmem:[#allocation2 + $0xc20] sm:$0xff]
    %v541 = vld [vmem:[#allocation2 + $0xc28] sm:$0xff]
    %v542 = vld [vmem:[#allocation2 + $0xc30] sm:$0xff]
    %v543 = vld [vmem:[#allocation2 + $0xc38] sm:$0xff]
    %v544 = vld [vmem:[#allocation2 + $0xc40] sm:$0xff]
    %v545 = vld [vmem:[#allocation2 + $0xc48] sm:$0xff]
    %v546 = vld [vmem:[#allocation2 + $0xc50] sm:$0xff]
    %v547 = vld [vmem:[#allocation2 + $0xc58] sm:$0xff]
    %v548 = vld [vmem:[#allocation2 + $0xc60] sm:$0xff]
    %v549 = vld [vmem:[#allocation2 + $0xc68] sm:$0xff]
    %v550 = vld [vmem:[#allocation2 + $0xc70] sm:$0xff]
    %v551 = vld [vmem:[#allocation2 + $0xc78] sm:$0xff]
    %v552 = vld [vmem:[#allocation2 + $0xc80] sm:$0xff]
    %v553 = vld [vmem:[#allocation2 + $0xc88] sm:$0xff]
    %v554 = vld [vmem:[#allocation2 + $0xc90] sm:$0xff]
    %v555 = vld [vmem:[#allocation2 + $0xc98] sm:$0xff]
    %v556 = vld [vmem:[#allocation2 + $0xca0] sm:$0xff]
    %v557 = vld [vmem:[#allocation2 + $0xca8] sm:$0xff]
    %v558 = vld [vmem:[#allocation2 + $0xcb0] sm:$0xff]
    %v559 = vld [vmem:[#allocation2 + $0xcb8] sm:$0xff]
    %v560 = vld [vmem:[#allocation2 + $0xcc0] sm:$0xff]
    %v561 = vld [vmem:[#allocation2 + $0xcc8] sm:$0xff]
    %v562 = vld [vmem:[#allocation2 + $0xcd0] sm:$0xff]
    %v563 = vld [vmem:[#allocation2 + $0xcd8] sm:$0xff]
    %v564 = vld [vmem:[#allocation2 + $0xce0] sm:$0xff]
    %v565 = vld [vmem:[#allocation2 + $0xce8] sm:$0xff]
    %v566 = vld [vmem:[#allocation2 + $0xcf0] sm:$0xff]
    %v567 = vld [vmem:[#allocation2 + $0xcf8] sm:$0xff]
    %v568 = vld [vmem:[#allocation2 + $0xd00] sm:$0xff]
    %v569 = vld [vmem:[#allocation2 + $0xd08] sm:$0xff]
    %v570 = vld [vmem:[#allocation2 + $0xd10] sm:$0xff]
    %v571 = vld [vmem:[#allocation2 + $0xd18] sm:$0xff]
    %v572 = vld [vmem:[#allocation2 + $0xd20] sm:$0xff]
    %v573 = vld [vmem:[#allocation2 + $0xd28] sm:$0xff]
    %v574 = vld [vmem:[#allocation2 + $0xd30] sm:$0xff]
    %v575 = vld [vmem:[#allocation2 + $0xd38] sm:$0xff]
    %v576 = vld [vmem:[#allocation2 + $0xd40] sm:$0xff]
    %v577 = vld [vmem:[#allocation2 + $0xd48] sm:$0xff]
    %v578 = vld [vmem:[#allocation2 + $0xd50] sm:$0xff]
    %v579 = vld [vmem:[#allocation2 + $0xd58] sm:$0xff]
    %v580 = vld [vmem:[#allocation2 + $0xd60] sm:$0xff]
    %v581 = vld [vmem:[#allocation2 + $0xd68] sm:$0xff]
    %v582 = vld [vmem:[#allocation2 + $0xd70] sm:$0xff]
    %v583 = vld [vmem:[#allocation2 + $0xd78] sm:$0xff]
    %v584 = vld [vmem:[#allocation2 + $0xd80] sm:$0xff]
    %v585 = vld [vmem:[#allocation2 + $0xd88] sm:$0xff]
    %v586 = vld [vmem:[#allocation2 + $0xd90] sm:$0xff]
    %v587 = vld [vmem:[#allocation2 + $0xd98] sm:$0xff]
    %v588 = vld [vmem:[#allocation2 + $0xda0] sm:$0xff]
    %v589 = vld [vmem:[#allocation2 + $0xda8] sm:$0xff]
    %v590 = vld [vmem:[#allocation2 + $0xdb0] sm:$0xff]
    %v591 = vld [vmem:[#allocation2 + $0xdb8] sm:$0xff]
    %v592 = vld [vmem:[#allocation2 + $0xdc0] sm:$0xff]
    %v593 = vld [vmem:[#allocation2 + $0xdc8] sm:$0xff]
    %v594 = vld [vmem:[#allocation2 + $0xdd0] sm:$0xff]
    %v595 = vld [vmem:[#allocation2 + $0xdd8] sm:$0xff]
    %v596 = vld [vmem:[#allocation2 + $0xde0] sm:$0xff]
    %v597 = vld [vmem:[#allocation2 + $0xde8] sm:$0xff]
    %v598 = vld [vmem:[#allocation2 + $0xdf0] sm:$0xff]
    %v599 = vld [vmem:[#allocation2 + $0xdf8] sm:$0xff]
    %v600 = vld [vmem:[#allocation2 + $0xe00] sm:$0xff]
    %v601 = vld [vmem:[#allocation2 + $0xe08] sm:$0xff]
    %v602 = vld [vmem:[#allocation2 + $0xe10] sm:$0xff]
    %v603 = vld [vmem:[#allocation2 + $0xe18] sm:$0xff]
    %v604 = vld [vmem:[#allocation2 + $0xe20] sm:$0xff]
    %v605 = vld [vmem:[#allocation2 + $0xe28] sm:$0xff]
    %v606 = vld [vmem:[#allocation2 + $0xe30] sm:$0xff]
    %v607 = vld [vmem:[#allocation2 + $0xe38] sm:$0xff]
    %v608 = vld [vmem:[#allocation2 + $0xe40] sm:$0xff]
    %v609 = vld [vmem:[#allocation2 + $0xe48] sm:$0xff]
    %v610 = vld [vmem:[#allocation2 + $0xe50] sm:$0xff]
    %v611 = vld [vmem:[#allocation2 + $0xe58] sm:$0xff]
    %v612 = vld [vmem:[#allocation2 + $0xe60] sm:$0xff]
    %v613 = vld [vmem:[#allocation2 + $0xe68] sm:$0xff]
    %v614 = vld [vmem:[#allocation2 + $0xe70] sm:$0xff]
    %v615 = vld [vmem:[#allocation2 + $0xe78] sm:$0xff]
    %v616 = vld [vmem:[#allocation2 + $0xe80] sm:$0xff]
    %v617 = vld [vmem:[#allocation2 + $0xe88] sm:$0xff]
    %v618 = vld [vmem:[#allocation2 + $0xe90] sm:$0xff]
    %v619 = vld [vmem:[#allocation2 + $0xe98] sm:$0xff]
    %v620 = vld [vmem:[#allocation2 + $0xea0] sm:$0xff]
    %v621 = vld [vmem:[#allocation2 + $0xea8] sm:$0xff]
    %v622 = vld [vmem:[#allocation2 + $0xeb0] sm:$0xff]
    %v623 = vld [vmem:[#allocation2 + $0xeb8] sm:$0xff]
    %v624 = vld [vmem:[#allocation2 + $0xec0] sm:$0xff]
    %v625 = vld [vmem:[#allocation2 + $0xec8] sm:$0xff]
    %v626 = vld [vmem:[#allocation2 + $0xed0] sm:$0xff]
    %v627 = vld [vmem:[#allocation2 + $0xed8] sm:$0xff]
    %v628 = vld [vmem:[#allocation2 + $0xee0] sm:$0xff]
    %v629 = vld [vmem:[#allocation2 + $0xee8] sm:$0xff]
    %v630 = vld [vmem:[#allocation2 + $0xef0] sm:$0xff]
    %v631 = vld [vmem:[#allocation2 + $0xef8] sm:$0xff]
    %v632 = vld [vmem:[#allocation2 + $0xf00] sm:$0xff]
    %v633 = vld [vmem:[#allocation2 + $0xf08] sm:$0xff]
    %v634 = vld [vmem:[#allocation2 + $0xf10] sm:$0xff]
    %v635 = vld [vmem:[#allocation2 + $0xf18] sm:$0xff]
    %v636 = vld [vmem:[#allocation2 + $0xf20] sm:$0xff]
    %v637 = vld [vmem:[#allocation2 + $0xf28] sm:$0xff]
    %v638 = vld [vmem:[#allocation2 + $0xf30] sm:$0xff]
    %v639 = vld [vmem:[#allocation2 + $0xf38] sm:$0xff]
    %v640 = vld [vmem:[#allocation2 + $0xf40] sm:$0xff]
    %v641 = vld [vmem:[#allocation2 + $0xf48] sm:$0xff]
    %v642 = vld [vmem:[#allocation2 + $0xf50] sm:$0xff]
    %v643 = vld [vmem:[#allocation2 + $0xf58] sm:$0xff]
    %v644 = vld [vmem:[#allocation2 + $0xf60] sm:$0xff]
    %v645 = vld [vmem:[#allocation2 + $0xf68] sm:$0xff]
    %v646 = vld [vmem:[#allocation2 + $0xf70] sm:$0xff]
    %v647 = vld [vmem:[#allocation2 + $0xf78] sm:$0xff]
    %v648 = vld [vmem:[#allocation2 + $0xf80] sm:$0xff]
    %v649 = vld [vmem:[#allocation2 + $0xf88] sm:$0xff]
    %v650 = vld [vmem:[#allocation2 + $0xf90] sm:$0xff]
    %v651 = vld [vmem:[#allocation2 + $0xf98] sm:$0xff]
    %v652 = vld [vmem:[#allocation2 + $0xfa0] sm:$0xff]
    %v653 = vld [vmem:[#allocation2 + $0xfa8] sm:$0xff]
    %v654 = vld [vmem:[#allocation2 + $0xfb0] sm:$0xff]
    %v655 = vld [vmem:[#allocation2 + $0xfb8] sm:$0xff]
    %v656 = vld [vmem:[#allocation2 + $0xfc0] sm:$0xff]
    %v657 = vld [vmem:[#allocation2 + $0xfc8] sm:$0xff]
    %v658 = vld [vmem:[#allocation2 + $0xfd0] sm:$0xff]
    %v659 = vld [vmem:[#allocation2 + $0xfd8] sm:$0xff]
    %v660 = vld [vmem:[#allocation2 + $0xfe0] sm:$0xff]
    %v661 = vld [vmem:[#allocation2 + $0xfe8] sm:$0xff]
    %v662 = vld [vmem:[#allocation2 + $0xff0] sm:$0xff]
    %v663 = vld [vmem:[#allocation2 + $0xff8] sm:$0xff]
    %v664 = vld [vmem:[#allocation2 + $0x1000] sm:$0xff]
    %v665 = vld [vmem:[#allocation2 + $0x1008] sm:$0xff]
    %v666 = vld [vmem:[#allocation2 + $0x1010] sm:$0xff]
    %v667 = vld [vmem:[#allocation2 + $0x1018] sm:$0xff]
    %v668 = vld [vmem:[#allocation2 + $0x1020] sm:$0xff]
    %v669 = vld [vmem:[#allocation2 + $0x1028] sm:$0xff]
    %v670 = vld [vmem:[#allocation2 + $0x1030] sm:$0xff]
    %v671 = vld [vmem:[#allocation2 + $0x1038] sm:$0xff]
    %v672 = vld [vmem:[#allocation2 + $0x1040] sm:$0xff]
    %v673 = vld [vmem:[#allocation2 + $0x1048] sm:$0xff]
    %v674 = vld [vmem:[#allocation2 + $0x1050] sm:$0xff]
    %v675 = vld [vmem:[#allocation2 + $0x1058] sm:$0xff]
    %v676 = vld [vmem:[#allocation2 + $0x1060] sm:$0xff]
    %v677 = vld [vmem:[#allocation2 + $0x1068] sm:$0xff]
    %v678 = vld [vmem:[#allocation2 + $0x1070] sm:$0xff]
    %v679 = vld [vmem:[#allocation2 + $0x1078] sm:$0xff]
    %v680 = vld [vmem:[#allocation2 + $0x1080] sm:$0xff]
    %v681 = vld [vmem:[#allocation2 + $0x1088] sm:$0xff]
    %v682 = vld [vmem:[#allocation2 + $0x1090] sm:$0xff]
    %v683 = vld [vmem:[#allocation2 + $0x1098] sm:$0xff]
    %v684 = vld [vmem:[#allocation2 + $0x10a0] sm:$0xff]
    %v685 = vld [vmem:[#allocation2 + $0x10a8] sm:$0xff]
    %v686 = vld [vmem:[#allocation2 + $0x10b0] sm:$0xff]
    %v687 = vld [vmem:[#allocation2 + $0x10b8] sm:$0xff]
    %v688 = vld [vmem:[#allocation2 + $0x10c0] sm:$0xff]
    %v689 = vld [vmem:[#allocation2 + $0x10c8] sm:$0xff]
    %v690 = vld [vmem:[#allocation2 + $0x10d0] sm:$0xff]
    %v691 = vld [vmem:[#allocation2 + $0x10d8] sm:$0xff]
    %v692 = vld [vmem:[#allocation2 + $0x10e0] sm:$0xff]
    %v693 = vld [vmem:[#allocation2 + $0x10e8] sm:$0xff]
    %v694 = vld [vmem:[#allocation2 + $0x10f0] sm:$0xff]
    %v695 = vld [vmem:[#allocation2 + $0x10f8] sm:$0xff]
    %v696 = vld [vmem:[#allocation2 + $0x1100] sm:$0xff]
    %v697 = vld [vmem:[#allocation2 + $0x1108] sm:$0xff]
    %v698 = vld [vmem:[#allocation2 + $0x1110] sm:$0xff]
    %v699 = vld [vmem:[#allocation2 + $0x1118] sm:$0xff]
    %v700 = vld [vmem:[#allocation2 + $0x1120] sm:$0xff]
    %v701 = vld [vmem:[#allocation2 + $0x1128] sm:$0xff]
    %v702 = vld [vmem:[#allocation2 + $0x1130] sm:$0xff]
    %v703 = vld [vmem:[#allocation2 + $0x1138] sm:$0xff]
    %v704 = vld [vmem:[#allocation2 + $0x1140] sm:$0xff]
    %v705 = vld [vmem:[#allocation2 + $0x1148] sm:$0xff]
    %v706 = vld [vmem:[#allocation2 + $0x1150] sm:$0xff]
    %v707 = vld [vmem:[#allocation2 + $0x1158] sm:$0xff]
    %v708 = vld [vmem:[#allocation2 + $0x1160] sm:$0xff]
    %v709 = vld [vmem:[#allocation2 + $0x1168] sm:$0xff]
    %v710 = vld [vmem:[#allocation2 + $0x1170] sm:$0xff]
    %v711 = vld [vmem:[#allocation2 + $0x1178] sm:$0xff]
    %v712 = vld [vmem:[#allocation2 + $0x1180] sm:$0xff]
    %v713 = vld [vmem:[#allocation2 + $0x1188] sm:$0xff]
    %v714 = vld [vmem:[#allocation2 + $0x1190] sm:$0xff]
    %v715 = vld [vmem:[#allocation2 + $0x1198] sm:$0xff]
    %v716 = vld [vmem:[#allocation2 + $0x11a0] sm:$0xff]
    %v717 = vld [vmem:[#allocation2 + $0x11a8] sm:$0xff]
    %v718 = vld [vmem:[#allocation2 + $0x11b0] sm:$0xff]
    %v719 = vld [vmem:[#allocation2 + $0x11b8] sm:$0xff]
    %v720 = vld [vmem:[#allocation2 + $0x11c0] sm:$0xff]
    %v721 = vld [vmem:[#allocation2 + $0x11c8] sm:$0xff]
    %v722 = vld [vmem:[#allocation2 + $0x11d0] sm:$0xff]
    %v723 = vld [vmem:[#allocation2 + $0x11d8] sm:$0xff]
    %v724 = vld [vmem:[#allocation2 + $0x11e0] sm:$0xff]
    %v725 = vld [vmem:[#allocation2 + $0x11e8] sm:$0xff]
    %v726 = vld [vmem:[#allocation2 + $0x11f0] sm:$0xff]
    %v727 = vld [vmem:[#allocation2 + $0x11f8] sm:$0xff]
    %v728 = vld [vmem:[#allocation2 + $0x1200] sm:$0xff]
    %v729 = vld [vmem:[#allocation2 + $0x1208] sm:$0xff]
    %v730 = vld [vmem:[#allocation2 + $0x1210] sm:$0xff]
    %v731 = vld [vmem:[#allocation2 + $0x1218] sm:$0xff]
    %v732 = vld [vmem:[#allocation2 + $0x1220] sm:$0xff]
    %v733 = vld [vmem:[#allocation2 + $0x1228] sm:$0xff]
    %v734 = vld [vmem:[#allocation2 + $0x1230] sm:$0xff]
    %v735 = vld [vmem:[#allocation2 + $0x1238] sm:$0xff]
    %v736 = vld [vmem:[#allocation2 + $0x1240] sm:$0xff]
    %v737 = vld [vmem:[#allocation2 + $0x1248] sm:$0xff]
    %v738 = vld [vmem:[#allocation2 + $0x1250] sm:$0xff]
    %v739 = vld [vmem:[#allocation2 + $0x1258] sm:$0xff]
    %v740 = vld [vmem:[#allocation2 + $0x1260] sm:$0xff]
    %v741 = vld [vmem:[#allocation2 + $0x1268] sm:$0xff]
    %v742 = vld [vmem:[#allocation2 + $0x1270] sm:$0xff]
    %v743 = vld [vmem:[#allocation2 + $0x1278] sm:$0xff]
    %v744 = vld [vmem:[#allocation2 + $0x1280] sm:$0xff]
    %v745 = vld [vmem:[#allocation2 + $0x1288] sm:$0xff]
    %v746 = vld [vmem:[#allocation2 + $0x1290] sm:$0xff]
    %v747 = vld [vmem:[#allocation2 + $0x1298] sm:$0xff]
    %v748 = vld [vmem:[#allocation2 + $0x12a0] sm:$0xff]
    %v749 = vld [vmem:[#allocation2 + $0x12a8] sm:$0xff]
    %v750 = vld [vmem:[#allocation2 + $0x12b0] sm:$0xff]
    %v751 = vld [vmem:[#allocation2 + $0x12b8] sm:$0xff]
    %v752 = vld [vmem:[#allocation2 + $0x12c0] sm:$0xff]
    %v753 = vld [vmem:[#allocation2 + $0x12c8] sm:$0xff]
    %v754 = vld [vmem:[#allocation2 + $0x12d0] sm:$0xff]
    %v755 = vld [vmem:[#allocation2 + $0x12d8] sm:$0xff]
    %v756 = vld [vmem:[#allocation2 + $0x12e0] sm:$0xff]
    %v757 = vld [vmem:[#allocation2 + $0x12e8] sm:$0xff]
    %v758 = vld [vmem:[#allocation2 + $0x12f0] sm:$0xff]
    %v759 = vld [vmem:[#allocation2 + $0x12f8] sm:$0xff]
    %v760 = vld [vmem:[#allocation2 + $0x1300] sm:$0xff]
    %v761 = vld [vmem:[#allocation2 + $0x1308] sm:$0xff]
    %v762 = vld [vmem:[#allocation2 + $0x1310] sm:$0xff]
    %v763 = vld [vmem:[#allocation2 + $0x1318] sm:$0xff]
    %v764 = vld [vmem:[#allocation2 + $0x1320] sm:$0xff]
    %v765 = vld [vmem:[#allocation2 + $0x1328] sm:$0xff]
    %v766 = vld [vmem:[#allocation2 + $0x1330] sm:$0xff]
    %v767 = vld [vmem:[#allocation2 + $0x1338] sm:$0xff]
    %v768 = vld [vmem:[#allocation2 + $0x1340] sm:$0xff]
    %v769 = vld [vmem:[#allocation2 + $0x1348] sm:$0xff]
    %v770 = vld [vmem:[#allocation2 + $0x1350] sm:$0xff]
    %v771 = vld [vmem:[#allocation2 + $0x1358] sm:$0xff]
    %v772 = vld [vmem:[#allocation2 + $0x1360] sm:$0xff]
    %v773 = vld [vmem:[#allocation2 + $0x1368] sm:$0xff]
    %v774 = vld [vmem:[#allocation2 + $0x1370] sm:$0xff]
    %v775 = vld [vmem:[#allocation2 + $0x1378] sm:$0xff]
    %v776 = vld [vmem:[#allocation2 + $0x1380] sm:$0xff]
    %v777 = vld [vmem:[#allocation2 + $0x1388] sm:$0xff]
    %v778 = vld [vmem:[#allocation2 + $0x1390] sm:$0xff]
    %v779 = vld [vmem:[#allocation2 + $0x1398] sm:$0xff]
    %v780 = vld [vmem:[#allocation2 + $0x13a0] sm:$0xff]
    %v781 = vld [vmem:[#allocation2 + $0x13a8] sm:$0xff]
    %v782 = vld [vmem:[#allocation2 + $0x13b0] sm:$0xff]
    %v783 = vld [vmem:[#allocation2 + $0x13b8] sm:$0xff]
    %v784 = vld [vmem:[#allocation2 + $0x13c0] sm:$0xff]
    %v785 = vld [vmem:[#allocation2 + $0x13c8] sm:$0xff]
    %v786 = vld [vmem:[#allocation2 + $0x13d0] sm:$0xff]
    %v787 = vld [vmem:[#allocation2 + $0x13d8] sm:$0xff]
    %v788 = vld [vmem:[#allocation2 + $0x13e0] sm:$0xff]
    %v789 = vld [vmem:[#allocation2 + $0x13e8] sm:$0xff]
    %v790 = vld [vmem:[#allocation2 + $0x13f0] sm:$0xff]
    %v791 = vld [vmem:[#allocation2 + $0x13f8] sm:$0xff]
    %v792 = vld [vmem:[#allocation2 + $0x1400] sm:$0xff]
    %v793 = vld [vmem:[#allocation2 + $0x1408] sm:$0xff]
    %v794 = vld [vmem:[#allocation2 + $0x1410] sm:$0xff]
    %v795 = vld [vmem:[#allocation2 + $0x1418] sm:$0xff]
    %v796 = vld [vmem:[#allocation2 + $0x1420] sm:$0xff]
    %v797 = vld [vmem:[#allocation2 + $0x1428] sm:$0xff]
    %v798 = vld [vmem:[#allocation2 + $0x1430] sm:$0xff]
    %v799 = vld [vmem:[#allocation2 + $0x1438] sm:$0xff]
    %v800 = vld [vmem:[#allocation2 + $0x1440] sm:$0xff]
    %v801 = vld [vmem:[#allocation2 + $0x1448] sm:$0xff]
    %v802 = vld [vmem:[#allocation2 + $0x1450] sm:$0xff]
    %v803 = vld [vmem:[#allocation2 + $0x1458] sm:$0xff]
    %v804 = vld [vmem:[#allocation2 + $0x1460] sm:$0xff]
    %v805 = vld [vmem:[#allocation2 + $0x1468] sm:$0xff]
    %v806 = vld [vmem:[#allocation2 + $0x1470] sm:$0xff]
    %v807 = vld [vmem:[#allocation2 + $0x1478] sm:$0xff]
    %v808 = vld [vmem:[#allocation2 + $0x1480] sm:$0xff]
    %v809 = vld [vmem:[#allocation2 + $0x1488] sm:$0xff]
    %v810 = vld [vmem:[#allocation2 + $0x1490] sm:$0xff]
    %v811 = vld [vmem:[#allocation2 + $0x1498] sm:$0xff]
    %v812 = vld [vmem:[#allocation2 + $0x14a0] sm:$0xff]
    %v813 = vld [vmem:[#allocation2 + $0x14a8] sm:$0xff]
    %v814 = vld [vmem:[#allocation2 + $0x14b0] sm:$0xff]
    %v815 = vld [vmem:[#allocation2 + $0x14b8] sm:$0xff]
    %v816 = vld [vmem:[#allocation2 + $0x14c0] sm:$0xff]
    %v817 = vld [vmem:[#allocation2 + $0x14c8] sm:$0xff]
    %v818 = vld [vmem:[#allocation2 + $0x14d0] sm:$0xff]
    %v819 = vld [vmem:[#allocation2 + $0x14d8] sm:$0xff]
    %v820 = vld [vmem:[#allocation2 + $0x14e0] sm:$0xff]
    %v821 = vld [vmem:[#allocation2 + $0x14e8] sm:$0xff]
    %v822 = vld [vmem:[#allocation2 + $0x14f0] sm:$0xff]
    %v823 = vld [vmem:[#allocation2 + $0x14f8] sm:$0xff]
    %v824 = vld [vmem:[#allocation2 + $0x1500] sm:$0xff]
    %v825 = vld [vmem:[#allocation2 + $0x1508] sm:$0xff]
    %v826 = vld [vmem:[#allocation2 + $0x1510] sm:$0xff]
    %v827 = vld [vmem:[#allocation2 + $0x1518] sm:$0xff]
    %v828 = vld [vmem:[#allocation2 + $0x1520] sm:$0xff]
    %v829 = vld [vmem:[#allocation2 + $0x1528] sm:$0xff]
    %v830 = vld [vmem:[#allocation2 + $0x1530] sm:$0xff]
    %v831 = vld [vmem:[#allocation2 + $0x1538] sm:$0xff]
    %v832 = vld [vmem:[#allocation2 + $0x1540] sm:$0xff]
    %v833 = vld [vmem:[#allocation2 + $0x1548] sm:$0xff]
    %v834 = vld [vmem:[#allocation2 + $0x1550] sm:$0xff]
    %v835 = vld [vmem:[#allocation2 + $0x1558] sm:$0xff]
    %v836 = vld [vmem:[#allocation2 + $0x1560] sm:$0xff]
    %v837 = vld [vmem:[#allocation2 + $0x1568] sm:$0xff]
    %v838 = vld [vmem:[#allocation2 + $0x1570] sm:$0xff]
    %v839 = vld [vmem:[#allocation2 + $0x1578] sm:$0xff]
    %v840 = vld [vmem:[#allocation2 + $0x1580] sm:$0xff]
    %v841 = vld [vmem:[#allocation2 + $0x1588] sm:$0xff]
    %v842 = vld [vmem:[#allocation2 + $0x1590] sm:$0xff]
    %v843 = vld [vmem:[#allocation2 + $0x1598] sm:$0xff]
    %v844 = vld [vmem:[#allocation2 + $0x15a0] sm:$0xff]
    %v845 = vld [vmem:[#allocation2 + $0x15a8] sm:$0xff]
    %v846 = vld [vmem:[#allocation2 + $0x15b0] sm:$0xff]
    %v847 = vld [vmem:[#allocation2 + $0x15b8] sm:$0xff]
    %v848 = vld [vmem:[#allocation2 + $0x15c0] sm:$0xff]
    %v849 = vld [vmem:[#allocation2 + $0x15c8] sm:$0xff]
    %v850 = vld [vmem:[#allocation2 + $0x15d0] sm:$0xff]
    %v851 = vld [vmem:[#allocation2 + $0x15d8] sm:$0xff]
    %v852 = vld [vmem:[#allocation2 + $0x15e0] sm:$0xff]
    %v853 = vld [vmem:[#allocation2 + $0x15e8] sm:$0xff]
    %v854 = vld [vmem:[#allocation2 + $0x15f0] sm:$0xff]
    %v855 = vld [vmem:[#allocation2 + $0x15f8] sm:$0xff]
    %v856 = vld [vmem:[#allocation2 + $0x1600] sm:$0xff]
    %v857 = vld [vmem:[#allocation2 + $0x1608] sm:$0xff]
    %v858 = vld [vmem:[#allocation2 + $0x1610] sm:$0xff]
    %v859 = vld [vmem:[#allocation2 + $0x1618] sm:$0xff]
    %v860 = vld [vmem:[#allocation2 + $0x1620] sm:$0xff]
    %v861 = vld [vmem:[#allocation2 + $0x1628] sm:$0xff]
    %v862 = vld [vmem:[#allocation2 + $0x1630] sm:$0xff]
    %v863 = vld [vmem:[#allocation2 + $0x1638] sm:$0xff]
    %v864 = vld [vmem:[#allocation2 + $0x1640] sm:$0xff]
    %v865 = vld [vmem:[#allocation2 + $0x1648] sm:$0xff]
    %v866 = vld [vmem:[#allocation2 + $0x1650] sm:$0xff]
    %v867 = vld [vmem:[#allocation2 + $0x1658] sm:$0xff]
    %v868 = vld [vmem:[#allocation2 + $0x1660] sm:$0xff]
    %v869 = vld [vmem:[#allocation2 + $0x1668] sm:$0xff]
    %v870 = vld [vmem:[#allocation2 + $0x1670] sm:$0xff]
    %v871 = vld [vmem:[#allocation2 + $0x1678] sm:$0xff]
    %v872 = vld [vmem:[#allocation2 + $0x1680] sm:$0xff]
    %v873 = vld [vmem:[#allocation2 + $0x1688] sm:$0xff]
    %v874 = vld [vmem:[#allocation2 + $0x1690] sm:$0xff]
    %v875 = vld [vmem:[#allocation2 + $0x1698] sm:$0xff]
    %v876 = vld [vmem:[#allocation2 + $0x16a0] sm:$0xff]
    %v877 = vld [vmem:[#allocation2 + $0x16a8] sm:$0xff]
    %v878 = vld [vmem:[#allocation2 + $0x16b0] sm:$0xff]
    %v879 = vld [vmem:[#allocation2 + $0x16b8] sm:$0xff]
    %v880 = vld [vmem:[#allocation2 + $0x16c0] sm:$0xff]
    %v881 = vld [vmem:[#allocation2 + $0x16c8] sm:$0xff]
    %v882 = vld [vmem:[#allocation2 + $0x16d0] sm:$0xff]
    %v883 = vld [vmem:[#allocation2 + $0x16d8] sm:$0xff]
    %v884 = vld [vmem:[#allocation2 + $0x16e0] sm:$0xff]
    %v885 = vld [vmem:[#allocation2 + $0x16e8] sm:$0xff]
    %v886 = vld [vmem:[#allocation2 + $0x16f0] sm:$0xff]
    %v887 = vld [vmem:[#allocation2 + $0x16f8] sm:$0xff]
    %v888 = vld [vmem:[#allocation2 + $0x1700] sm:$0xff]
    %v889 = vld [vmem:[#allocation2 + $0x1708] sm:$0xff]
    %v890 = vld [vmem:[#allocation2 + $0x1710] sm:$0xff]
    %v891 = vld [vmem:[#allocation2 + $0x1718] sm:$0xff]
    %v892 = vld [vmem:[#allocation2 + $0x1720] sm:$0xff]
    %v893 = vld [vmem:[#allocation2 + $0x1728] sm:$0xff]
    %v894 = vld [vmem:[#allocation2 + $0x1730] sm:$0xff]
    %v895 = vld [vmem:[#allocation2 + $0x1738] sm:$0xff]
    %v896 = vld [vmem:[#allocation2 + $0x1740] sm:$0xff]
    %v897 = vld [vmem:[#allocation2 + $0x1748] sm:$0xff]
    %v898 = vld [vmem:[#allocation2 + $0x1750] sm:$0xff]
    %v899 = vld [vmem:[#allocation2 + $0x1758] sm:$0xff]
    %v900 = vld [vmem:[#allocation2 + $0x1760] sm:$0xff]
    %v901 = vld [vmem:[#allocation2 + $0x1768] sm:$0xff]
    %v902 = vld [vmem:[#allocation2 + $0x1770] sm:$0xff]
    %v903 = vld [vmem:[#allocation2 + $0x1778] sm:$0xff]
    %v904 = vld [vmem:[#allocation2 + $0x1780] sm:$0xff]
    %v905 = vld [vmem:[#allocation2 + $0x1788] sm:$0xff]
    %v906 = vld [vmem:[#allocation2 + $0x1790] sm:$0xff]
    %v907 = vld [vmem:[#allocation2 + $0x1798] sm:$0xff]
    %v908 = vld [vmem:[#allocation2 + $0x17a0] sm:$0xff]
    %v909 = vld [vmem:[#allocation2 + $0x17a8] sm:$0xff]
    %v910 = vld [vmem:[#allocation2 + $0x17b0] sm:$0xff]
    %v911 = vld [vmem:[#allocation2 + $0x17b8] sm:$0xff]
    %v912 = vld [vmem:[#allocation2 + $0x17c0] sm:$0xff]
    %v913 = vld [vmem:[#allocation2 + $0x17c8] sm:$0xff]
    %v914 = vld [vmem:[#allocation2 + $0x17d0] sm:$0xff]
    %v915 = vld [vmem:[#allocation2 + $0x17d8] sm:$0xff]
    %v916 = vld [vmem:[#allocation2 + $0x17e0] sm:$0xff]
    %v917 = vld [vmem:[#allocation2 + $0x17e8] sm:$0xff]
    %v918 = vld [vmem:[#allocation2 + $0x17f0] sm:$0xff]
    %v919 = vld [vmem:[#allocation2 + $0x17f8] sm:$0xff]
    %v920 = vld [vmem:[#allocation5] sm:$0xf]
    %v922 = vlaneseq
    %v923 = vshrl.u32 %v922, 7
    %v924 = vsub.s32 0, %v923
    %v925 = vrot.slane %v920, %v924
    %v926 = vlaneseq
    %v927 = vshrl.u32 %v926, 7
    %v928 = vsub.s32 1, %v927
    %v929 = vrot.slane %v920, %v928
    %v930 = vlaneseq
    %v931 = vshrl.u32 %v930, 7
    %v932 = vsub.s32 2, %v931
    %v933 = vrot.slane %v920, %v932
    %v934 = vlaneseq
    %v935 = vshrl.u32 %v934, 7
    %v936 = vsub.s32 3, %v935
    %v937 = vrot.slane %v920, %v936
    %v1710 = vunpack.c.l.b16 %v152
    %v1711 = vunpack.c.h.b16 %v152
    %v1712 = vunpack.c.l.b16 %v153
    %v1713 = vunpack.c.h.b16 %v153
    %v1714 = vunpack.c.l.b16 %v154
    %v1715 = vunpack.c.h.b16 %v154
    %v1716 = vunpack.c.l.b16 %v155
    %v1717 = vunpack.c.h.b16 %v155
    %v1718 = vunpack.c.l.b16 %v156
    %v1719 = vunpack.c.h.b16 %v156
    %v1720 = vunpack.c.l.b16 %v157
    %v1721 = vunpack.c.h.b16 %v157
    %v1722 = vunpack.c.l.b16 %v158
    %v1723 = vunpack.c.h.b16 %v158
    %v1724 = vunpack.c.l.b16 %v159
    %v1725 = vunpack.c.h.b16 %v159
    %v1726 = vunpack.c.l.b16 %v160
    %v1727 = vunpack.c.h.b16 %v160
    %v1728 = vunpack.c.l.b16 %v161
    %v1729 = vunpack.c.h.b16 %v161
    %v1730 = vunpack.c.l.b16 %v162
    %v1731 = vunpack.c.h.b16 %v162
    %v1732 = vunpack.c.l.b16 %v163
    %v1733 = vunpack.c.h.b16 %v163
    %v1734 = vunpack.c.l.b16 %v164
    %v1735 = vunpack.c.h.b16 %v164
    %v1736 = vunpack.c.l.b16 %v165
    %v1737 = vunpack.c.h.b16 %v165
    %v1738 = vunpack.c.l.b16 %v166
    %v1739 = vunpack.c.h.b16 %v166
    %v1740 = vunpack.c.l.b16 %v167
    %v1741 = vunpack.c.h.b16 %v167
    %v1742 = vunpack.c.l.b16 %v168
    %v1743 = vunpack.c.h.b16 %v168
    %v1744 = vunpack.c.l.b16 %v169
    %v1745 = vunpack.c.h.b16 %v169
    %v1746 = vunpack.c.l.b16 %v170
    %v1747 = vunpack.c.h.b16 %v170
    %v1748 = vunpack.c.l.b16 %v171
    %v1749 = vunpack.c.h.b16 %v171
    %v1750 = vunpack.c.l.b16 %v172
    %v1751 = vunpack.c.h.b16 %v172
    %v1752 = vunpack.c.l.b16 %v173
    %v1753 = vunpack.c.h.b16 %v173
    %v1754 = vunpack.c.l.b16 %v174
    %v1755 = vunpack.c.h.b16 %v174
    %v1756 = vunpack.c.l.b16 %v175
    %v1757 = vunpack.c.h.b16 %v175
    %v1758 = vunpack.c.l.b16 %v176
    %v1759 = vunpack.c.h.b16 %v176
    %v1760 = vunpack.c.l.b16 %v177
    %v1761 = vunpack.c.h.b16 %v177
    %v1762 = vunpack.c.l.b16 %v178
    %v1763 = vunpack.c.h.b16 %v178
    %v1764 = vunpack.c.l.b16 %v179
    %v1765 = vunpack.c.h.b16 %v179
    %v1766 = vunpack.c.l.b16 %v180
    %v1767 = vunpack.c.h.b16 %v180
    %v1768 = vunpack.c.l.b16 %v181
    %v1769 = vunpack.c.h.b16 %v181
    %v1770 = vunpack.c.l.b16 %v182
    %v1771 = vunpack.c.h.b16 %v182
    %v1772 = vunpack.c.l.b16 %v183
    %v1773 = vunpack.c.h.b16 %v183
    %v1774 = vunpack.c.l.b16 %v184
    %v1775 = vunpack.c.h.b16 %v184
    %v1776 = vunpack.c.l.b16 %v185
    %v1777 = vunpack.c.h.b16 %v185
    %v1778 = vunpack.c.l.b16 %v186
    %v1779 = vunpack.c.h.b16 %v186
    %v1780 = vunpack.c.l.b16 %v187
    %v1781 = vunpack.c.h.b16 %v187
    %v1782 = vunpack.c.l.b16 %v188
    %v1783 = vunpack.c.h.b16 %v188
    %v1784 = vunpack.c.l.b16 %v189
    %v1785 = vunpack.c.h.b16 %v189
    %v1786 = vunpack.c.l.b16 %v190
    %v1787 = vunpack.c.h.b16 %v190
    %v1788 = vunpack.c.l.b16 %v191
    %v1789 = vunpack.c.h.b16 %v191
    %v1790 = vunpack.c.l.b16 %v192
    %v1791 = vunpack.c.h.b16 %v192
    %v1792 = vunpack.c.l.b16 %v193
    %v1793 = vunpack.c.h.b16 %v193
    %v1794 = vunpack.c.l.b16 %v194
    %v1795 = vunpack.c.h.b16 %v194
    %v1796 = vunpack.c.l.b16 %v195
    %v1797 = vunpack.c.h.b16 %v195
    %v1798 = vunpack.c.l.b16 %v196
    %v1799 = vunpack.c.h.b16 %v196
    %v1800 = vunpack.c.l.b16 %v197
    %v1801 = vunpack.c.h.b16 %v197
    %v1802 = vunpack.c.l.b16 %v198
    %v1803 = vunpack.c.h.b16 %v198
    %v1804 = vunpack.c.l.b16 %v199
    %v1805 = vunpack.c.h.b16 %v199
    %v1806 = vunpack.c.l.b16 %v200
    %v1807 = vunpack.c.h.b16 %v200
    %v1808 = vunpack.c.l.b16 %v201
    %v1809 = vunpack.c.h.b16 %v201
    %v1810 = vunpack.c.l.b16 %v202
    %v1811 = vunpack.c.h.b16 %v202
    %v1812 = vunpack.c.l.b16 %v203
    %v1813 = vunpack.c.h.b16 %v203
    %v1814 = vunpack.c.l.b16 %v204
    %v1815 = vunpack.c.h.b16 %v204
    %v1816 = vunpack.c.l.b16 %v205
    %v1817 = vunpack.c.h.b16 %v205
    %v1818 = vunpack.c.l.b16 %v206
    %v1819 = vunpack.c.h.b16 %v206
    %v1820 = vunpack.c.l.b16 %v207
    %v1821 = vunpack.c.h.b16 %v207
    %v1822 = vunpack.c.l.b16 %v208
    %v1823 = vunpack.c.h.b16 %v208
    %v1824 = vunpack.c.l.b16 %v209
    %v1825 = vunpack.c.h.b16 %v209
    %v1826 = vunpack.c.l.b16 %v210
    %v1827 = vunpack.c.h.b16 %v210
    %v1828 = vunpack.c.l.b16 %v211
    %v1829 = vunpack.c.h.b16 %v211
    %v1830 = vunpack.c.l.b16 %v212
    %v1831 = vunpack.c.h.b16 %v212
    %v1832 = vunpack.c.l.b16 %v213
    %v1833 = vunpack.c.h.b16 %v213
    %v1834 = vunpack.c.l.b16 %v214
    %v1835 = vunpack.c.h.b16 %v214
    %v1836 = vunpack.c.l.b16 %v215
    %v1837 = vunpack.c.h.b16 %v215
    %v1838 = vunpack.c.l.b16 %v216
    %v1839 = vunpack.c.h.b16 %v216
    %v1840 = vunpack.c.l.b16 %v217
    %v1841 = vunpack.c.h.b16 %v217
    %v1842 = vunpack.c.l.b16 %v218
    %v1843 = vunpack.c.h.b16 %v218
    %v1844 = vunpack.c.l.b16 %v219
    %v1845 = vunpack.c.h.b16 %v219
    %v1846 = vunpack.c.l.b16 %v220
    %v1847 = vunpack.c.h.b16 %v220
    %v1848 = vunpack.c.l.b16 %v221
    %v1849 = vunpack.c.h.b16 %v221
    %v1850 = vunpack.c.l.b16 %v222
    %v1851 = vunpack.c.h.b16 %v222
    %v1852 = vunpack.c.l.b16 %v223
    %v1853 = vunpack.c.h.b16 %v223
    %v1854 = vunpack.c.l.b16 %v224
    %v1855 = vunpack.c.h.b16 %v224
    %v1856 = vunpack.c.l.b16 %v225
    %v1857 = vunpack.c.h.b16 %v225
    %v1858 = vunpack.c.l.b16 %v226
    %v1859 = vunpack.c.h.b16 %v226
    %v1860 = vunpack.c.l.b16 %v227
    %v1861 = vunpack.c.h.b16 %v227
    %v1862 = vunpack.c.l.b16 %v228
    %v1863 = vunpack.c.h.b16 %v228
    %v1864 = vunpack.c.l.b16 %v229
    %v1865 = vunpack.c.h.b16 %v229
    %v1866 = vunpack.c.l.b16 %v230
    %v1867 = vunpack.c.h.b16 %v230
    %v1868 = vunpack.c.l.b16 %v231
    %v1869 = vunpack.c.h.b16 %v231
    %v1870 = vunpack.c.l.b16 %v232
    %v1871 = vunpack.c.h.b16 %v232
    %v1872 = vunpack.c.l.b16 %v233
    %v1873 = vunpack.c.h.b16 %v233
    %v1874 = vunpack.c.l.b16 %v234
    %v1875 = vunpack.c.h.b16 %v234
    %v1876 = vunpack.c.l.b16 %v235
    %v1877 = vunpack.c.h.b16 %v235
    %v1878 = vunpack.c.l.b16 %v236
    %v1879 = vunpack.c.h.b16 %v236
    %v1880 = vunpack.c.l.b16 %v237
    %v1881 = vunpack.c.h.b16 %v237
    %v1882 = vunpack.c.l.b16 %v238
    %v1883 = vunpack.c.h.b16 %v238
    %v1884 = vunpack.c.l.b16 %v239
    %v1885 = vunpack.c.h.b16 %v239
    %v1886 = vunpack.c.l.b16 %v240
    %v1887 = vunpack.c.h.b16 %v240
    %v1888 = vunpack.c.l.b16 %v241
    %v1889 = vunpack.c.h.b16 %v241
    %v1890 = vunpack.c.l.b16 %v242
    %v1891 = vunpack.c.h.b16 %v242
    %v1892 = vunpack.c.l.b16 %v243
    %v1893 = vunpack.c.h.b16 %v243
    %v1894 = vunpack.c.l.b16 %v244
    %v1895 = vunpack.c.h.b16 %v244
    %v1896 = vunpack.c.l.b16 %v245
    %v1897 = vunpack.c.h.b16 %v245
    %v1898 = vunpack.c.l.b16 %v246
    %v1899 = vunpack.c.h.b16 %v246
    %v1900 = vunpack.c.l.b16 %v247
    %v1901 = vunpack.c.h.b16 %v247
    %v1902 = vunpack.c.l.b16 %v248
    %v1903 = vunpack.c.h.b16 %v248
    %v1904 = vunpack.c.l.b16 %v249
    %v1905 = vunpack.c.h.b16 %v249
    %v1906 = vunpack.c.l.b16 %v250
    %v1907 = vunpack.c.h.b16 %v250
    %v1908 = vunpack.c.l.b16 %v251
    %v1909 = vunpack.c.h.b16 %v251
    %v1910 = vunpack.c.l.b16 %v252
    %v1911 = vunpack.c.h.b16 %v252
    %v1912 = vunpack.c.l.b16 %v253
    %v1913 = vunpack.c.h.b16 %v253
    %v1914 = vunpack.c.l.b16 %v254
    %v1915 = vunpack.c.h.b16 %v254
    %v1916 = vunpack.c.l.b16 %v255
    %v1917 = vunpack.c.h.b16 %v255
    %v1918 = vunpack.c.l.b16 %v256
    %v1919 = vunpack.c.h.b16 %v256
    %v1920 = vunpack.c.l.b16 %v257
    %v1921 = vunpack.c.h.b16 %v257
    %v1922 = vunpack.c.l.b16 %v258
    %v1923 = vunpack.c.h.b16 %v258
    %v1924 = vunpack.c.l.b16 %v259
    %v1925 = vunpack.c.h.b16 %v259
    %v1926 = vunpack.c.l.b16 %v260
    %v1927 = vunpack.c.h.b16 %v260
    %v1928 = vunpack.c.l.b16 %v261
    %v1929 = vunpack.c.h.b16 %v261
    %v1930 = vunpack.c.l.b16 %v262
    %v1931 = vunpack.c.h.b16 %v262
    %v1932 = vunpack.c.l.b16 %v263
    %v1933 = vunpack.c.h.b16 %v263
    %v1934 = vunpack.c.l.b16 %v264
    %v1935 = vunpack.c.h.b16 %v264
    %v1936 = vunpack.c.l.b16 %v265
    %v1937 = vunpack.c.h.b16 %v265
    %v1938 = vunpack.c.l.b16 %v266
    %v1939 = vunpack.c.h.b16 %v266
    %v1940 = vunpack.c.l.b16 %v267
    %v1941 = vunpack.c.h.b16 %v267
    %v1942 = vunpack.c.l.b16 %v268
    %v1943 = vunpack.c.h.b16 %v268
    %v1944 = vunpack.c.l.b16 %v269
    %v1945 = vunpack.c.h.b16 %v269
    %v1946 = vunpack.c.l.b16 %v270
    %v1947 = vunpack.c.h.b16 %v270
    %v1948 = vunpack.c.l.b16 %v271
    %v1949 = vunpack.c.h.b16 %v271
    %v1950 = vunpack.c.l.b16 %v272
    %v1951 = vunpack.c.h.b16 %v272
    %v1952 = vunpack.c.l.b16 %v273
    %v1953 = vunpack.c.h.b16 %v273
    %v1954 = vunpack.c.l.b16 %v274
    %v1955 = vunpack.c.h.b16 %v274
    %v1956 = vunpack.c.l.b16 %v275
    %v1957 = vunpack.c.h.b16 %v275
    %v1958 = vunpack.c.l.b16 %v276
    %v1959 = vunpack.c.h.b16 %v276
    %v1960 = vunpack.c.l.b16 %v277
    %v1961 = vunpack.c.h.b16 %v277
    %v1962 = vunpack.c.l.b16 %v278
    %v1963 = vunpack.c.h.b16 %v278
    %v1964 = vunpack.c.l.b16 %v279
    %v1965 = vunpack.c.h.b16 %v279
    %v1966 = vunpack.c.l.b16 %v280
    %v1967 = vunpack.c.h.b16 %v280
    %v1968 = vunpack.c.l.b16 %v281
    %v1969 = vunpack.c.h.b16 %v281
    %v1970 = vunpack.c.l.b16 %v282
    %v1971 = vunpack.c.h.b16 %v282
    %v1972 = vunpack.c.l.b16 %v283
    %v1973 = vunpack.c.h.b16 %v283
    %v1974 = vunpack.c.l.b16 %v284
    %v1975 = vunpack.c.h.b16 %v284
    %v1976 = vunpack.c.l.b16 %v285
    %v1977 = vunpack.c.h.b16 %v285
    %v1978 = vunpack.c.l.b16 %v286
    %v1979 = vunpack.c.h.b16 %v286
    %v1980 = vunpack.c.l.b16 %v287
    %v1981 = vunpack.c.h.b16 %v287
    %v1982 = vunpack.c.l.b16 %v288
    %v1983 = vunpack.c.h.b16 %v288
    %v1984 = vunpack.c.l.b16 %v289
    %v1985 = vunpack.c.h.b16 %v289
    %v1986 = vunpack.c.l.b16 %v290
    %v1987 = vunpack.c.h.b16 %v290
    %v1988 = vunpack.c.l.b16 %v291
    %v1989 = vunpack.c.h.b16 %v291
    %v1990 = vunpack.c.l.b16 %v292
    %v1991 = vunpack.c.h.b16 %v292
    %v1992 = vunpack.c.l.b16 %v293
    %v1993 = vunpack.c.h.b16 %v293
    %v1994 = vunpack.c.l.b16 %v294
    %v1995 = vunpack.c.h.b16 %v294
    %v1996 = vunpack.c.l.b16 %v295
    %v1997 = vunpack.c.h.b16 %v295
    %v1998 = vunpack.c.l.b16 %v296
    %v1999 = vunpack.c.h.b16 %v296
    %v2000 = vunpack.c.l.b16 %v297
    %v2001 = vunpack.c.h.b16 %v297
    %v2002 = vunpack.c.l.b16 %v298
    %v2003 = vunpack.c.h.b16 %v298
    %v2004 = vunpack.c.l.b16 %v299
    %v2005 = vunpack.c.h.b16 %v299
    %v2006 = vunpack.c.l.b16 %v300
    %v2007 = vunpack.c.h.b16 %v300
    %v2008 = vunpack.c.l.b16 %v301
    %v2009 = vunpack.c.h.b16 %v301
    %v2010 = vunpack.c.l.b16 %v302
    %v2011 = vunpack.c.h.b16 %v302
    %v2012 = vunpack.c.l.b16 %v303
    %v2013 = vunpack.c.h.b16 %v303
    %v2014 = vunpack.c.l.b16 %v304
    %v2015 = vunpack.c.h.b16 %v304
    %v2016 = vunpack.c.l.b16 %v305
    %v2017 = vunpack.c.h.b16 %v305
    %v2018 = vunpack.c.l.b16 %v306
    %v2019 = vunpack.c.h.b16 %v306
    %v2020 = vunpack.c.l.b16 %v307
    %v2021 = vunpack.c.h.b16 %v307
    %v2022 = vunpack.c.l.b16 %v308
    %v2023 = vunpack.c.h.b16 %v308
    %v2024 = vunpack.c.l.b16 %v309
    %v2025 = vunpack.c.h.b16 %v309
    %v2026 = vunpack.c.l.b16 %v310
    %v2027 = vunpack.c.h.b16 %v310
    %v2028 = vunpack.c.l.b16 %v311
    %v2029 = vunpack.c.h.b16 %v311
    %v2030 = vunpack.c.l.b16 %v312
    %v2031 = vunpack.c.h.b16 %v312
    %v2032 = vunpack.c.l.b16 %v313
    %v2033 = vunpack.c.h.b16 %v313
    %v2034 = vunpack.c.l.b16 %v314
    %v2035 = vunpack.c.h.b16 %v314
    %v2036 = vunpack.c.l.b16 %v315
    %v2037 = vunpack.c.h.b16 %v315
    %v2038 = vunpack.c.l.b16 %v316
    %v2039 = vunpack.c.h.b16 %v316
    %v2040 = vunpack.c.l.b16 %v317
    %v2041 = vunpack.c.h.b16 %v317
    %v2042 = vunpack.c.l.b16 %v318
    %v2043 = vunpack.c.h.b16 %v318
    %v2044 = vunpack.c.l.b16 %v319
    %v2045 = vunpack.c.h.b16 %v319
    %v2046 = vunpack.c.l.b16 %v320
    %v2047 = vunpack.c.h.b16 %v320
    %v2048 = vunpack.c.l.b16 %v321
    %v2049 = vunpack.c.h.b16 %v321
    %v2050 = vunpack.c.l.b16 %v322
    %v2051 = vunpack.c.h.b16 %v322
    %v2052 = vunpack.c.l.b16 %v323
    %v2053 = vunpack.c.h.b16 %v323
    %v2054 = vunpack.c.l.b16 %v324
    %v2055 = vunpack.c.h.b16 %v324
    %v2056 = vunpack.c.l.b16 %v325
    %v2057 = vunpack.c.h.b16 %v325
    %v2058 = vunpack.c.l.b16 %v326
    %v2059 = vunpack.c.h.b16 %v326
    %v2060 = vunpack.c.l.b16 %v327
    %v2061 = vunpack.c.h.b16 %v327
    %v2062 = vunpack.c.l.b16 %v328
    %v2063 = vunpack.c.h.b16 %v328
    %v2064 = vunpack.c.l.b16 %v329
    %v2065 = vunpack.c.h.b16 %v329
    %v2066 = vunpack.c.l.b16 %v330
    %v2067 = vunpack.c.h.b16 %v330
    %v2068 = vunpack.c.l.b16 %v331
    %v2069 = vunpack.c.h.b16 %v331
    %v2070 = vunpack.c.l.b16 %v332
    %v2071 = vunpack.c.h.b16 %v332
    %v2072 = vunpack.c.l.b16 %v333
    %v2073 = vunpack.c.h.b16 %v333
    %v2074 = vunpack.c.l.b16 %v334
    %v2075 = vunpack.c.h.b16 %v334
    %v2076 = vunpack.c.l.b16 %v335
    %v2077 = vunpack.c.h.b16 %v335
    %v2078 = vunpack.c.l.b16 %v336
    %v2079 = vunpack.c.h.b16 %v336
    %v2080 = vunpack.c.l.b16 %v337
    %v2081 = vunpack.c.h.b16 %v337
    %v2082 = vunpack.c.l.b16 %v338
    %v2083 = vunpack.c.h.b16 %v338
    %v2084 = vunpack.c.l.b16 %v339
    %v2085 = vunpack.c.h.b16 %v339
    %v2086 = vunpack.c.l.b16 %v340
    %v2087 = vunpack.c.h.b16 %v340
    %v2088 = vunpack.c.l.b16 %v341
    %v2089 = vunpack.c.h.b16 %v341
    %v2090 = vunpack.c.l.b16 %v342
    %v2091 = vunpack.c.h.b16 %v342
    %v2092 = vunpack.c.l.b16 %v343
    %v2093 = vunpack.c.h.b16 %v343
    %v2094 = vunpack.c.l.b16 %v344
    %v2095 = vunpack.c.h.b16 %v344
    %v2096 = vunpack.c.l.b16 %v345
    %v2097 = vunpack.c.h.b16 %v345
    %v2098 = vunpack.c.l.b16 %v346
    %v2099 = vunpack.c.h.b16 %v346
    %v2100 = vunpack.c.l.b16 %v347
    %v2101 = vunpack.c.h.b16 %v347
    %v2102 = vunpack.c.l.b16 %v348
    %v2103 = vunpack.c.h.b16 %v348
    %v2104 = vunpack.c.l.b16 %v349
    %v2105 = vunpack.c.h.b16 %v349
    %v2106 = vunpack.c.l.b16 %v350
    %v2107 = vunpack.c.h.b16 %v350
    %v2108 = vunpack.c.l.b16 %v351
    %v2109 = vunpack.c.h.b16 %v351
    %v2110 = vunpack.c.l.b16 %v352
    %v2111 = vunpack.c.h.b16 %v352
    %v2112 = vunpack.c.l.b16 %v353
    %v2113 = vunpack.c.h.b16 %v353
    %v2114 = vunpack.c.l.b16 %v354
    %v2115 = vunpack.c.h.b16 %v354
    %v2116 = vunpack.c.l.b16 %v355
    %v2117 = vunpack.c.h.b16 %v355
    %v2118 = vunpack.c.l.b16 %v356
    %v2119 = vunpack.c.h.b16 %v356
    %v2120 = vunpack.c.l.b16 %v357
    %v2121 = vunpack.c.h.b16 %v357
    %v2122 = vunpack.c.l.b16 %v358
    %v2123 = vunpack.c.h.b16 %v358
    %v2124 = vunpack.c.l.b16 %v359
    %v2125 = vunpack.c.h.b16 %v359
    %v2126 = vunpack.c.l.b16 %v360
    %v2127 = vunpack.c.h.b16 %v360
    %v2128 = vunpack.c.l.b16 %v361
    %v2129 = vunpack.c.h.b16 %v361
    %v2130 = vunpack.c.l.b16 %v362
    %v2131 = vunpack.c.h.b16 %v362
    %v2132 = vunpack.c.l.b16 %v363
    %v2133 = vunpack.c.h.b16 %v363
    %v2134 = vunpack.c.l.b16 %v364
    %v2135 = vunpack.c.h.b16 %v364
    %v2136 = vunpack.c.l.b16 %v365
    %v2137 = vunpack.c.h.b16 %v365
    %v2138 = vunpack.c.l.b16 %v366
    %v2139 = vunpack.c.h.b16 %v366
    %v2140 = vunpack.c.l.b16 %v367
    %v2141 = vunpack.c.h.b16 %v367
    %v2142 = vunpack.c.l.b16 %v368
    %v2143 = vunpack.c.h.b16 %v368
    %v2144 = vunpack.c.l.b16 %v369
    %v2145 = vunpack.c.h.b16 %v369
    %v2146 = vunpack.c.l.b16 %v370
    %v2147 = vunpack.c.h.b16 %v370
    %v2148 = vunpack.c.l.b16 %v371
    %v2149 = vunpack.c.h.b16 %v371
    %v2150 = vunpack.c.l.b16 %v372
    %v2151 = vunpack.c.h.b16 %v372
    %v2152 = vunpack.c.l.b16 %v373
    %v2153 = vunpack.c.h.b16 %v373
    %v2154 = vunpack.c.l.b16 %v374
    %v2155 = vunpack.c.h.b16 %v374
    %v2156 = vunpack.c.l.b16 %v375
    %v2157 = vunpack.c.h.b16 %v375
    %v2158 = vunpack.c.l.b16 %v376
    %v2159 = vunpack.c.h.b16 %v376
    %v2160 = vunpack.c.l.b16 %v377
    %v2161 = vunpack.c.h.b16 %v377
    %v2162 = vunpack.c.l.b16 %v378
    %v2163 = vunpack.c.h.b16 %v378
    %v2164 = vunpack.c.l.b16 %v379
    %v2165 = vunpack.c.h.b16 %v379
    %v2166 = vunpack.c.l.b16 %v380
    %v2167 = vunpack.c.h.b16 %v380
    %v2168 = vunpack.c.l.b16 %v381
    %v2169 = vunpack.c.h.b16 %v381
    %v2170 = vunpack.c.l.b16 %v382
    %v2171 = vunpack.c.h.b16 %v382
    %v2172 = vunpack.c.l.b16 %v383
    %v2173 = vunpack.c.h.b16 %v383
    %v2174 = vunpack.c.l.b16 %v384
    %v2175 = vunpack.c.h.b16 %v384
    %v2176 = vunpack.c.l.b16 %v385
    %v2177 = vunpack.c.h.b16 %v385
    %v2178 = vunpack.c.l.b16 %v386
    %v2179 = vunpack.c.h.b16 %v386
    %v2180 = vunpack.c.l.b16 %v387
    %v2181 = vunpack.c.h.b16 %v387
    %v2182 = vunpack.c.l.b16 %v388
    %v2183 = vunpack.c.h.b16 %v388
    %v2184 = vunpack.c.l.b16 %v389
    %v2185 = vunpack.c.h.b16 %v389
    %v2186 = vunpack.c.l.b16 %v390
    %v2187 = vunpack.c.h.b16 %v390
    %v2188 = vunpack.c.l.b16 %v391
    %v2189 = vunpack.c.h.b16 %v391
    %v2190 = vunpack.c.l.b16 %v392
    %v2191 = vunpack.c.h.b16 %v392
    %v2192 = vunpack.c.l.b16 %v393
    %v2193 = vunpack.c.h.b16 %v393
    %v2194 = vunpack.c.l.b16 %v394
    %v2195 = vunpack.c.h.b16 %v394
    %v2196 = vunpack.c.l.b16 %v395
    %v2197 = vunpack.c.h.b16 %v395
    %v2198 = vunpack.c.l.b16 %v396
    %v2199 = vunpack.c.h.b16 %v396
    %v2200 = vunpack.c.l.b16 %v397
    %v2201 = vunpack.c.h.b16 %v397
    %v2202 = vunpack.c.l.b16 %v398
    %v2203 = vunpack.c.h.b16 %v398
    %v2204 = vunpack.c.l.b16 %v399
    %v2205 = vunpack.c.h.b16 %v399
    %v2206 = vunpack.c.l.b16 %v400
    %v2207 = vunpack.c.h.b16 %v400
    %v2208 = vunpack.c.l.b16 %v401
    %v2209 = vunpack.c.h.b16 %v401
    %v2210 = vunpack.c.l.b16 %v402
    %v2211 = vunpack.c.h.b16 %v402
    %v2212 = vunpack.c.l.b16 %v403
    %v2213 = vunpack.c.h.b16 %v403
    %v2214 = vunpack.c.l.b16 %v404
    %v2215 = vunpack.c.h.b16 %v404
    %v2216 = vunpack.c.l.b16 %v405
    %v2217 = vunpack.c.h.b16 %v405
    %v2218 = vunpack.c.l.b16 %v406
    %v2219 = vunpack.c.h.b16 %v406
    %v2220 = vunpack.c.l.b16 %v407
    %v2221 = vunpack.c.h.b16 %v407
    %v2222 = vunpack.c.l.b16 %v408
    %v2223 = vunpack.c.h.b16 %v408
    %v2224 = vunpack.c.l.b16 %v409
    %v2225 = vunpack.c.h.b16 %v409
    %v2226 = vunpack.c.l.b16 %v410
    %v2227 = vunpack.c.h.b16 %v410
    %v2228 = vunpack.c.l.b16 %v411
    %v2229 = vunpack.c.h.b16 %v411
    %v2230 = vunpack.c.l.b16 %v412
    %v2231 = vunpack.c.h.b16 %v412
    %v2232 = vunpack.c.l.b16 %v413
    %v2233 = vunpack.c.h.b16 %v413
    %v2234 = vunpack.c.l.b16 %v414
    %v2235 = vunpack.c.h.b16 %v414
    %v2236 = vunpack.c.l.b16 %v415
    %v2237 = vunpack.c.h.b16 %v415
    %v2238 = vunpack.c.l.b16 %v416
    %v2239 = vunpack.c.h.b16 %v416
    %v2240 = vunpack.c.l.b16 %v417
    %v2241 = vunpack.c.h.b16 %v417
    %v2242 = vunpack.c.l.b16 %v418
    %v2243 = vunpack.c.h.b16 %v418
    %v2244 = vunpack.c.l.b16 %v419
    %v2245 = vunpack.c.h.b16 %v419
    %v2246 = vunpack.c.l.b16 %v420
    %v2247 = vunpack.c.h.b16 %v420
    %v2248 = vunpack.c.l.b16 %v421
    %v2249 = vunpack.c.h.b16 %v421
    %v2250 = vunpack.c.l.b16 %v422
    %v2251 = vunpack.c.h.b16 %v422
    %v2252 = vunpack.c.l.b16 %v423
    %v2253 = vunpack.c.h.b16 %v423
    %v2254 = vunpack.c.l.b16 %v424
    %v2255 = vunpack.c.h.b16 %v424
    %v2256 = vunpack.c.l.b16 %v425
    %v2257 = vunpack.c.h.b16 %v425
    %v2258 = vunpack.c.l.b16 %v426
    %v2259 = vunpack.c.h.b16 %v426
    %v2260 = vunpack.c.l.b16 %v427
    %v2261 = vunpack.c.h.b16 %v427
    %v2262 = vunpack.c.l.b16 %v428
    %v2263 = vunpack.c.h.b16 %v428
    %v2264 = vunpack.c.l.b16 %v429
    %v2265 = vunpack.c.h.b16 %v429
    %v2266 = vunpack.c.l.b16 %v430
    %v2267 = vunpack.c.h.b16 %v430
    %v2268 = vunpack.c.l.b16 %v431
    %v2269 = vunpack.c.h.b16 %v431
    %v2270 = vunpack.c.l.b16 %v432
    %v2271 = vunpack.c.h.b16 %v432
    %v2272 = vunpack.c.l.b16 %v433
    %v2273 = vunpack.c.h.b16 %v433
    %v2274 = vunpack.c.l.b16 %v434
    %v2275 = vunpack.c.h.b16 %v434
    %v2276 = vunpack.c.l.b16 %v435
    %v2277 = vunpack.c.h.b16 %v435
    %v2278 = vunpack.c.l.b16 %v436
    %v2279 = vunpack.c.h.b16 %v436
    %v2280 = vunpack.c.l.b16 %v437
    %v2281 = vunpack.c.h.b16 %v437
    %v2282 = vunpack.c.l.b16 %v438
    %v2283 = vunpack.c.h.b16 %v438
    %v2284 = vunpack.c.l.b16 %v439
    %v2285 = vunpack.c.h.b16 %v439
    %v2286 = vunpack.c.l.b16 %v440
    %v2287 = vunpack.c.h.b16 %v440
    %v2288 = vunpack.c.l.b16 %v441
    %v2289 = vunpack.c.h.b16 %v441
    %v2290 = vunpack.c.l.b16 %v442
    %v2291 = vunpack.c.h.b16 %v442
    %v2292 = vunpack.c.l.b16 %v443
    %v2293 = vunpack.c.h.b16 %v443
    %v2294 = vunpack.c.l.b16 %v444
    %v2295 = vunpack.c.h.b16 %v444
    %v2296 = vunpack.c.l.b16 %v445
    %v2297 = vunpack.c.h.b16 %v445
    %v2298 = vunpack.c.l.b16 %v446
    %v2299 = vunpack.c.h.b16 %v446
    %v2300 = vunpack.c.l.b16 %v447
    %v2301 = vunpack.c.h.b16 %v447
    %v2302 = vunpack.c.l.b16 %v448
    %v2303 = vunpack.c.h.b16 %v448
    %v2304 = vunpack.c.l.b16 %v449
    %v2305 = vunpack.c.h.b16 %v449
    %v2306 = vunpack.c.l.b16 %v450
    %v2307 = vunpack.c.h.b16 %v450
    %v2308 = vunpack.c.l.b16 %v451
    %v2309 = vunpack.c.h.b16 %v451
    %v2310 = vunpack.c.l.b16 %v452
    %v2311 = vunpack.c.h.b16 %v452
    %v2312 = vunpack.c.l.b16 %v453
    %v2313 = vunpack.c.h.b16 %v453
    %v2314 = vunpack.c.l.b16 %v454
    %v2315 = vunpack.c.h.b16 %v454
    %v2316 = vunpack.c.l.b16 %v455
    %v2317 = vunpack.c.h.b16 %v455
    %v2318 = vunpack.c.l.b16 %v456
    %v2319 = vunpack.c.h.b16 %v456
    %v2320 = vunpack.c.l.b16 %v457
    %v2321 = vunpack.c.h.b16 %v457
    %v2322 = vunpack.c.l.b16 %v458
    %v2323 = vunpack.c.h.b16 %v458
    %v2324 = vunpack.c.l.b16 %v459
    %v2325 = vunpack.c.h.b16 %v459
    %v2326 = vunpack.c.l.b16 %v460
    %v2327 = vunpack.c.h.b16 %v460
    %v2328 = vunpack.c.l.b16 %v461
    %v2329 = vunpack.c.h.b16 %v461
    %v2330 = vunpack.c.l.b16 %v462
    %v2331 = vunpack.c.h.b16 %v462
    %v2332 = vunpack.c.l.b16 %v463
    %v2333 = vunpack.c.h.b16 %v463
    %v2334 = vunpack.c.l.b16 %v464
    %v2335 = vunpack.c.h.b16 %v464
    %v2336 = vunpack.c.l.b16 %v465
    %v2337 = vunpack.c.h.b16 %v465
    %v2338 = vunpack.c.l.b16 %v466
    %v2339 = vunpack.c.h.b16 %v466
    %v2340 = vunpack.c.l.b16 %v467
    %v2341 = vunpack.c.h.b16 %v467
    %v2342 = vunpack.c.l.b16 %v468
    %v2343 = vunpack.c.h.b16 %v468
    %v2344 = vunpack.c.l.b16 %v469
    %v2345 = vunpack.c.h.b16 %v469
    %v2346 = vunpack.c.l.b16 %v470
    %v2347 = vunpack.c.h.b16 %v470
    %v2348 = vunpack.c.l.b16 %v471
    %v2349 = vunpack.c.h.b16 %v471
    %v2350 = vunpack.c.l.b16 %v472
    %v2351 = vunpack.c.h.b16 %v472
    %v2352 = vunpack.c.l.b16 %v473
    %v2353 = vunpack.c.h.b16 %v473
    %v2354 = vunpack.c.l.b16 %v474
    %v2355 = vunpack.c.h.b16 %v474
    %v2356 = vunpack.c.l.b16 %v475
    %v2357 = vunpack.c.h.b16 %v475
    %v2358 = vunpack.c.l.b16 %v476
    %v2359 = vunpack.c.h.b16 %v476
    %v2360 = vunpack.c.l.b16 %v477
    %v2361 = vunpack.c.h.b16 %v477
    %v2362 = vunpack.c.l.b16 %v478
    %v2363 = vunpack.c.h.b16 %v478
    %v2364 = vunpack.c.l.b16 %v479
    %v2365 = vunpack.c.h.b16 %v479
    %v2366 = vunpack.c.l.b16 %v480
    %v2367 = vunpack.c.h.b16 %v480
    %v2368 = vunpack.c.l.b16 %v481
    %v2369 = vunpack.c.h.b16 %v481
    %v2370 = vunpack.c.l.b16 %v482
    %v2371 = vunpack.c.h.b16 %v482
    %v2372 = vunpack.c.l.b16 %v483
    %v2373 = vunpack.c.h.b16 %v483
    %v2374 = vunpack.c.l.b16 %v484
    %v2375 = vunpack.c.h.b16 %v484
    %v2376 = vunpack.c.l.b16 %v485
    %v2377 = vunpack.c.h.b16 %v485
    %v2378 = vunpack.c.l.b16 %v486
    %v2379 = vunpack.c.h.b16 %v486
    %v2380 = vunpack.c.l.b16 %v487
    %v2381 = vunpack.c.h.b16 %v487
    %v2382 = vunpack.c.l.b16 %v488
    %v2383 = vunpack.c.h.b16 %v488
    %v2384 = vunpack.c.l.b16 %v489
    %v2385 = vunpack.c.h.b16 %v489
    %v2386 = vunpack.c.l.b16 %v490
    %v2387 = vunpack.c.h.b16 %v490
    %v2388 = vunpack.c.l.b16 %v491
    %v2389 = vunpack.c.h.b16 %v491
    %v2390 = vunpack.c.l.b16 %v492
    %v2391 = vunpack.c.h.b16 %v492
    %v2392 = vunpack.c.l.b16 %v493
    %v2393 = vunpack.c.h.b16 %v493
    %v2394 = vunpack.c.l.b16 %v494
    %v2395 = vunpack.c.h.b16 %v494
    %v2396 = vunpack.c.l.b16 %v495
    %v2397 = vunpack.c.h.b16 %v495
    %v2398 = vunpack.c.l.b16 %v496
    %v2399 = vunpack.c.h.b16 %v496
    %v2400 = vunpack.c.l.b16 %v497
    %v2401 = vunpack.c.h.b16 %v497
    %v2402 = vunpack.c.l.b16 %v498
    %v2403 = vunpack.c.h.b16 %v498
    %v2404 = vunpack.c.l.b16 %v499
    %v2405 = vunpack.c.h.b16 %v499
    %v2406 = vunpack.c.l.b16 %v500
    %v2407 = vunpack.c.h.b16 %v500
    %v2408 = vunpack.c.l.b16 %v501
    %v2409 = vunpack.c.h.b16 %v501
    %v2410 = vunpack.c.l.b16 %v502
    %v2411 = vunpack.c.h.b16 %v502
    %v2412 = vunpack.c.l.b16 %v503
    %v2413 = vunpack.c.h.b16 %v503
    %v2414 = vunpack.c.l.b16 %v504
    %v2415 = vunpack.c.h.b16 %v504
    %v2416 = vunpack.c.l.b16 %v505
    %v2417 = vunpack.c.h.b16 %v505
    %v2418 = vunpack.c.l.b16 %v506
    %v2419 = vunpack.c.h.b16 %v506
    %v2420 = vunpack.c.l.b16 %v507
    %v2421 = vunpack.c.h.b16 %v507
    %v2422 = vunpack.c.l.b16 %v508
    %v2423 = vunpack.c.h.b16 %v508
    %v2424 = vunpack.c.l.b16 %v509
    %v2425 = vunpack.c.h.b16 %v509
    %v2426 = vunpack.c.l.b16 %v510
    %v2427 = vunpack.c.h.b16 %v510
    %v2428 = vunpack.c.l.b16 %v511
    %v2429 = vunpack.c.h.b16 %v511
    %v2430 = vunpack.c.l.b16 %v512
    %v2431 = vunpack.c.h.b16 %v512
    %v2432 = vunpack.c.l.b16 %v513
    %v2433 = vunpack.c.h.b16 %v513
    %v2434 = vunpack.c.l.b16 %v514
    %v2435 = vunpack.c.h.b16 %v514
    %v2436 = vunpack.c.l.b16 %v515
    %v2437 = vunpack.c.h.b16 %v515
    %v2438 = vunpack.c.l.b16 %v516
    %v2439 = vunpack.c.h.b16 %v516
    %v2440 = vunpack.c.l.b16 %v517
    %v2441 = vunpack.c.h.b16 %v517
    %v2442 = vunpack.c.l.b16 %v518
    %v2443 = vunpack.c.h.b16 %v518
    %v2444 = vunpack.c.l.b16 %v519
    %v2445 = vunpack.c.h.b16 %v519
    %v2446 = vunpack.c.l.b16 %v520
    %v2447 = vunpack.c.h.b16 %v520
    %v2448 = vunpack.c.l.b16 %v521
    %v2449 = vunpack.c.h.b16 %v521
    %v2450 = vunpack.c.l.b16 %v522
    %v2451 = vunpack.c.h.b16 %v522
    %v2452 = vunpack.c.l.b16 %v523
    %v2453 = vunpack.c.h.b16 %v523
    %v2454 = vunpack.c.l.b16 %v524
    %v2455 = vunpack.c.h.b16 %v524
    %v2456 = vunpack.c.l.b16 %v525
    %v2457 = vunpack.c.h.b16 %v525
    %v2458 = vunpack.c.l.b16 %v526
    %v2459 = vunpack.c.h.b16 %v526
    %v2460 = vunpack.c.l.b16 %v527
    %v2461 = vunpack.c.h.b16 %v527
    %v2462 = vunpack.c.l.b16 %v528
    %v2463 = vunpack.c.h.b16 %v528
    %v2464 = vunpack.c.l.b16 %v529
    %v2465 = vunpack.c.h.b16 %v529
    %v2466 = vunpack.c.l.b16 %v530
    %v2467 = vunpack.c.h.b16 %v530
    %v2468 = vunpack.c.l.b16 %v531
    %v2469 = vunpack.c.h.b16 %v531
    %v2470 = vunpack.c.l.b16 %v532
    %v2471 = vunpack.c.h.b16 %v532
    %v2472 = vunpack.c.l.b16 %v533
    %v2473 = vunpack.c.h.b16 %v533
    %v2474 = vunpack.c.l.b16 %v534
    %v2475 = vunpack.c.h.b16 %v534
    %v2476 = vunpack.c.l.b16 %v535
    %v2477 = vunpack.c.h.b16 %v535
    %v2478 = vunpack.c.l.b16 %v536
    %v2479 = vunpack.c.h.b16 %v536
    %v2480 = vunpack.c.l.b16 %v537
    %v2481 = vunpack.c.h.b16 %v537
    %v2482 = vunpack.c.l.b16 %v538
    %v2483 = vunpack.c.h.b16 %v538
    %v2484 = vunpack.c.l.b16 %v539
    %v2485 = vunpack.c.h.b16 %v539
    %v2486 = vunpack.c.l.b16 %v540
    %v2487 = vunpack.c.h.b16 %v540
    %v2488 = vunpack.c.l.b16 %v541
    %v2489 = vunpack.c.h.b16 %v541
    %v2490 = vunpack.c.l.b16 %v542
    %v2491 = vunpack.c.h.b16 %v542
    %v2492 = vunpack.c.l.b16 %v543
    %v2493 = vunpack.c.h.b16 %v543
    %v2494 = vunpack.c.l.b16 %v544
    %v2495 = vunpack.c.h.b16 %v544
    %v2496 = vunpack.c.l.b16 %v545
    %v2497 = vunpack.c.h.b16 %v545
    %v2498 = vunpack.c.l.b16 %v546
    %v2499 = vunpack.c.h.b16 %v546
    %v2500 = vunpack.c.l.b16 %v547
    %v2501 = vunpack.c.h.b16 %v547
    %v2502 = vunpack.c.l.b16 %v548
    %v2503 = vunpack.c.h.b16 %v548
    %v2504 = vunpack.c.l.b16 %v549
    %v2505 = vunpack.c.h.b16 %v549
    %v2506 = vunpack.c.l.b16 %v550
    %v2507 = vunpack.c.h.b16 %v550
    %v2508 = vunpack.c.l.b16 %v551
    %v2509 = vunpack.c.h.b16 %v551
    %v2510 = vunpack.c.l.b16 %v552
    %v2511 = vunpack.c.h.b16 %v552
    %v2512 = vunpack.c.l.b16 %v553
    %v2513 = vunpack.c.h.b16 %v553
    %v2514 = vunpack.c.l.b16 %v554
    %v2515 = vunpack.c.h.b16 %v554
    %v2516 = vunpack.c.l.b16 %v555
    %v2517 = vunpack.c.h.b16 %v555
    %v2518 = vunpack.c.l.b16 %v556
    %v2519 = vunpack.c.h.b16 %v556
    %v2520 = vunpack.c.l.b16 %v557
    %v2521 = vunpack.c.h.b16 %v557
    %v2522 = vunpack.c.l.b16 %v558
    %v2523 = vunpack.c.h.b16 %v558
    %v2524 = vunpack.c.l.b16 %v559
    %v2525 = vunpack.c.h.b16 %v559
    %v2526 = vunpack.c.l.b16 %v560
    %v2527 = vunpack.c.h.b16 %v560
    %v2528 = vunpack.c.l.b16 %v561
    %v2529 = vunpack.c.h.b16 %v561
    %v2530 = vunpack.c.l.b16 %v562
    %v2531 = vunpack.c.h.b16 %v562
    %v2532 = vunpack.c.l.b16 %v563
    %v2533 = vunpack.c.h.b16 %v563
    %v2534 = vunpack.c.l.b16 %v564
    %v2535 = vunpack.c.h.b16 %v564
    %v2536 = vunpack.c.l.b16 %v565
    %v2537 = vunpack.c.h.b16 %v565
    %v2538 = vunpack.c.l.b16 %v566
    %v2539 = vunpack.c.h.b16 %v566
    %v2540 = vunpack.c.l.b16 %v567
    %v2541 = vunpack.c.h.b16 %v567
    %v2542 = vunpack.c.l.b16 %v568
    %v2543 = vunpack.c.h.b16 %v568
    %v2544 = vunpack.c.l.b16 %v569
    %v2545 = vunpack.c.h.b16 %v569
    %v2546 = vunpack.c.l.b16 %v570
    %v2547 = vunpack.c.h.b16 %v570
    %v2548 = vunpack.c.l.b16 %v571
    %v2549 = vunpack.c.h.b16 %v571
    %v2550 = vunpack.c.l.b16 %v572
    %v2551 = vunpack.c.h.b16 %v572
    %v2552 = vunpack.c.l.b16 %v573
    %v2553 = vunpack.c.h.b16 %v573
    %v2554 = vunpack.c.l.b16 %v574
    %v2555 = vunpack.c.h.b16 %v574
    %v2556 = vunpack.c.l.b16 %v575
    %v2557 = vunpack.c.h.b16 %v575
    %v2558 = vunpack.c.l.b16 %v576
    %v2559 = vunpack.c.h.b16 %v576
    %v2560 = vunpack.c.l.b16 %v577
    %v2561 = vunpack.c.h.b16 %v577
    %v2562 = vunpack.c.l.b16 %v578
    %v2563 = vunpack.c.h.b16 %v578
    %v2564 = vunpack.c.l.b16 %v579
    %v2565 = vunpack.c.h.b16 %v579
    %v2566 = vunpack.c.l.b16 %v580
    %v2567 = vunpack.c.h.b16 %v580
    %v2568 = vunpack.c.l.b16 %v581
    %v2569 = vunpack.c.h.b16 %v581
    %v2570 = vunpack.c.l.b16 %v582
    %v2571 = vunpack.c.h.b16 %v582
    %v2572 = vunpack.c.l.b16 %v583
    %v2573 = vunpack.c.h.b16 %v583
    %v2574 = vunpack.c.l.b16 %v584
    %v2575 = vunpack.c.h.b16 %v584
    %v2576 = vunpack.c.l.b16 %v585
    %v2577 = vunpack.c.h.b16 %v585
    %v2578 = vunpack.c.l.b16 %v586
    %v2579 = vunpack.c.h.b16 %v586
    %v2580 = vunpack.c.l.b16 %v587
    %v2581 = vunpack.c.h.b16 %v587
    %v2582 = vunpack.c.l.b16 %v588
    %v2583 = vunpack.c.h.b16 %v588
    %v2584 = vunpack.c.l.b16 %v589
    %v2585 = vunpack.c.h.b16 %v589
    %v2586 = vunpack.c.l.b16 %v590
    %v2587 = vunpack.c.h.b16 %v590
    %v2588 = vunpack.c.l.b16 %v591
    %v2589 = vunpack.c.h.b16 %v591
    %v2590 = vunpack.c.l.b16 %v592
    %v2591 = vunpack.c.h.b16 %v592
    %v2592 = vunpack.c.l.b16 %v593
    %v2593 = vunpack.c.h.b16 %v593
    %v2594 = vunpack.c.l.b16 %v594
    %v2595 = vunpack.c.h.b16 %v594
    %v2596 = vunpack.c.l.b16 %v595
    %v2597 = vunpack.c.h.b16 %v595
    %v2598 = vunpack.c.l.b16 %v596
    %v2599 = vunpack.c.h.b16 %v596
    %v2600 = vunpack.c.l.b16 %v597
    %v2601 = vunpack.c.h.b16 %v597
    %v2602 = vunpack.c.l.b16 %v598
    %v2603 = vunpack.c.h.b16 %v598
    %v2604 = vunpack.c.l.b16 %v599
    %v2605 = vunpack.c.h.b16 %v599
    %v2606 = vunpack.c.l.b16 %v600
    %v2607 = vunpack.c.h.b16 %v600
    %v2608 = vunpack.c.l.b16 %v601
    %v2609 = vunpack.c.h.b16 %v601
    %v2610 = vunpack.c.l.b16 %v602
    %v2611 = vunpack.c.h.b16 %v602
    %v2612 = vunpack.c.l.b16 %v603
    %v2613 = vunpack.c.h.b16 %v603
    %v2614 = vunpack.c.l.b16 %v604
    %v2615 = vunpack.c.h.b16 %v604
    %v2616 = vunpack.c.l.b16 %v605
    %v2617 = vunpack.c.h.b16 %v605
    %v2618 = vunpack.c.l.b16 %v606
    %v2619 = vunpack.c.h.b16 %v606
    %v2620 = vunpack.c.l.b16 %v607
    %v2621 = vunpack.c.h.b16 %v607
    %v2622 = vunpack.c.l.b16 %v608
    %v2623 = vunpack.c.h.b16 %v608
    %v2624 = vunpack.c.l.b16 %v609
    %v2625 = vunpack.c.h.b16 %v609
    %v2626 = vunpack.c.l.b16 %v610
    %v2627 = vunpack.c.h.b16 %v610
    %v2628 = vunpack.c.l.b16 %v611
    %v2629 = vunpack.c.h.b16 %v611
    %v2630 = vunpack.c.l.b16 %v612
    %v2631 = vunpack.c.h.b16 %v612
    %v2632 = vunpack.c.l.b16 %v613
    %v2633 = vunpack.c.h.b16 %v613
    %v2634 = vunpack.c.l.b16 %v614
    %v2635 = vunpack.c.h.b16 %v614
    %v2636 = vunpack.c.l.b16 %v615
    %v2637 = vunpack.c.h.b16 %v615
    %v2638 = vunpack.c.l.b16 %v616
    %v2639 = vunpack.c.h.b16 %v616
    %v2640 = vunpack.c.l.b16 %v617
    %v2641 = vunpack.c.h.b16 %v617
    %v2642 = vunpack.c.l.b16 %v618
    %v2643 = vunpack.c.h.b16 %v618
    %v2644 = vunpack.c.l.b16 %v619
    %v2645 = vunpack.c.h.b16 %v619
    %v2646 = vunpack.c.l.b16 %v620
    %v2647 = vunpack.c.h.b16 %v620
    %v2648 = vunpack.c.l.b16 %v621
    %v2649 = vunpack.c.h.b16 %v621
    %v2650 = vunpack.c.l.b16 %v622
    %v2651 = vunpack.c.h.b16 %v622
    %v2652 = vunpack.c.l.b16 %v623
    %v2653 = vunpack.c.h.b16 %v623
    %v2654 = vunpack.c.l.b16 %v624
    %v2655 = vunpack.c.h.b16 %v624
    %v2656 = vunpack.c.l.b16 %v625
    %v2657 = vunpack.c.h.b16 %v625
    %v2658 = vunpack.c.l.b16 %v626
    %v2659 = vunpack.c.h.b16 %v626
    %v2660 = vunpack.c.l.b16 %v627
    %v2661 = vunpack.c.h.b16 %v627
    %v2662 = vunpack.c.l.b16 %v628
    %v2663 = vunpack.c.h.b16 %v628
    %v2664 = vunpack.c.l.b16 %v629
    %v2665 = vunpack.c.h.b16 %v629
    %v2666 = vunpack.c.l.b16 %v630
    %v2667 = vunpack.c.h.b16 %v630
    %v2668 = vunpack.c.l.b16 %v631
    %v2669 = vunpack.c.h.b16 %v631
    %v2670 = vunpack.c.l.b16 %v632
    %v2671 = vunpack.c.h.b16 %v632
    %v2672 = vunpack.c.l.b16 %v633
    %v2673 = vunpack.c.h.b16 %v633
    %v2674 = vunpack.c.l.b16 %v634
    %v2675 = vunpack.c.h.b16 %v634
    %v2676 = vunpack.c.l.b16 %v635
    %v2677 = vunpack.c.h.b16 %v635
    %v2678 = vunpack.c.l.b16 %v636
    %v2679 = vunpack.c.h.b16 %v636
    %v2680 = vunpack.c.l.b16 %v637
    %v2681 = vunpack.c.h.b16 %v637
    %v2682 = vunpack.c.l.b16 %v638
    %v2683 = vunpack.c.h.b16 %v638
    %v2684 = vunpack.c.l.b16 %v639
    %v2685 = vunpack.c.h.b16 %v639
    %v2686 = vunpack.c.l.b16 %v640
    %v2687 = vunpack.c.h.b16 %v640
    %v2688 = vunpack.c.l.b16 %v641
    %v2689 = vunpack.c.h.b16 %v641
    %v2690 = vunpack.c.l.b16 %v642
    %v2691 = vunpack.c.h.b16 %v642
    %v2692 = vunpack.c.l.b16 %v643
    %v2693 = vunpack.c.h.b16 %v643
    %v2694 = vunpack.c.l.b16 %v644
    %v2695 = vunpack.c.h.b16 %v644
    %v2696 = vunpack.c.l.b16 %v645
    %v2697 = vunpack.c.h.b16 %v645
    %v2698 = vunpack.c.l.b16 %v646
    %v2699 = vunpack.c.h.b16 %v646
    %v2700 = vunpack.c.l.b16 %v647
    %v2701 = vunpack.c.h.b16 %v647
    %v2702 = vunpack.c.l.b16 %v648
    %v2703 = vunpack.c.h.b16 %v648
    %v2704 = vunpack.c.l.b16 %v649
    %v2705 = vunpack.c.h.b16 %v649
    %v2706 = vunpack.c.l.b16 %v650
    %v2707 = vunpack.c.h.b16 %v650
    %v2708 = vunpack.c.l.b16 %v651
    %v2709 = vunpack.c.h.b16 %v651
    %v2710 = vunpack.c.l.b16 %v652
    %v2711 = vunpack.c.h.b16 %v652
    %v2712 = vunpack.c.l.b16 %v653
    %v2713 = vunpack.c.h.b16 %v653
    %v2714 = vunpack.c.l.b16 %v654
    %v2715 = vunpack.c.h.b16 %v654
    %v2716 = vunpack.c.l.b16 %v655
    %v2717 = vunpack.c.h.b16 %v655
    %v2718 = vunpack.c.l.b16 %v656
    %v2719 = vunpack.c.h.b16 %v656
    %v2720 = vunpack.c.l.b16 %v657
    %v2721 = vunpack.c.h.b16 %v657
    %v2722 = vunpack.c.l.b16 %v658
    %v2723 = vunpack.c.h.b16 %v658
    %v2724 = vunpack.c.l.b16 %v659
    %v2725 = vunpack.c.h.b16 %v659
    %v2726 = vunpack.c.l.b16 %v660
    %v2727 = vunpack.c.h.b16 %v660
    %v2728 = vunpack.c.l.b16 %v661
    %v2729 = vunpack.c.h.b16 %v661
    %v2730 = vunpack.c.l.b16 %v662
    %v2731 = vunpack.c.h.b16 %v662
    %v2732 = vunpack.c.l.b16 %v663
    %v2733 = vunpack.c.h.b16 %v663
    %v2734 = vunpack.c.l.b16 %v664
    %v2735 = vunpack.c.h.b16 %v664
    %v2736 = vunpack.c.l.b16 %v665
    %v2737 = vunpack.c.h.b16 %v665
    %v2738 = vunpack.c.l.b16 %v666
    %v2739 = vunpack.c.h.b16 %v666
    %v2740 = vunpack.c.l.b16 %v667
    %v2741 = vunpack.c.h.b16 %v667
    %v2742 = vunpack.c.l.b16 %v668
    %v2743 = vunpack.c.h.b16 %v668
    %v2744 = vunpack.c.l.b16 %v669
    %v2745 = vunpack.c.h.b16 %v669
    %v2746 = vunpack.c.l.b16 %v670
    %v2747 = vunpack.c.h.b16 %v670
    %v2748 = vunpack.c.l.b16 %v671
    %v2749 = vunpack.c.h.b16 %v671
    %v2750 = vunpack.c.l.b16 %v672
    %v2751 = vunpack.c.h.b16 %v672
    %v2752 = vunpack.c.l.b16 %v673
    %v2753 = vunpack.c.h.b16 %v673
    %v2754 = vunpack.c.l.b16 %v674
    %v2755 = vunpack.c.h.b16 %v674
    %v2756 = vunpack.c.l.b16 %v675
    %v2757 = vunpack.c.h.b16 %v675
    %v2758 = vunpack.c.l.b16 %v676
    %v2759 = vunpack.c.h.b16 %v676
    %v2760 = vunpack.c.l.b16 %v677
    %v2761 = vunpack.c.h.b16 %v677
    %v2762 = vunpack.c.l.b16 %v678
    %v2763 = vunpack.c.h.b16 %v678
    %v2764 = vunpack.c.l.b16 %v679
    %v2765 = vunpack.c.h.b16 %v679
    %v2766 = vunpack.c.l.b16 %v680
    %v2767 = vunpack.c.h.b16 %v680
    %v2768 = vunpack.c.l.b16 %v681
    %v2769 = vunpack.c.h.b16 %v681
    %v2770 = vunpack.c.l.b16 %v682
    %v2771 = vunpack.c.h.b16 %v682
    %v2772 = vunpack.c.l.b16 %v683
    %v2773 = vunpack.c.h.b16 %v683
    %v2774 = vunpack.c.l.b16 %v684
    %v2775 = vunpack.c.h.b16 %v684
    %v2776 = vunpack.c.l.b16 %v685
    %v2777 = vunpack.c.h.b16 %v685
    %v2778 = vunpack.c.l.b16 %v686
    %v2779 = vunpack.c.h.b16 %v686
    %v2780 = vunpack.c.l.b16 %v687
    %v2781 = vunpack.c.h.b16 %v687
    %v2782 = vunpack.c.l.b16 %v688
    %v2783 = vunpack.c.h.b16 %v688
    %v2784 = vunpack.c.l.b16 %v689
    %v2785 = vunpack.c.h.b16 %v689
    %v2786 = vunpack.c.l.b16 %v690
    %v2787 = vunpack.c.h.b16 %v690
    %v2788 = vunpack.c.l.b16 %v691
    %v2789 = vunpack.c.h.b16 %v691
    %v2790 = vunpack.c.l.b16 %v692
    %v2791 = vunpack.c.h.b16 %v692
    %v2792 = vunpack.c.l.b16 %v693
    %v2793 = vunpack.c.h.b16 %v693
    %v2794 = vunpack.c.l.b16 %v694
    %v2795 = vunpack.c.h.b16 %v694
    %v2796 = vunpack.c.l.b16 %v695
    %v2797 = vunpack.c.h.b16 %v695
    %v2798 = vunpack.c.l.b16 %v696
    %v2799 = vunpack.c.h.b16 %v696
    %v2800 = vunpack.c.l.b16 %v697
    %v2801 = vunpack.c.h.b16 %v697
    %v2802 = vunpack.c.l.b16 %v698
    %v2803 = vunpack.c.h.b16 %v698
    %v2804 = vunpack.c.l.b16 %v699
    %v2805 = vunpack.c.h.b16 %v699
    %v2806 = vunpack.c.l.b16 %v700
    %v2807 = vunpack.c.h.b16 %v700
    %v2808 = vunpack.c.l.b16 %v701
    %v2809 = vunpack.c.h.b16 %v701
    %v2810 = vunpack.c.l.b16 %v702
    %v2811 = vunpack.c.h.b16 %v702
    %v2812 = vunpack.c.l.b16 %v703
    %v2813 = vunpack.c.h.b16 %v703
    %v2814 = vunpack.c.l.b16 %v704
    %v2815 = vunpack.c.h.b16 %v704
    %v2816 = vunpack.c.l.b16 %v705
    %v2817 = vunpack.c.h.b16 %v705
    %v2818 = vunpack.c.l.b16 %v706
    %v2819 = vunpack.c.h.b16 %v706
    %v2820 = vunpack.c.l.b16 %v707
    %v2821 = vunpack.c.h.b16 %v707
    %v2822 = vunpack.c.l.b16 %v708
    %v2823 = vunpack.c.h.b16 %v708
    %v2824 = vunpack.c.l.b16 %v709
    %v2825 = vunpack.c.h.b16 %v709
    %v2826 = vunpack.c.l.b16 %v710
    %v2827 = vunpack.c.h.b16 %v710
    %v2828 = vunpack.c.l.b16 %v711
    %v2829 = vunpack.c.h.b16 %v711
    %v2830 = vunpack.c.l.b16 %v712
    %v2831 = vunpack.c.h.b16 %v712
    %v2832 = vunpack.c.l.b16 %v713
    %v2833 = vunpack.c.h.b16 %v713
    %v2834 = vunpack.c.l.b16 %v714
    %v2835 = vunpack.c.h.b16 %v714
    %v2836 = vunpack.c.l.b16 %v715
    %v2837 = vunpack.c.h.b16 %v715
    %v2838 = vunpack.c.l.b16 %v716
    %v2839 = vunpack.c.h.b16 %v716
    %v2840 = vunpack.c.l.b16 %v717
    %v2841 = vunpack.c.h.b16 %v717
    %v2842 = vunpack.c.l.b16 %v718
    %v2843 = vunpack.c.h.b16 %v718
    %v2844 = vunpack.c.l.b16 %v719
    %v2845 = vunpack.c.h.b16 %v719
    %v2846 = vunpack.c.l.b16 %v720
    %v2847 = vunpack.c.h.b16 %v720
    %v2848 = vunpack.c.l.b16 %v721
    %v2849 = vunpack.c.h.b16 %v721
    %v2850 = vunpack.c.l.b16 %v722
    %v2851 = vunpack.c.h.b16 %v722
    %v2852 = vunpack.c.l.b16 %v723
    %v2853 = vunpack.c.h.b16 %v723
    %v2854 = vunpack.c.l.b16 %v724
    %v2855 = vunpack.c.h.b16 %v724
    %v2856 = vunpack.c.l.b16 %v725
    %v2857 = vunpack.c.h.b16 %v725
    %v2858 = vunpack.c.l.b16 %v726
    %v2859 = vunpack.c.h.b16 %v726
    %v2860 = vunpack.c.l.b16 %v727
    %v2861 = vunpack.c.h.b16 %v727
    %v2862 = vunpack.c.l.b16 %v728
    %v2863 = vunpack.c.h.b16 %v728
    %v2864 = vunpack.c.l.b16 %v729
    %v2865 = vunpack.c.h.b16 %v729
    %v2866 = vunpack.c.l.b16 %v730
    %v2867 = vunpack.c.h.b16 %v730
    %v2868 = vunpack.c.l.b16 %v731
    %v2869 = vunpack.c.h.b16 %v731
    %v2870 = vunpack.c.l.b16 %v732
    %v2871 = vunpack.c.h.b16 %v732
    %v2872 = vunpack.c.l.b16 %v733
    %v2873 = vunpack.c.h.b16 %v733
    %v2874 = vunpack.c.l.b16 %v734
    %v2875 = vunpack.c.h.b16 %v734
    %v2876 = vunpack.c.l.b16 %v735
    %v2877 = vunpack.c.h.b16 %v735
    %v2878 = vunpack.c.l.b16 %v736
    %v2879 = vunpack.c.h.b16 %v736
    %v2880 = vunpack.c.l.b16 %v737
    %v2881 = vunpack.c.h.b16 %v737
    %v2882 = vunpack.c.l.b16 %v738
    %v2883 = vunpack.c.h.b16 %v738
    %v2884 = vunpack.c.l.b16 %v739
    %v2885 = vunpack.c.h.b16 %v739
    %v2886 = vunpack.c.l.b16 %v740
    %v2887 = vunpack.c.h.b16 %v740
    %v2888 = vunpack.c.l.b16 %v741
    %v2889 = vunpack.c.h.b16 %v741
    %v2890 = vunpack.c.l.b16 %v742
    %v2891 = vunpack.c.h.b16 %v742
    %v2892 = vunpack.c.l.b16 %v743
    %v2893 = vunpack.c.h.b16 %v743
    %v2894 = vunpack.c.l.b16 %v744
    %v2895 = vunpack.c.h.b16 %v744
    %v2896 = vunpack.c.l.b16 %v745
    %v2897 = vunpack.c.h.b16 %v745
    %v2898 = vunpack.c.l.b16 %v746
    %v2899 = vunpack.c.h.b16 %v746
    %v2900 = vunpack.c.l.b16 %v747
    %v2901 = vunpack.c.h.b16 %v747
    %v2902 = vunpack.c.l.b16 %v748
    %v2903 = vunpack.c.h.b16 %v748
    %v2904 = vunpack.c.l.b16 %v749
    %v2905 = vunpack.c.h.b16 %v749
    %v2906 = vunpack.c.l.b16 %v750
    %v2907 = vunpack.c.h.b16 %v750
    %v2908 = vunpack.c.l.b16 %v751
    %v2909 = vunpack.c.h.b16 %v751
    %v2910 = vunpack.c.l.b16 %v752
    %v2911 = vunpack.c.h.b16 %v752
    %v2912 = vunpack.c.l.b16 %v753
    %v2913 = vunpack.c.h.b16 %v753
    %v2914 = vunpack.c.l.b16 %v754
    %v2915 = vunpack.c.h.b16 %v754
    %v2916 = vunpack.c.l.b16 %v755
    %v2917 = vunpack.c.h.b16 %v755
    %v2918 = vunpack.c.l.b16 %v756
    %v2919 = vunpack.c.h.b16 %v756
    %v2920 = vunpack.c.l.b16 %v757
    %v2921 = vunpack.c.h.b16 %v757
    %v2922 = vunpack.c.l.b16 %v758
    %v2923 = vunpack.c.h.b16 %v758
    %v2924 = vunpack.c.l.b16 %v759
    %v2925 = vunpack.c.h.b16 %v759
    %v2926 = vunpack.c.l.b16 %v760
    %v2927 = vunpack.c.h.b16 %v760
    %v2928 = vunpack.c.l.b16 %v761
    %v2929 = vunpack.c.h.b16 %v761
    %v2930 = vunpack.c.l.b16 %v762
    %v2931 = vunpack.c.h.b16 %v762
    %v2932 = vunpack.c.l.b16 %v763
    %v2933 = vunpack.c.h.b16 %v763
    %v2934 = vunpack.c.l.b16 %v764
    %v2935 = vunpack.c.h.b16 %v764
    %v2936 = vunpack.c.l.b16 %v765
    %v2937 = vunpack.c.h.b16 %v765
    %v2938 = vunpack.c.l.b16 %v766
    %v2939 = vunpack.c.h.b16 %v766
    %v2940 = vunpack.c.l.b16 %v767
    %v2941 = vunpack.c.h.b16 %v767
    %v2942 = vunpack.c.l.b16 %v768
    %v2943 = vunpack.c.h.b16 %v768
    %v2944 = vunpack.c.l.b16 %v769
    %v2945 = vunpack.c.h.b16 %v769
    %v2946 = vunpack.c.l.b16 %v770
    %v2947 = vunpack.c.h.b16 %v770
    %v2948 = vunpack.c.l.b16 %v771
    %v2949 = vunpack.c.h.b16 %v771
    %v2950 = vunpack.c.l.b16 %v772
    %v2951 = vunpack.c.h.b16 %v772
    %v2952 = vunpack.c.l.b16 %v773
    %v2953 = vunpack.c.h.b16 %v773
    %v2954 = vunpack.c.l.b16 %v774
    %v2955 = vunpack.c.h.b16 %v774
    %v2956 = vunpack.c.l.b16 %v775
    %v2957 = vunpack.c.h.b16 %v775
    %v2958 = vunpack.c.l.b16 %v776
    %v2959 = vunpack.c.h.b16 %v776
    %v2960 = vunpack.c.l.b16 %v777
    %v2961 = vunpack.c.h.b16 %v777
    %v2962 = vunpack.c.l.b16 %v778
    %v2963 = vunpack.c.h.b16 %v778
    %v2964 = vunpack.c.l.b16 %v779
    %v2965 = vunpack.c.h.b16 %v779
    %v2966 = vunpack.c.l.b16 %v780
    %v2967 = vunpack.c.h.b16 %v780
    %v2968 = vunpack.c.l.b16 %v781
    %v2969 = vunpack.c.h.b16 %v781
    %v2970 = vunpack.c.l.b16 %v782
    %v2971 = vunpack.c.h.b16 %v782
    %v2972 = vunpack.c.l.b16 %v783
    %v2973 = vunpack.c.h.b16 %v783
    %v2974 = vunpack.c.l.b16 %v784
    %v2975 = vunpack.c.h.b16 %v784
    %v2976 = vunpack.c.l.b16 %v785
    %v2977 = vunpack.c.h.b16 %v785
    %v2978 = vunpack.c.l.b16 %v786
    %v2979 = vunpack.c.h.b16 %v786
    %v2980 = vunpack.c.l.b16 %v787
    %v2981 = vunpack.c.h.b16 %v787
    %v2982 = vunpack.c.l.b16 %v788
    %v2983 = vunpack.c.h.b16 %v788
    %v2984 = vunpack.c.l.b16 %v789
    %v2985 = vunpack.c.h.b16 %v789
    %v2986 = vunpack.c.l.b16 %v790
    %v2987 = vunpack.c.h.b16 %v790
    %v2988 = vunpack.c.l.b16 %v791
    %v2989 = vunpack.c.h.b16 %v791
    %v2990 = vunpack.c.l.b16 %v792
    %v2991 = vunpack.c.h.b16 %v792
    %v2992 = vunpack.c.l.b16 %v793
    %v2993 = vunpack.c.h.b16 %v793
    %v2994 = vunpack.c.l.b16 %v794
    %v2995 = vunpack.c.h.b16 %v794
    %v2996 = vunpack.c.l.b16 %v795
    %v2997 = vunpack.c.h.b16 %v795
    %v2998 = vunpack.c.l.b16 %v796
    %v2999 = vunpack.c.h.b16 %v796
    %v3000 = vunpack.c.l.b16 %v797
    %v3001 = vunpack.c.h.b16 %v797
    %v3002 = vunpack.c.l.b16 %v798
    %v3003 = vunpack.c.h.b16 %v798
    %v3004 = vunpack.c.l.b16 %v799
    %v3005 = vunpack.c.h.b16 %v799
    %v3006 = vunpack.c.l.b16 %v800
    %v3007 = vunpack.c.h.b16 %v800
    %v3008 = vunpack.c.l.b16 %v801
    %v3009 = vunpack.c.h.b16 %v801
    %v3010 = vunpack.c.l.b16 %v802
    %v3011 = vunpack.c.h.b16 %v802
    %v3012 = vunpack.c.l.b16 %v803
    %v3013 = vunpack.c.h.b16 %v803
    %v3014 = vunpack.c.l.b16 %v804
    %v3015 = vunpack.c.h.b16 %v804
    %v3016 = vunpack.c.l.b16 %v805
    %v3017 = vunpack.c.h.b16 %v805
    %v3018 = vunpack.c.l.b16 %v806
    %v3019 = vunpack.c.h.b16 %v806
    %v3020 = vunpack.c.l.b16 %v807
    %v3021 = vunpack.c.h.b16 %v807
    %v3022 = vunpack.c.l.b16 %v808
    %v3023 = vunpack.c.h.b16 %v808
    %v3024 = vunpack.c.l.b16 %v809
    %v3025 = vunpack.c.h.b16 %v809
    %v3026 = vunpack.c.l.b16 %v810
    %v3027 = vunpack.c.h.b16 %v810
    %v3028 = vunpack.c.l.b16 %v811
    %v3029 = vunpack.c.h.b16 %v811
    %v3030 = vunpack.c.l.b16 %v812
    %v3031 = vunpack.c.h.b16 %v812
    %v3032 = vunpack.c.l.b16 %v813
    %v3033 = vunpack.c.h.b16 %v813
    %v3034 = vunpack.c.l.b16 %v814
    %v3035 = vunpack.c.h.b16 %v814
    %v3036 = vunpack.c.l.b16 %v815
    %v3037 = vunpack.c.h.b16 %v815
    %v3038 = vunpack.c.l.b16 %v816
    %v3039 = vunpack.c.h.b16 %v816
    %v3040 = vunpack.c.l.b16 %v817
    %v3041 = vunpack.c.h.b16 %v817
    %v3042 = vunpack.c.l.b16 %v818
    %v3043 = vunpack.c.h.b16 %v818
    %v3044 = vunpack.c.l.b16 %v819
    %v3045 = vunpack.c.h.b16 %v819
    %v3046 = vunpack.c.l.b16 %v820
    %v3047 = vunpack.c.h.b16 %v820
    %v3048 = vunpack.c.l.b16 %v821
    %v3049 = vunpack.c.h.b16 %v821
    %v3050 = vunpack.c.l.b16 %v822
    %v3051 = vunpack.c.h.b16 %v822
    %v3052 = vunpack.c.l.b16 %v823
    %v3053 = vunpack.c.h.b16 %v823
    %v3054 = vunpack.c.l.b16 %v824
    %v3055 = vunpack.c.h.b16 %v824
    %v3056 = vunpack.c.l.b16 %v825
    %v3057 = vunpack.c.h.b16 %v825
    %v3058 = vunpack.c.l.b16 %v826
    %v3059 = vunpack.c.h.b16 %v826
    %v3060 = vunpack.c.l.b16 %v827
    %v3061 = vunpack.c.h.b16 %v827
    %v3062 = vunpack.c.l.b16 %v828
    %v3063 = vunpack.c.h.b16 %v828
    %v3064 = vunpack.c.l.b16 %v829
    %v3065 = vunpack.c.h.b16 %v829
    %v3066 = vunpack.c.l.b16 %v830
    %v3067 = vunpack.c.h.b16 %v830
    %v3068 = vunpack.c.l.b16 %v831
    %v3069 = vunpack.c.h.b16 %v831
    %v3070 = vunpack.c.l.b16 %v832
    %v3071 = vunpack.c.h.b16 %v832
    %v3072 = vunpack.c.l.b16 %v833
    %v3073 = vunpack.c.h.b16 %v833
    %v3074 = vunpack.c.l.b16 %v834
    %v3075 = vunpack.c.h.b16 %v834
    %v3076 = vunpack.c.l.b16 %v835
    %v3077 = vunpack.c.h.b16 %v835
    %v3078 = vunpack.c.l.b16 %v836
    %v3079 = vunpack.c.h.b16 %v836
    %v3080 = vunpack.c.l.b16 %v837
    %v3081 = vunpack.c.h.b16 %v837
    %v3082 = vunpack.c.l.b16 %v838
    %v3083 = vunpack.c.h.b16 %v838
    %v3084 = vunpack.c.l.b16 %v839
    %v3085 = vunpack.c.h.b16 %v839
    %v3086 = vunpack.c.l.b16 %v840
    %v3087 = vunpack.c.h.b16 %v840
    %v3088 = vunpack.c.l.b16 %v841
    %v3089 = vunpack.c.h.b16 %v841
    %v3090 = vunpack.c.l.b16 %v842
    %v3091 = vunpack.c.h.b16 %v842
    %v3092 = vunpack.c.l.b16 %v843
    %v3093 = vunpack.c.h.b16 %v843
    %v3094 = vunpack.c.l.b16 %v844
    %v3095 = vunpack.c.h.b16 %v844
    %v3096 = vunpack.c.l.b16 %v845
    %v3097 = vunpack.c.h.b16 %v845
    %v3098 = vunpack.c.l.b16 %v846
    %v3099 = vunpack.c.h.b16 %v846
    %v3100 = vunpack.c.l.b16 %v847
    %v3101 = vunpack.c.h.b16 %v847
    %v3102 = vunpack.c.l.b16 %v848
    %v3103 = vunpack.c.h.b16 %v848
    %v3104 = vunpack.c.l.b16 %v849
    %v3105 = vunpack.c.h.b16 %v849
    %v3106 = vunpack.c.l.b16 %v850
    %v3107 = vunpack.c.h.b16 %v850
    %v3108 = vunpack.c.l.b16 %v851
    %v3109 = vunpack.c.h.b16 %v851
    %v3110 = vunpack.c.l.b16 %v852
    %v3111 = vunpack.c.h.b16 %v852
    %v3112 = vunpack.c.l.b16 %v853
    %v3113 = vunpack.c.h.b16 %v853
    %v3114 = vunpack.c.l.b16 %v854
    %v3115 = vunpack.c.h.b16 %v854
    %v3116 = vunpack.c.l.b16 %v855
    %v3117 = vunpack.c.h.b16 %v855
    %v3118 = vunpack.c.l.b16 %v856
    %v3119 = vunpack.c.h.b16 %v856
    %v3120 = vunpack.c.l.b16 %v857
    %v3121 = vunpack.c.h.b16 %v857
    %v3122 = vunpack.c.l.b16 %v858
    %v3123 = vunpack.c.h.b16 %v858
    %v3124 = vunpack.c.l.b16 %v859
    %v3125 = vunpack.c.h.b16 %v859
    %v3126 = vunpack.c.l.b16 %v860
    %v3127 = vunpack.c.h.b16 %v860
    %v3128 = vunpack.c.l.b16 %v861
    %v3129 = vunpack.c.h.b16 %v861
    %v3130 = vunpack.c.l.b16 %v862
    %v3131 = vunpack.c.h.b16 %v862
    %v3132 = vunpack.c.l.b16 %v863
    %v3133 = vunpack.c.h.b16 %v863
    %v3134 = vunpack.c.l.b16 %v864
    %v3135 = vunpack.c.h.b16 %v864
    %v3136 = vunpack.c.l.b16 %v865
    %v3137 = vunpack.c.h.b16 %v865
    %v3138 = vunpack.c.l.b16 %v866
    %v3139 = vunpack.c.h.b16 %v866
    %v3140 = vunpack.c.l.b16 %v867
    %v3141 = vunpack.c.h.b16 %v867
    %v3142 = vunpack.c.l.b16 %v868
    %v3143 = vunpack.c.h.b16 %v868
    %v3144 = vunpack.c.l.b16 %v869
    %v3145 = vunpack.c.h.b16 %v869
    %v3146 = vunpack.c.l.b16 %v870
    %v3147 = vunpack.c.h.b16 %v870
    %v3148 = vunpack.c.l.b16 %v871
    %v3149 = vunpack.c.h.b16 %v871
    %v3150 = vunpack.c.l.b16 %v872
    %v3151 = vunpack.c.h.b16 %v872
    %v3152 = vunpack.c.l.b16 %v873
    %v3153 = vunpack.c.h.b16 %v873
    %v3154 = vunpack.c.l.b16 %v874
    %v3155 = vunpack.c.h.b16 %v874
    %v3156 = vunpack.c.l.b16 %v875
    %v3157 = vunpack.c.h.b16 %v875
    %v3158 = vunpack.c.l.b16 %v876
    %v3159 = vunpack.c.h.b16 %v876
    %v3160 = vunpack.c.l.b16 %v877
    %v3161 = vunpack.c.h.b16 %v877
    %v3162 = vunpack.c.l.b16 %v878
    %v3163 = vunpack.c.h.b16 %v878
    %v3164 = vunpack.c.l.b16 %v879
    %v3165 = vunpack.c.h.b16 %v879
    %v3166 = vunpack.c.l.b16 %v880
    %v3167 = vunpack.c.h.b16 %v880
    %v3168 = vunpack.c.l.b16 %v881
    %v3169 = vunpack.c.h.b16 %v881
    %v3170 = vunpack.c.l.b16 %v882
    %v3171 = vunpack.c.h.b16 %v882
    %v3172 = vunpack.c.l.b16 %v883
    %v3173 = vunpack.c.h.b16 %v883
    %v3174 = vunpack.c.l.b16 %v884
    %v3175 = vunpack.c.h.b16 %v884
    %v3176 = vunpack.c.l.b16 %v885
    %v3177 = vunpack.c.h.b16 %v885
    %v3178 = vunpack.c.l.b16 %v886
    %v3179 = vunpack.c.h.b16 %v886
    %v3180 = vunpack.c.l.b16 %v887
    %v3181 = vunpack.c.h.b16 %v887
    %v3182 = vunpack.c.l.b16 %v888
    %v3183 = vunpack.c.h.b16 %v888
    %v3184 = vunpack.c.l.b16 %v889
    %v3185 = vunpack.c.h.b16 %v889
    %v3186 = vunpack.c.l.b16 %v890
    %v3187 = vunpack.c.h.b16 %v890
    %v3188 = vunpack.c.l.b16 %v891
    %v3189 = vunpack.c.h.b16 %v891
    %v3190 = vunpack.c.l.b16 %v892
    %v3191 = vunpack.c.h.b16 %v892
    %v3192 = vunpack.c.l.b16 %v893
    %v3193 = vunpack.c.h.b16 %v893
    %v3194 = vunpack.c.l.b16 %v894
    %v3195 = vunpack.c.h.b16 %v894
    %v3196 = vunpack.c.l.b16 %v895
    %v3197 = vunpack.c.h.b16 %v895
    %v3198 = vunpack.c.l.b16 %v896
    %v3199 = vunpack.c.h.b16 %v896
    %v3200 = vunpack.c.l.b16 %v897
    %v3201 = vunpack.c.h.b16 %v897
    %v3202 = vunpack.c.l.b16 %v898
    %v3203 = vunpack.c.h.b16 %v898
    %v3204 = vunpack.c.l.b16 %v899
    %v3205 = vunpack.c.h.b16 %v899
    %v3206 = vunpack.c.l.b16 %v900
    %v3207 = vunpack.c.h.b16 %v900
    %v3208 = vunpack.c.l.b16 %v901
    %v3209 = vunpack.c.h.b16 %v901
    %v3210 = vunpack.c.l.b16 %v902
    %v3211 = vunpack.c.h.b16 %v902
    %v3212 = vunpack.c.l.b16 %v903
    %v3213 = vunpack.c.h.b16 %v903
    %v3214 = vunpack.c.l.b16 %v904
    %v3215 = vunpack.c.h.b16 %v904
    %v3216 = vunpack.c.l.b16 %v905
    %v3217 = vunpack.c.h.b16 %v905
    %v3218 = vunpack.c.l.b16 %v906
    %v3219 = vunpack.c.h.b16 %v906
    %v3220 = vunpack.c.l.b16 %v907
    %v3221 = vunpack.c.h.b16 %v907
    %v3222 = vunpack.c.l.b16 %v908
    %v3223 = vunpack.c.h.b16 %v908
    %v3224 = vunpack.c.l.b16 %v909
    %v3225 = vunpack.c.h.b16 %v909
    %v3226 = vunpack.c.l.b16 %v910
    %v3227 = vunpack.c.h.b16 %v910
    %v3228 = vunpack.c.l.b16 %v911
    %v3229 = vunpack.c.h.b16 %v911
    %v3230 = vunpack.c.l.b16 %v912
    %v3231 = vunpack.c.h.b16 %v912
    %v3232 = vunpack.c.l.b16 %v913
    %v3233 = vunpack.c.h.b16 %v913
    %v3234 = vunpack.c.l.b16 %v914
    %v3235 = vunpack.c.h.b16 %v914
    %v3236 = vunpack.c.l.b16 %v915
    %v3237 = vunpack.c.h.b16 %v915
    %v3238 = vunpack.c.l.b16 %v916
    %v3239 = vunpack.c.h.b16 %v916
    %v3240 = vunpack.c.l.b16 %v917
    %v3241 = vunpack.c.h.b16 %v917
    %v3242 = vunpack.c.l.b16 %v918
    %v3243 = vunpack.c.h.b16 %v918
    %v3244 = vunpack.c.l.b16 %v919
    %v3245 = vunpack.c.h.b16 %v919
    %v3246 = vpack.c.b16 %v1714, %v1710
    %v3247 = vpack.c.b16 %v1715, %v1711
    %v3248 = vpack.c.b16 %v1716, %v1712
    %v3249 = vpack.c.b16 %v1717, %v1713
    %v3250 = vpack.c.b16 %v1722, %v1718
    %v3251 = vpack.c.b16 %v1723, %v1719
    %v3252 = vpack.c.b16 %v1724, %v1720
    %v3253 = vpack.c.b16 %v1725, %v1721
    %v3254 = vpack.c.b16 %v1730, %v1726
    %v3255 = vpack.c.b16 %v1731, %v1727
    %v3256 = vpack.c.b16 %v1732, %v1728
    %v3257 = vpack.c.b16 %v1733, %v1729
    %v3258 = vpack.c.b16 %v1738, %v1734
    %v3259 = vpack.c.b16 %v1739, %v1735
    %v3260 = vpack.c.b16 %v1740, %v1736
    %v3261 = vpack.c.b16 %v1741, %v1737
    %v3262 = vpack.c.b16 %v1746, %v1742
    %v3263 = vpack.c.b16 %v1747, %v1743
    %v3264 = vpack.c.b16 %v1748, %v1744
    %v3265 = vpack.c.b16 %v1749, %v1745
    %v3266 = vpack.c.b16 %v1754, %v1750
    %v3267 = vpack.c.b16 %v1755, %v1751
    %v3268 = vpack.c.b16 %v1756, %v1752
    %v3269 = vpack.c.b16 %v1757, %v1753
    %v3270 = vpack.c.b16 %v1762, %v1758
    %v3271 = vpack.c.b16 %v1763, %v1759
    %v3272 = vpack.c.b16 %v1764, %v1760
    %v3273 = vpack.c.b16 %v1765, %v1761
    %v3274 = vpack.c.b16 %v1770, %v1766
    %v3275 = vpack.c.b16 %v1771, %v1767
    %v3276 = vpack.c.b16 %v1772, %v1768
    %v3277 = vpack.c.b16 %v1773, %v1769
    %v3278 = vpack.c.b16 %v1778, %v1774
    %v3279 = vpack.c.b16 %v1779, %v1775
    %v3280 = vpack.c.b16 %v1780, %v1776
    %v3281 = vpack.c.b16 %v1781, %v1777
    %v3282 = vpack.c.b16 %v1786, %v1782
    %v3283 = vpack.c.b16 %v1787, %v1783
    %v3284 = vpack.c.b16 %v1788, %v1784
    %v3285 = vpack.c.b16 %v1789, %v1785
    %v3286 = vpack.c.b16 %v1794, %v1790
    %v3287 = vpack.c.b16 %v1795, %v1791
    %v3288 = vpack.c.b16 %v1796, %v1792
    %v3289 = vpack.c.b16 %v1797, %v1793
    %v3290 = vpack.c.b16 %v1802, %v1798
    %v3291 = vpack.c.b16 %v1803, %v1799
    %v3292 = vpack.c.b16 %v1804, %v1800
    %v3293 = vpack.c.b16 %v1805, %v1801
    %v3294 = vpack.c.b16 %v1810, %v1806
    %v3295 = vpack.c.b16 %v1811, %v1807
    %v3296 = vpack.c.b16 %v1812, %v1808
    %v3297 = vpack.c.b16 %v1813, %v1809
    %v3298 = vpack.c.b16 %v1818, %v1814
    %v3299 = vpack.c.b16 %v1819, %v1815
    %v3300 = vpack.c.b16 %v1820, %v1816
    %v3301 = vpack.c.b16 %v1821, %v1817
    %v3302 = vpack.c.b16 %v1826, %v1822
    %v3303 = vpack.c.b16 %v1827, %v1823
    %v3304 = vpack.c.b16 %v1828, %v1824
    %v3305 = vpack.c.b16 %v1829, %v1825
    %v3306 = vpack.c.b16 %v1834, %v1830
    %v3307 = vpack.c.b16 %v1835, %v1831
    %v3308 = vpack.c.b16 %v1836, %v1832
    %v3309 = vpack.c.b16 %v1837, %v1833
    %v3310 = vpack.c.b16 %v1842, %v1838
    %v3311 = vpack.c.b16 %v1843, %v1839
    %v3312 = vpack.c.b16 %v1844, %v1840
    %v3313 = vpack.c.b16 %v1845, %v1841
    %v3314 = vpack.c.b16 %v1850, %v1846
    %v3315 = vpack.c.b16 %v1851, %v1847
    %v3316 = vpack.c.b16 %v1852, %v1848
    %v3317 = vpack.c.b16 %v1853, %v1849
    %v3318 = vpack.c.b16 %v1858, %v1854
    %v3319 = vpack.c.b16 %v1859, %v1855
    %v3320 = vpack.c.b16 %v1860, %v1856
    %v3321 = vpack.c.b16 %v1861, %v1857
    %v3322 = vpack.c.b16 %v1866, %v1862
    %v3323 = vpack.c.b16 %v1867, %v1863
    %v3324 = vpack.c.b16 %v1868, %v1864
    %v3325 = vpack.c.b16 %v1869, %v1865
    %v3326 = vpack.c.b16 %v1874, %v1870
    %v3327 = vpack.c.b16 %v1875, %v1871
    %v3328 = vpack.c.b16 %v1876, %v1872
    %v3329 = vpack.c.b16 %v1877, %v1873
    %v3330 = vpack.c.b16 %v1882, %v1878
    %v3331 = vpack.c.b16 %v1883, %v1879
    %v3332 = vpack.c.b16 %v1884, %v1880
    %v3333 = vpack.c.b16 %v1885, %v1881
    %v3334 = vpack.c.b16 %v1890, %v1886
    %v3335 = vpack.c.b16 %v1891, %v1887
    %v3336 = vpack.c.b16 %v1892, %v1888
    %v3337 = vpack.c.b16 %v1893, %v1889
    %v3338 = vpack.c.b16 %v1898, %v1894
    %v3339 = vpack.c.b16 %v1899, %v1895
    %v3340 = vpack.c.b16 %v1900, %v1896
    %v3341 = vpack.c.b16 %v1901, %v1897
    %v3342 = vpack.c.b16 %v1906, %v1902
    %v3343 = vpack.c.b16 %v1907, %v1903
    %v3344 = vpack.c.b16 %v1908, %v1904
    %v3345 = vpack.c.b16 %v1909, %v1905
    %v3346 = vpack.c.b16 %v1914, %v1910
    %v3347 = vpack.c.b16 %v1915, %v1911
    %v3348 = vpack.c.b16 %v1916, %v1912
    %v3349 = vpack.c.b16 %v1917, %v1913
    %v3350 = vpack.c.b16 %v1922, %v1918
    %v3351 = vpack.c.b16 %v1923, %v1919
    %v3352 = vpack.c.b16 %v1924, %v1920
    %v3353 = vpack.c.b16 %v1925, %v1921
    %v3354 = vpack.c.b16 %v1930, %v1926
    %v3355 = vpack.c.b16 %v1931, %v1927
    %v3356 = vpack.c.b16 %v1932, %v1928
    %v3357 = vpack.c.b16 %v1933, %v1929
    %v3358 = vpack.c.b16 %v1938, %v1934
    %v3359 = vpack.c.b16 %v1939, %v1935
    %v3360 = vpack.c.b16 %v1940, %v1936
    %v3361 = vpack.c.b16 %v1941, %v1937
    %v3362 = vpack.c.b16 %v1946, %v1942
    %v3363 = vpack.c.b16 %v1947, %v1943
    %v3364 = vpack.c.b16 %v1948, %v1944
    %v3365 = vpack.c.b16 %v1949, %v1945
    %v3366 = vpack.c.b16 %v1954, %v1950
    %v3367 = vpack.c.b16 %v1955, %v1951
    %v3368 = vpack.c.b16 %v1956, %v1952
    %v3369 = vpack.c.b16 %v1957, %v1953
    %v3370 = vpack.c.b16 %v1962, %v1958
    %v3371 = vpack.c.b16 %v1963, %v1959
    %v3372 = vpack.c.b16 %v1964, %v1960
    %v3373 = vpack.c.b16 %v1965, %v1961
    %v3374 = vpack.c.b16 %v1970, %v1966
    %v3375 = vpack.c.b16 %v1971, %v1967
    %v3376 = vpack.c.b16 %v1972, %v1968
    %v3377 = vpack.c.b16 %v1973, %v1969
    %v3378 = vpack.c.b16 %v1978, %v1974
    %v3379 = vpack.c.b16 %v1979, %v1975
    %v3380 = vpack.c.b16 %v1980, %v1976
    %v3381 = vpack.c.b16 %v1981, %v1977
    %v3382 = vpack.c.b16 %v1986, %v1982
    %v3383 = vpack.c.b16 %v1987, %v1983
    %v3384 = vpack.c.b16 %v1988, %v1984
    %v3385 = vpack.c.b16 %v1989, %v1985
    %v3386 = vpack.c.b16 %v1994, %v1990
    %v3387 = vpack.c.b16 %v1995, %v1991
    %v3388 = vpack.c.b16 %v1996, %v1992
    %v3389 = vpack.c.b16 %v1997, %v1993
    %v3390 = vpack.c.b16 %v2002, %v1998
    %v3391 = vpack.c.b16 %v2003, %v1999
    %v3392 = vpack.c.b16 %v2004, %v2000
    %v3393 = vpack.c.b16 %v2005, %v2001
    %v3394 = vpack.c.b16 %v2010, %v2006
    %v3395 = vpack.c.b16 %v2011, %v2007
    %v3396 = vpack.c.b16 %v2012, %v2008
    %v3397 = vpack.c.b16 %v2013, %v2009
    %v3398 = vpack.c.b16 %v2018, %v2014
    %v3399 = vpack.c.b16 %v2019, %v2015
    %v3400 = vpack.c.b16 %v2020, %v2016
    %v3401 = vpack.c.b16 %v2021, %v2017
    %v3402 = vpack.c.b16 %v2026, %v2022
    %v3403 = vpack.c.b16 %v2027, %v2023
    %v3404 = vpack.c.b16 %v2028, %v2024
    %v3405 = vpack.c.b16 %v2029, %v2025
    %v3406 = vpack.c.b16 %v2034, %v2030
    %v3407 = vpack.c.b16 %v2035, %v2031
    %v3408 = vpack.c.b16 %v2036, %v2032
    %v3409 = vpack.c.b16 %v2037, %v2033
    %v3410 = vpack.c.b16 %v2042, %v2038
    %v3411 = vpack.c.b16 %v2043, %v2039
    %v3412 = vpack.c.b16 %v2044, %v2040
    %v3413 = vpack.c.b16 %v2045, %v2041
    %v3414 = vpack.c.b16 %v2050, %v2046
    %v3415 = vpack.c.b16 %v2051, %v2047
    %v3416 = vpack.c.b16 %v2052, %v2048
    %v3417 = vpack.c.b16 %v2053, %v2049
    %v3418 = vpack.c.b16 %v2058, %v2054
    %v3419 = vpack.c.b16 %v2059, %v2055
    %v3420 = vpack.c.b16 %v2060, %v2056
    %v3421 = vpack.c.b16 %v2061, %v2057
    %v3422 = vpack.c.b16 %v2066, %v2062
    %v3423 = vpack.c.b16 %v2067, %v2063
    %v3424 = vpack.c.b16 %v2068, %v2064
    %v3425 = vpack.c.b16 %v2069, %v2065
    %v3426 = vpack.c.b16 %v2074, %v2070
    %v3427 = vpack.c.b16 %v2075, %v2071
    %v3428 = vpack.c.b16 %v2076, %v2072
    %v3429 = vpack.c.b16 %v2077, %v2073
    %v3430 = vpack.c.b16 %v2082, %v2078
    %v3431 = vpack.c.b16 %v2083, %v2079
    %v3432 = vpack.c.b16 %v2084, %v2080
    %v3433 = vpack.c.b16 %v2085, %v2081
    %v3434 = vpack.c.b16 %v2090, %v2086
    %v3435 = vpack.c.b16 %v2091, %v2087
    %v3436 = vpack.c.b16 %v2092, %v2088
    %v3437 = vpack.c.b16 %v2093, %v2089
    %v3438 = vpack.c.b16 %v2098, %v2094
    %v3439 = vpack.c.b16 %v2099, %v2095
    %v3440 = vpack.c.b16 %v2100, %v2096
    %v3441 = vpack.c.b16 %v2101, %v2097
    %v3442 = vpack.c.b16 %v2106, %v2102
    %v3443 = vpack.c.b16 %v2107, %v2103
    %v3444 = vpack.c.b16 %v2108, %v2104
    %v3445 = vpack.c.b16 %v2109, %v2105
    %v3446 = vpack.c.b16 %v2114, %v2110
    %v3447 = vpack.c.b16 %v2115, %v2111
    %v3448 = vpack.c.b16 %v2116, %v2112
    %v3449 = vpack.c.b16 %v2117, %v2113
    %v3450 = vpack.c.b16 %v2122, %v2118
    %v3451 = vpack.c.b16 %v2123, %v2119
    %v3452 = vpack.c.b16 %v2124, %v2120
    %v3453 = vpack.c.b16 %v2125, %v2121
    %v3454 = vpack.c.b16 %v2130, %v2126
    %v3455 = vpack.c.b16 %v2131, %v2127
    %v3456 = vpack.c.b16 %v2132, %v2128
    %v3457 = vpack.c.b16 %v2133, %v2129
    %v3458 = vpack.c.b16 %v2138, %v2134
    %v3459 = vpack.c.b16 %v2139, %v2135
    %v3460 = vpack.c.b16 %v2140, %v2136
    %v3461 = vpack.c.b16 %v2141, %v2137
    %v3462 = vpack.c.b16 %v2146, %v2142
    %v3463 = vpack.c.b16 %v2147, %v2143
    %v3464 = vpack.c.b16 %v2148, %v2144
    %v3465 = vpack.c.b16 %v2149, %v2145
    %v3466 = vpack.c.b16 %v2154, %v2150
    %v3467 = vpack.c.b16 %v2155, %v2151
    %v3468 = vpack.c.b16 %v2156, %v2152
    %v3469 = vpack.c.b16 %v2157, %v2153
    %v3470 = vpack.c.b16 %v2162, %v2158
    %v3471 = vpack.c.b16 %v2163, %v2159
    %v3472 = vpack.c.b16 %v2164, %v2160
    %v3473 = vpack.c.b16 %v2165, %v2161
    %v3474 = vpack.c.b16 %v2170, %v2166
    %v3475 = vpack.c.b16 %v2171, %v2167
    %v3476 = vpack.c.b16 %v2172, %v2168
    %v3477 = vpack.c.b16 %v2173, %v2169
    %v3478 = vpack.c.b16 %v2178, %v2174
    %v3479 = vpack.c.b16 %v2179, %v2175
    %v3480 = vpack.c.b16 %v2180, %v2176
    %v3481 = vpack.c.b16 %v2181, %v2177
    %v3482 = vpack.c.b16 %v2186, %v2182
    %v3483 = vpack.c.b16 %v2187, %v2183
    %v3484 = vpack.c.b16 %v2188, %v2184
    %v3485 = vpack.c.b16 %v2189, %v2185
    %v3486 = vpack.c.b16 %v2194, %v2190
    %v3487 = vpack.c.b16 %v2195, %v2191
    %v3488 = vpack.c.b16 %v2196, %v2192
    %v3489 = vpack.c.b16 %v2197, %v2193
    %v3490 = vpack.c.b16 %v2202, %v2198
    %v3491 = vpack.c.b16 %v2203, %v2199
    %v3492 = vpack.c.b16 %v2204, %v2200
    %v3493 = vpack.c.b16 %v2205, %v2201
    %v3494 = vpack.c.b16 %v2210, %v2206
    %v3495 = vpack.c.b16 %v2211, %v2207
    %v3496 = vpack.c.b16 %v2212, %v2208
    %v3497 = vpack.c.b16 %v2213, %v2209
    %v3498 = vpack.c.b16 %v2218, %v2214
    %v3499 = vpack.c.b16 %v2219, %v2215
    %v3500 = vpack.c.b16 %v2220, %v2216
    %v3501 = vpack.c.b16 %v2221, %v2217
    %v3502 = vpack.c.b16 %v2226, %v2222
    %v3503 = vpack.c.b16 %v2227, %v2223
    %v3504 = vpack.c.b16 %v2228, %v2224
    %v3505 = vpack.c.b16 %v2229, %v2225
    %v3506 = vpack.c.b16 %v2234, %v2230
    %v3507 = vpack.c.b16 %v2235, %v2231
    %v3508 = vpack.c.b16 %v2236, %v2232
    %v3509 = vpack.c.b16 %v2237, %v2233
    %v3510 = vpack.c.b16 %v2242, %v2238
    %v3511 = vpack.c.b16 %v2243, %v2239
    %v3512 = vpack.c.b16 %v2244, %v2240
    %v3513 = vpack.c.b16 %v2245, %v2241
    %v3514 = vpack.c.b16 %v2250, %v2246
    %v3515 = vpack.c.b16 %v2251, %v2247
    %v3516 = vpack.c.b16 %v2252, %v2248
    %v3517 = vpack.c.b16 %v2253, %v2249
    %v3518 = vpack.c.b16 %v2258, %v2254
    %v3519 = vpack.c.b16 %v2259, %v2255
    %v3520 = vpack.c.b16 %v2260, %v2256
    %v3521 = vpack.c.b16 %v2261, %v2257
    %v3522 = vpack.c.b16 %v2266, %v2262
    %v3523 = vpack.c.b16 %v2267, %v2263
    %v3524 = vpack.c.b16 %v2268, %v2264
    %v3525 = vpack.c.b16 %v2269, %v2265
    %v3526 = vpack.c.b16 %v2274, %v2270
    %v3527 = vpack.c.b16 %v2275, %v2271
    %v3528 = vpack.c.b16 %v2276, %v2272
    %v3529 = vpack.c.b16 %v2277, %v2273
    %v3530 = vpack.c.b16 %v2282, %v2278
    %v3531 = vpack.c.b16 %v2283, %v2279
    %v3532 = vpack.c.b16 %v2284, %v2280
    %v3533 = vpack.c.b16 %v2285, %v2281
    %v3534 = vpack.c.b16 %v2290, %v2286
    %v3535 = vpack.c.b16 %v2291, %v2287
    %v3536 = vpack.c.b16 %v2292, %v2288
    %v3537 = vpack.c.b16 %v2293, %v2289
    %v3538 = vpack.c.b16 %v2298, %v2294
    %v3539 = vpack.c.b16 %v2299, %v2295
    %v3540 = vpack.c.b16 %v2300, %v2296
    %v3541 = vpack.c.b16 %v2301, %v2297
    %v3542 = vpack.c.b16 %v2306, %v2302
    %v3543 = vpack.c.b16 %v2307, %v2303
    %v3544 = vpack.c.b16 %v2308, %v2304
    %v3545 = vpack.c.b16 %v2309, %v2305
    %v3546 = vpack.c.b16 %v2314, %v2310
    %v3547 = vpack.c.b16 %v2315, %v2311
    %v3548 = vpack.c.b16 %v2316, %v2312
    %v3549 = vpack.c.b16 %v2317, %v2313
    %v3550 = vpack.c.b16 %v2322, %v2318
    %v3551 = vpack.c.b16 %v2323, %v2319
    %v3552 = vpack.c.b16 %v2324, %v2320
    %v3553 = vpack.c.b16 %v2325, %v2321
    %v3554 = vpack.c.b16 %v2330, %v2326
    %v3555 = vpack.c.b16 %v2331, %v2327
    %v3556 = vpack.c.b16 %v2332, %v2328
    %v3557 = vpack.c.b16 %v2333, %v2329
    %v3558 = vpack.c.b16 %v2338, %v2334
    %v3559 = vpack.c.b16 %v2339, %v2335
    %v3560 = vpack.c.b16 %v2340, %v2336
    %v3561 = vpack.c.b16 %v2341, %v2337
    %v3562 = vpack.c.b16 %v2346, %v2342
    %v3563 = vpack.c.b16 %v2347, %v2343
    %v3564 = vpack.c.b16 %v2348, %v2344
    %v3565 = vpack.c.b16 %v2349, %v2345
    %v3566 = vpack.c.b16 %v2354, %v2350
    %v3567 = vpack.c.b16 %v2355, %v2351
    %v3568 = vpack.c.b16 %v2356, %v2352
    %v3569 = vpack.c.b16 %v2357, %v2353
    %v3570 = vpack.c.b16 %v2362, %v2358
    %v3571 = vpack.c.b16 %v2363, %v2359
    %v3572 = vpack.c.b16 %v2364, %v2360
    %v3573 = vpack.c.b16 %v2365, %v2361
    %v3574 = vpack.c.b16 %v2370, %v2366
    %v3575 = vpack.c.b16 %v2371, %v2367
    %v3576 = vpack.c.b16 %v2372, %v2368
    %v3577 = vpack.c.b16 %v2373, %v2369
    %v3578 = vpack.c.b16 %v2378, %v2374
    %v3579 = vpack.c.b16 %v2379, %v2375
    %v3580 = vpack.c.b16 %v2380, %v2376
    %v3581 = vpack.c.b16 %v2381, %v2377
    %v3582 = vpack.c.b16 %v2386, %v2382
    %v3583 = vpack.c.b16 %v2387, %v2383
    %v3584 = vpack.c.b16 %v2388, %v2384
    %v3585 = vpack.c.b16 %v2389, %v2385
    %v3586 = vpack.c.b16 %v2394, %v2390
    %v3587 = vpack.c.b16 %v2395, %v2391
    %v3588 = vpack.c.b16 %v2396, %v2392
    %v3589 = vpack.c.b16 %v2397, %v2393
    %v3590 = vpack.c.b16 %v2402, %v2398
    %v3591 = vpack.c.b16 %v2403, %v2399
    %v3592 = vpack.c.b16 %v2404, %v2400
    %v3593 = vpack.c.b16 %v2405, %v2401
    %v3594 = vpack.c.b16 %v2410, %v2406
    %v3595 = vpack.c.b16 %v2411, %v2407
    %v3596 = vpack.c.b16 %v2412, %v2408
    %v3597 = vpack.c.b16 %v2413, %v2409
    %v3598 = vpack.c.b16 %v2418, %v2414
    %v3599 = vpack.c.b16 %v2419, %v2415
    %v3600 = vpack.c.b16 %v2420, %v2416
    %v3601 = vpack.c.b16 %v2421, %v2417
    %v3602 = vpack.c.b16 %v2426, %v2422
    %v3603 = vpack.c.b16 %v2427, %v2423
    %v3604 = vpack.c.b16 %v2428, %v2424
    %v3605 = vpack.c.b16 %v2429, %v2425
    %v3606 = vpack.c.b16 %v2434, %v2430
    %v3607 = vpack.c.b16 %v2435, %v2431
    %v3608 = vpack.c.b16 %v2436, %v2432
    %v3609 = vpack.c.b16 %v2437, %v2433
    %v3610 = vpack.c.b16 %v2442, %v2438
    %v3611 = vpack.c.b16 %v2443, %v2439
    %v3612 = vpack.c.b16 %v2444, %v2440
    %v3613 = vpack.c.b16 %v2445, %v2441
    %v3614 = vpack.c.b16 %v2450, %v2446
    %v3615 = vpack.c.b16 %v2451, %v2447
    %v3616 = vpack.c.b16 %v2452, %v2448
    %v3617 = vpack.c.b16 %v2453, %v2449
    %v3618 = vpack.c.b16 %v2458, %v2454
    %v3619 = vpack.c.b16 %v2459, %v2455
    %v3620 = vpack.c.b16 %v2460, %v2456
    %v3621 = vpack.c.b16 %v2461, %v2457
    %v3622 = vpack.c.b16 %v2466, %v2462
    %v3623 = vpack.c.b16 %v2467, %v2463
    %v3624 = vpack.c.b16 %v2468, %v2464
    %v3625 = vpack.c.b16 %v2469, %v2465
    %v3626 = vpack.c.b16 %v2474, %v2470
    %v3627 = vpack.c.b16 %v2475, %v2471
    %v3628 = vpack.c.b16 %v2476, %v2472
    %v3629 = vpack.c.b16 %v2477, %v2473
    %v3630 = vpack.c.b16 %v2482, %v2478
    %v3631 = vpack.c.b16 %v2483, %v2479
    %v3632 = vpack.c.b16 %v2484, %v2480
    %v3633 = vpack.c.b16 %v2485, %v2481
    %v3634 = vpack.c.b16 %v2490, %v2486
    %v3635 = vpack.c.b16 %v2491, %v2487
    %v3636 = vpack.c.b16 %v2492, %v2488
    %v3637 = vpack.c.b16 %v2493, %v2489
    %v3638 = vpack.c.b16 %v2498, %v2494
    %v3639 = vpack.c.b16 %v2499, %v2495
    %v3640 = vpack.c.b16 %v2500, %v2496
    %v3641 = vpack.c.b16 %v2501, %v2497
    %v3642 = vpack.c.b16 %v2506, %v2502
    %v3643 = vpack.c.b16 %v2507, %v2503
    %v3644 = vpack.c.b16 %v2508, %v2504
    %v3645 = vpack.c.b16 %v2509, %v2505
    %v3646 = vpack.c.b16 %v2514, %v2510
    %v3647 = vpack.c.b16 %v2515, %v2511
    %v3648 = vpack.c.b16 %v2516, %v2512
    %v3649 = vpack.c.b16 %v2517, %v2513
    %v3650 = vpack.c.b16 %v2522, %v2518
    %v3651 = vpack.c.b16 %v2523, %v2519
    %v3652 = vpack.c.b16 %v2524, %v2520
    %v3653 = vpack.c.b16 %v2525, %v2521
    %v3654 = vpack.c.b16 %v2530, %v2526
    %v3655 = vpack.c.b16 %v2531, %v2527
    %v3656 = vpack.c.b16 %v2532, %v2528
    %v3657 = vpack.c.b16 %v2533, %v2529
    %v3658 = vpack.c.b16 %v2538, %v2534
    %v3659 = vpack.c.b16 %v2539, %v2535
    %v3660 = vpack.c.b16 %v2540, %v2536
    %v3661 = vpack.c.b16 %v2541, %v2537
    %v3662 = vpack.c.b16 %v2546, %v2542
    %v3663 = vpack.c.b16 %v2547, %v2543
    %v3664 = vpack.c.b16 %v2548, %v2544
    %v3665 = vpack.c.b16 %v2549, %v2545
    %v3666 = vpack.c.b16 %v2554, %v2550
    %v3667 = vpack.c.b16 %v2555, %v2551
    %v3668 = vpack.c.b16 %v2556, %v2552
    %v3669 = vpack.c.b16 %v2557, %v2553
    %v3670 = vpack.c.b16 %v2562, %v2558
    %v3671 = vpack.c.b16 %v2563, %v2559
    %v3672 = vpack.c.b16 %v2564, %v2560
    %v3673 = vpack.c.b16 %v2565, %v2561
    %v3674 = vpack.c.b16 %v2570, %v2566
    %v3675 = vpack.c.b16 %v2571, %v2567
    %v3676 = vpack.c.b16 %v2572, %v2568
    %v3677 = vpack.c.b16 %v2573, %v2569
    %v3678 = vpack.c.b16 %v2578, %v2574
    %v3679 = vpack.c.b16 %v2579, %v2575
    %v3680 = vpack.c.b16 %v2580, %v2576
    %v3681 = vpack.c.b16 %v2581, %v2577
    %v3682 = vpack.c.b16 %v2586, %v2582
    %v3683 = vpack.c.b16 %v2587, %v2583
    %v3684 = vpack.c.b16 %v2588, %v2584
    %v3685 = vpack.c.b16 %v2589, %v2585
    %v3686 = vpack.c.b16 %v2594, %v2590
    %v3687 = vpack.c.b16 %v2595, %v2591
    %v3688 = vpack.c.b16 %v2596, %v2592
    %v3689 = vpack.c.b16 %v2597, %v2593
    %v3690 = vpack.c.b16 %v2602, %v2598
    %v3691 = vpack.c.b16 %v2603, %v2599
    %v3692 = vpack.c.b16 %v2604, %v2600
    %v3693 = vpack.c.b16 %v2605, %v2601
    %v3694 = vpack.c.b16 %v2610, %v2606
    %v3695 = vpack.c.b16 %v2611, %v2607
    %v3696 = vpack.c.b16 %v2612, %v2608
    %v3697 = vpack.c.b16 %v2613, %v2609
    %v3698 = vpack.c.b16 %v2618, %v2614
    %v3699 = vpack.c.b16 %v2619, %v2615
    %v3700 = vpack.c.b16 %v2620, %v2616
    %v3701 = vpack.c.b16 %v2621, %v2617
    %v3702 = vpack.c.b16 %v2626, %v2622
    %v3703 = vpack.c.b16 %v2627, %v2623
    %v3704 = vpack.c.b16 %v2628, %v2624
    %v3705 = vpack.c.b16 %v2629, %v2625
    %v3706 = vpack.c.b16 %v2634, %v2630
    %v3707 = vpack.c.b16 %v2635, %v2631
    %v3708 = vpack.c.b16 %v2636, %v2632
    %v3709 = vpack.c.b16 %v2637, %v2633
    %v3710 = vpack.c.b16 %v2642, %v2638
    %v3711 = vpack.c.b16 %v2643, %v2639
    %v3712 = vpack.c.b16 %v2644, %v2640
    %v3713 = vpack.c.b16 %v2645, %v2641
    %v3714 = vpack.c.b16 %v2650, %v2646
    %v3715 = vpack.c.b16 %v2651, %v2647
    %v3716 = vpack.c.b16 %v2652, %v2648
    %v3717 = vpack.c.b16 %v2653, %v2649
    %v3718 = vpack.c.b16 %v2658, %v2654
    %v3719 = vpack.c.b16 %v2659, %v2655
    %v3720 = vpack.c.b16 %v2660, %v2656
    %v3721 = vpack.c.b16 %v2661, %v2657
    %v3722 = vpack.c.b16 %v2666, %v2662
    %v3723 = vpack.c.b16 %v2667, %v2663
    %v3724 = vpack.c.b16 %v2668, %v2664
    %v3725 = vpack.c.b16 %v2669, %v2665
    %v3726 = vpack.c.b16 %v2674, %v2670
    %v3727 = vpack.c.b16 %v2675, %v2671
    %v3728 = vpack.c.b16 %v2676, %v2672
    %v3729 = vpack.c.b16 %v2677, %v2673
    %v3730 = vpack.c.b16 %v2682, %v2678
    %v3731 = vpack.c.b16 %v2683, %v2679
    %v3732 = vpack.c.b16 %v2684, %v2680
    %v3733 = vpack.c.b16 %v2685, %v2681
    %v3734 = vpack.c.b16 %v2690, %v2686
    %v3735 = vpack.c.b16 %v2691, %v2687
    %v3736 = vpack.c.b16 %v2692, %v2688
    %v3737 = vpack.c.b16 %v2693, %v2689
    %v3738 = vpack.c.b16 %v2698, %v2694
    %v3739 = vpack.c.b16 %v2699, %v2695
    %v3740 = vpack.c.b16 %v2700, %v2696
    %v3741 = vpack.c.b16 %v2701, %v2697
    %v3742 = vpack.c.b16 %v2706, %v2702
    %v3743 = vpack.c.b16 %v2707, %v2703
    %v3744 = vpack.c.b16 %v2708, %v2704
    %v3745 = vpack.c.b16 %v2709, %v2705
    %v3746 = vpack.c.b16 %v2714, %v2710
    %v3747 = vpack.c.b16 %v2715, %v2711
    %v3748 = vpack.c.b16 %v2716, %v2712
    %v3749 = vpack.c.b16 %v2717, %v2713
    %v3750 = vpack.c.b16 %v2722, %v2718
    %v3751 = vpack.c.b16 %v2723, %v2719
    %v3752 = vpack.c.b16 %v2724, %v2720
    %v3753 = vpack.c.b16 %v2725, %v2721
    %v3754 = vpack.c.b16 %v2730, %v2726
    %v3755 = vpack.c.b16 %v2731, %v2727
    %v3756 = vpack.c.b16 %v2732, %v2728
    %v3757 = vpack.c.b16 %v2733, %v2729
    %v3758 = vpack.c.b16 %v2738, %v2734
    %v3759 = vpack.c.b16 %v2739, %v2735
    %v3760 = vpack.c.b16 %v2740, %v2736
    %v3761 = vpack.c.b16 %v2741, %v2737
    %v3762 = vpack.c.b16 %v2746, %v2742
    %v3763 = vpack.c.b16 %v2747, %v2743
    %v3764 = vpack.c.b16 %v2748, %v2744
    %v3765 = vpack.c.b16 %v2749, %v2745
    %v3766 = vpack.c.b16 %v2754, %v2750
    %v3767 = vpack.c.b16 %v2755, %v2751
    %v3768 = vpack.c.b16 %v2756, %v2752
    %v3769 = vpack.c.b16 %v2757, %v2753
    %v3770 = vpack.c.b16 %v2762, %v2758
    %v3771 = vpack.c.b16 %v2763, %v2759
    %v3772 = vpack.c.b16 %v2764, %v2760
    %v3773 = vpack.c.b16 %v2765, %v2761
    %v3774 = vpack.c.b16 %v2770, %v2766
    %v3775 = vpack.c.b16 %v2771, %v2767
    %v3776 = vpack.c.b16 %v2772, %v2768
    %v3777 = vpack.c.b16 %v2773, %v2769
    %v3778 = vpack.c.b16 %v2778, %v2774
    %v3779 = vpack.c.b16 %v2779, %v2775
    %v3780 = vpack.c.b16 %v2780, %v2776
    %v3781 = vpack.c.b16 %v2781, %v2777
    %v3782 = vpack.c.b16 %v2786, %v2782
    %v3783 = vpack.c.b16 %v2787, %v2783
    %v3784 = vpack.c.b16 %v2788, %v2784
    %v3785 = vpack.c.b16 %v2789, %v2785
    %v3786 = vpack.c.b16 %v2794, %v2790
    %v3787 = vpack.c.b16 %v2795, %v2791
    %v3788 = vpack.c.b16 %v2796, %v2792
    %v3789 = vpack.c.b16 %v2797, %v2793
    %v3790 = vpack.c.b16 %v2802, %v2798
    %v3791 = vpack.c.b16 %v2803, %v2799
    %v3792 = vpack.c.b16 %v2804, %v2800
    %v3793 = vpack.c.b16 %v2805, %v2801
    %v3794 = vpack.c.b16 %v2810, %v2806
    %v3795 = vpack.c.b16 %v2811, %v2807
    %v3796 = vpack.c.b16 %v2812, %v2808
    %v3797 = vpack.c.b16 %v2813, %v2809
    %v3798 = vpack.c.b16 %v2818, %v2814
    %v3799 = vpack.c.b16 %v2819, %v2815
    %v3800 = vpack.c.b16 %v2820, %v2816
    %v3801 = vpack.c.b16 %v2821, %v2817
    %v3802 = vpack.c.b16 %v2826, %v2822
    %v3803 = vpack.c.b16 %v2827, %v2823
    %v3804 = vpack.c.b16 %v2828, %v2824
    %v3805 = vpack.c.b16 %v2829, %v2825
    %v3806 = vpack.c.b16 %v2834, %v2830
    %v3807 = vpack.c.b16 %v2835, %v2831
    %v3808 = vpack.c.b16 %v2836, %v2832
    %v3809 = vpack.c.b16 %v2837, %v2833
    %v3810 = vpack.c.b16 %v2842, %v2838
    %v3811 = vpack.c.b16 %v2843, %v2839
    %v3812 = vpack.c.b16 %v2844, %v2840
    %v3813 = vpack.c.b16 %v2845, %v2841
    %v3814 = vpack.c.b16 %v2850, %v2846
    %v3815 = vpack.c.b16 %v2851, %v2847
    %v3816 = vpack.c.b16 %v2852, %v2848
    %v3817 = vpack.c.b16 %v2853, %v2849
    %v3818 = vpack.c.b16 %v2858, %v2854
    %v3819 = vpack.c.b16 %v2859, %v2855
    %v3820 = vpack.c.b16 %v2860, %v2856
    %v3821 = vpack.c.b16 %v2861, %v2857
    %v3822 = vpack.c.b16 %v2866, %v2862
    %v3823 = vpack.c.b16 %v2867, %v2863
    %v3824 = vpack.c.b16 %v2868, %v2864
    %v3825 = vpack.c.b16 %v2869, %v2865
    %v3826 = vpack.c.b16 %v2874, %v2870
    %v3827 = vpack.c.b16 %v2875, %v2871
    %v3828 = vpack.c.b16 %v2876, %v2872
    %v3829 = vpack.c.b16 %v2877, %v2873
    %v3830 = vpack.c.b16 %v2882, %v2878
    %v3831 = vpack.c.b16 %v2883, %v2879
    %v3832 = vpack.c.b16 %v2884, %v2880
    %v3833 = vpack.c.b16 %v2885, %v2881
    %v3834 = vpack.c.b16 %v2890, %v2886
    %v3835 = vpack.c.b16 %v2891, %v2887
    %v3836 = vpack.c.b16 %v2892, %v2888
    %v3837 = vpack.c.b16 %v2893, %v2889
    %v3838 = vpack.c.b16 %v2898, %v2894
    %v3839 = vpack.c.b16 %v2899, %v2895
    %v3840 = vpack.c.b16 %v2900, %v2896
    %v3841 = vpack.c.b16 %v2901, %v2897
    %v3842 = vpack.c.b16 %v2906, %v2902
    %v3843 = vpack.c.b16 %v2907, %v2903
    %v3844 = vpack.c.b16 %v2908, %v2904
    %v3845 = vpack.c.b16 %v2909, %v2905
    %v3846 = vpack.c.b16 %v2914, %v2910
    %v3847 = vpack.c.b16 %v2915, %v2911
    %v3848 = vpack.c.b16 %v2916, %v2912
    %v3849 = vpack.c.b16 %v2917, %v2913
    %v3850 = vpack.c.b16 %v2922, %v2918
    %v3851 = vpack.c.b16 %v2923, %v2919
    %v3852 = vpack.c.b16 %v2924, %v2920
    %v3853 = vpack.c.b16 %v2925, %v2921
    %v3854 = vpack.c.b16 %v2930, %v2926
    %v3855 = vpack.c.b16 %v2931, %v2927
    %v3856 = vpack.c.b16 %v2932, %v2928
    %v3857 = vpack.c.b16 %v2933, %v2929
    %v3858 = vpack.c.b16 %v2938, %v2934
    %v3859 = vpack.c.b16 %v2939, %v2935
    %v3860 = vpack.c.b16 %v2940, %v2936
    %v3861 = vpack.c.b16 %v2941, %v2937
    %v3862 = vpack.c.b16 %v2946, %v2942
    %v3863 = vpack.c.b16 %v2947, %v2943
    %v3864 = vpack.c.b16 %v2948, %v2944
    %v3865 = vpack.c.b16 %v2949, %v2945
    %v3866 = vpack.c.b16 %v2954, %v2950
    %v3867 = vpack.c.b16 %v2955, %v2951
    %v3868 = vpack.c.b16 %v2956, %v2952
    %v3869 = vpack.c.b16 %v2957, %v2953
    %v3870 = vpack.c.b16 %v2962, %v2958
    %v3871 = vpack.c.b16 %v2963, %v2959
    %v3872 = vpack.c.b16 %v2964, %v2960
    %v3873 = vpack.c.b16 %v2965, %v2961
    %v3874 = vpack.c.b16 %v2970, %v2966
    %v3875 = vpack.c.b16 %v2971, %v2967
    %v3876 = vpack.c.b16 %v2972, %v2968
    %v3877 = vpack.c.b16 %v2973, %v2969
    %v3878 = vpack.c.b16 %v2978, %v2974
    %v3879 = vpack.c.b16 %v2979, %v2975
    %v3880 = vpack.c.b16 %v2980, %v2976
    %v3881 = vpack.c.b16 %v2981, %v2977
    %v3882 = vpack.c.b16 %v2986, %v2982
    %v3883 = vpack.c.b16 %v2987, %v2983
    %v3884 = vpack.c.b16 %v2988, %v2984
    %v3885 = vpack.c.b16 %v2989, %v2985
    %v3886 = vpack.c.b16 %v2994, %v2990
    %v3887 = vpack.c.b16 %v2995, %v2991
    %v3888 = vpack.c.b16 %v2996, %v2992
    %v3889 = vpack.c.b16 %v2997, %v2993
    %v3890 = vpack.c.b16 %v3002, %v2998
    %v3891 = vpack.c.b16 %v3003, %v2999
    %v3892 = vpack.c.b16 %v3004, %v3000
    %v3893 = vpack.c.b16 %v3005, %v3001
    %v3894 = vpack.c.b16 %v3010, %v3006
    %v3895 = vpack.c.b16 %v3011, %v3007
    %v3896 = vpack.c.b16 %v3012, %v3008
    %v3897 = vpack.c.b16 %v3013, %v3009
    %v3898 = vpack.c.b16 %v3018, %v3014
    %v3899 = vpack.c.b16 %v3019, %v3015
    %v3900 = vpack.c.b16 %v3020, %v3016
    %v3901 = vpack.c.b16 %v3021, %v3017
    %v3902 = vpack.c.b16 %v3026, %v3022
    %v3903 = vpack.c.b16 %v3027, %v3023
    %v3904 = vpack.c.b16 %v3028, %v3024
    %v3905 = vpack.c.b16 %v3029, %v3025
    %v3906 = vpack.c.b16 %v3034, %v3030
    %v3907 = vpack.c.b16 %v3035, %v3031
    %v3908 = vpack.c.b16 %v3036, %v3032
    %v3909 = vpack.c.b16 %v3037, %v3033
    %v3910 = vpack.c.b16 %v3042, %v3038
    %v3911 = vpack.c.b16 %v3043, %v3039
    %v3912 = vpack.c.b16 %v3044, %v3040
    %v3913 = vpack.c.b16 %v3045, %v3041
    %v3914 = vpack.c.b16 %v3050, %v3046
    %v3915 = vpack.c.b16 %v3051, %v3047
    %v3916 = vpack.c.b16 %v3052, %v3048
    %v3917 = vpack.c.b16 %v3053, %v3049
    %v3918 = vpack.c.b16 %v3058, %v3054
    %v3919 = vpack.c.b16 %v3059, %v3055
    %v3920 = vpack.c.b16 %v3060, %v3056
    %v3921 = vpack.c.b16 %v3061, %v3057
    %v3922 = vpack.c.b16 %v3066, %v3062
    %v3923 = vpack.c.b16 %v3067, %v3063
    %v3924 = vpack.c.b16 %v3068, %v3064
    %v3925 = vpack.c.b16 %v3069, %v3065
    %v3926 = vpack.c.b16 %v3074, %v3070
    %v3927 = vpack.c.b16 %v3075, %v3071
    %v3928 = vpack.c.b16 %v3076, %v3072
    %v3929 = vpack.c.b16 %v3077, %v3073
    %v3930 = vpack.c.b16 %v3082, %v3078
    %v3931 = vpack.c.b16 %v3083, %v3079
    %v3932 = vpack.c.b16 %v3084, %v3080
    %v3933 = vpack.c.b16 %v3085, %v3081
    %v3934 = vpack.c.b16 %v3090, %v3086
    %v3935 = vpack.c.b16 %v3091, %v3087
    %v3936 = vpack.c.b16 %v3092, %v3088
    %v3937 = vpack.c.b16 %v3093, %v3089
    %v3938 = vpack.c.b16 %v3098, %v3094
    %v3939 = vpack.c.b16 %v3099, %v3095
    %v3940 = vpack.c.b16 %v3100, %v3096
    %v3941 = vpack.c.b16 %v3101, %v3097
    %v3942 = vpack.c.b16 %v3106, %v3102
    %v3943 = vpack.c.b16 %v3107, %v3103
    %v3944 = vpack.c.b16 %v3108, %v3104
    %v3945 = vpack.c.b16 %v3109, %v3105
    %v3946 = vpack.c.b16 %v3114, %v3110
    %v3947 = vpack.c.b16 %v3115, %v3111
    %v3948 = vpack.c.b16 %v3116, %v3112
    %v3949 = vpack.c.b16 %v3117, %v3113
    %v3950 = vpack.c.b16 %v3122, %v3118
    %v3951 = vpack.c.b16 %v3123, %v3119
    %v3952 = vpack.c.b16 %v3124, %v3120
    %v3953 = vpack.c.b16 %v3125, %v3121
    %v3954 = vpack.c.b16 %v3130, %v3126
    %v3955 = vpack.c.b16 %v3131, %v3127
    %v3956 = vpack.c.b16 %v3132, %v3128
    %v3957 = vpack.c.b16 %v3133, %v3129
    %v3958 = vpack.c.b16 %v3138, %v3134
    %v3959 = vpack.c.b16 %v3139, %v3135
    %v3960 = vpack.c.b16 %v3140, %v3136
    %v3961 = vpack.c.b16 %v3141, %v3137
    %v3962 = vpack.c.b16 %v3146, %v3142
    %v3963 = vpack.c.b16 %v3147, %v3143
    %v3964 = vpack.c.b16 %v3148, %v3144
    %v3965 = vpack.c.b16 %v3149, %v3145
    %v3966 = vpack.c.b16 %v3154, %v3150
    %v3967 = vpack.c.b16 %v3155, %v3151
    %v3968 = vpack.c.b16 %v3156, %v3152
    %v3969 = vpack.c.b16 %v3157, %v3153
    %v3970 = vpack.c.b16 %v3162, %v3158
    %v3971 = vpack.c.b16 %v3163, %v3159
    %v3972 = vpack.c.b16 %v3164, %v3160
    %v3973 = vpack.c.b16 %v3165, %v3161
    %v3974 = vpack.c.b16 %v3170, %v3166
    %v3975 = vpack.c.b16 %v3171, %v3167
    %v3976 = vpack.c.b16 %v3172, %v3168
    %v3977 = vpack.c.b16 %v3173, %v3169
    %v3978 = vpack.c.b16 %v3178, %v3174
    %v3979 = vpack.c.b16 %v3179, %v3175
    %v3980 = vpack.c.b16 %v3180, %v3176
    %v3981 = vpack.c.b16 %v3181, %v3177
    %v3982 = vpack.c.b16 %v3186, %v3182
    %v3983 = vpack.c.b16 %v3187, %v3183
    %v3984 = vpack.c.b16 %v3188, %v3184
    %v3985 = vpack.c.b16 %v3189, %v3185
    %v3986 = vpack.c.b16 %v3194, %v3190
    %v3987 = vpack.c.b16 %v3195, %v3191
    %v3988 = vpack.c.b16 %v3196, %v3192
    %v3989 = vpack.c.b16 %v3197, %v3193
    %v3990 = vpack.c.b16 %v3202, %v3198
    %v3991 = vpack.c.b16 %v3203, %v3199
    %v3992 = vpack.c.b16 %v3204, %v3200
    %v3993 = vpack.c.b16 %v3205, %v3201
    %v3994 = vpack.c.b16 %v3210, %v3206
    %v3995 = vpack.c.b16 %v3211, %v3207
    %v3996 = vpack.c.b16 %v3212, %v3208
    %v3997 = vpack.c.b16 %v3213, %v3209
    %v3998 = vpack.c.b16 %v3218, %v3214
    %v3999 = vpack.c.b16 %v3219, %v3215
    %v4000 = vpack.c.b16 %v3220, %v3216
    %v4001 = vpack.c.b16 %v3221, %v3217
    %v4002 = vpack.c.b16 %v3226, %v3222
    %v4003 = vpack.c.b16 %v3227, %v3223
    %v4004 = vpack.c.b16 %v3228, %v3224
    %v4005 = vpack.c.b16 %v3229, %v3225
    %v4006 = vpack.c.b16 %v3234, %v3230
    %v4007 = vpack.c.b16 %v3235, %v3231
    %v4008 = vpack.c.b16 %v3236, %v3232
    %v4009 = vpack.c.b16 %v3237, %v3233
    %v4010 = vpack.c.b16 %v3242, %v3238
    %v4011 = vpack.c.b16 %v3243, %v3239
    %v4012 = vpack.c.b16 %v3244, %v3240
    %v4013 = vpack.c.b16 %v3245, %v3241
    %4782 = vmatprep.subr.bf16.mxu0 %v3247
    %4783 = vmatpush1.bf16.msra.mxu0 %v3246
    %4784 = vmatprep.subr.bf16.mxu0 %v3251
    %4785 = vmatpush1.bf16.msra.mxu0 %v3250
    %4786 = vmatprep.subr.bf16.mxu0 %v3255
    %4787 = vmatpush1.bf16.msra.mxu0 %v3254
    %4788 = vmatprep.subr.bf16.mxu0 %v3259
    %4789 = vmatpush1.bf16.msra.mxu0 %v3258
    %4790 = vmatprep.subr.bf16.mxu0 %v3263
    %4791 = vmatpush1.bf16.msra.mxu0 %v3262
    %4792 = vmatprep.subr.bf16.mxu0 %v3267
    %4793 = vmatpush1.bf16.msra.mxu0 %v3266
    %4794 = vmatprep.subr.bf16.mxu0 %v3271
    %4795 = vmatpush1.bf16.msra.mxu0 %v3270
    %4796 = vmatprep.subr.bf16.mxu0 %v3275
    %4797 = vmatpush1.bf16.msra.mxu0 %v3274
    %4798 = vmatprep.subr.bf16.mxu0 %v3279
    %4799 = vmatpush1.bf16.msra.mxu0 %v3278
    %4800 = vmatprep.subr.bf16.mxu0 %v3283
    %4801 = vmatpush1.bf16.msra.mxu0 %v3282
    %4802 = vmatprep.subr.bf16.mxu0 %v3287
    %4803 = vmatpush1.bf16.msra.mxu0 %v3286
    %4804 = vmatprep.subr.bf16.mxu0 %v3291
    %4805 = vmatpush1.bf16.msra.mxu0 %v3290
    %4806 = vmatprep.subr.bf16.mxu0 %v3295
    %4807 = vmatpush1.bf16.msra.mxu0 %v3294
    %4808 = vmatprep.subr.bf16.mxu0 %v3299
    %4809 = vmatpush1.bf16.msra.mxu0 %v3298
    %4810 = vmatprep.subr.bf16.mxu0 %v3303
    %4811 = vmatpush1.bf16.msra.mxu0 %v3302
    %4812 = vmatprep.subr.bf16.mxu0 %v3307
    %4813 = vmatpush1.bf16.msra.mxu0 %v3306
    %4814 = vmatprep.mubr.bf16.mxu0 %v129
    %4815 = vmatmul.mubr.bf16.gmra.mrb[0].mxu0 %v128
    %v4816 = vpop.f32.mrb[0].mxu0
    %v4817 = vadd.f32 %v925, %v4816
    %v4818 = vpop.f32.mrb[0].mxu0
    %v4819 = vadd.f32 %v929, %v4818
    %v4820 = vpop.f32.mrb[0].mxu0
    %v4821 = vpop.f32.mrb[0].mxu0
    %4822 = vdwg.mxu0
    %4823 = vmatprep.subr.bf16.mxu0 %v3311
    %4824 = vmatpush1.bf16.msra.mxu0 %v3310
    %4825 = vmatprep.subr.bf16.mxu0 %v3315
    %4826 = vmatpush1.bf16.msra.mxu0 %v3314
    %4827 = vmatprep.subr.bf16.mxu0 %v3319
    %4828 = vmatpush1.bf16.msra.mxu0 %v3318
    %4829 = vmatprep.subr.bf16.mxu0 %v3323
    %4830 = vmatpush1.bf16.msra.mxu0 %v3322
    %4831 = vmatprep.subr.bf16.mxu0 %v3327
    %4832 = vmatpush1.bf16.msra.mxu0 %v3326
    %4833 = vmatprep.subr.bf16.mxu0 %v3331
    %4834 = vmatpush1.bf16.msra.mxu0 %v3330
    %4835 = vmatprep.subr.bf16.mxu0 %v3335
    %4836 = vmatpush1.bf16.msra.mxu0 %v3334
    %4837 = vmatprep.subr.bf16.mxu0 %v3339
    %4838 = vmatpush1.bf16.msra.mxu0 %v3338
    %4839 = vmatprep.subr.bf16.mxu0 %v3343
    %4840 = vmatpush1.bf16.msra.mxu0 %v3342
    %4841 = vmatprep.subr.bf16.mxu0 %v3347
    %4842 = vmatpush1.bf16.msra.mxu0 %v3346
    %4843 = vmatprep.subr.bf16.mxu0 %v3351
    %4844 = vmatpush1.bf16.msra.mxu0 %v3350
    %4845 = vmatprep.subr.bf16.mxu0 %v3355
    %4846 = vmatpush1.bf16.msra.mxu0 %v3354
    %4847 = vmatprep.subr.bf16.mxu0 %v3359
    %4848 = vmatpush1.bf16.msra.mxu0 %v3358
    %4849 = vmatprep.subr.bf16.mxu0 %v3363
    %4850 = vmatpush1.bf16.msra.mxu0 %v3362
    %4851 = vmatprep.subr.bf16.mxu0 %v3367
    %4852 = vmatpush1.bf16.msra.mxu0 %v3366
    %4853 = vmatprep.subr.bf16.mxu0 %v3371
    %4854 = vmatpush1.bf16.msra.mxu0 %v3370
    %4855 = vmatprep.mubr.bf16.mxu0 %v131
    %4856 = vmatmul.mubr.bf16.gmra.mrb[0].mxu0 %v130
    %v4857 = vpop.f32.mrb[0].mxu0
    %v4858 = vadd.f32 %v4817, %v4857
    %v4859 = vpop.f32.mrb[0].mxu0
    %v4860 = vadd.f32 %v4819, %v4859
    %v4861 = vpop.f32.mrb[0].mxu0
    %v4862 = vpop.f32.mrb[0].mxu0
    %4863 = vdwg.mxu0
    %4864 = vmatprep.subr.bf16.mxu0 %v3375
    %4865 = vmatpush1.bf16.msra.mxu0 %v3374
    %4866 = vmatprep.subr.bf16.mxu0 %v3379
    %4867 = vmatpush1.bf16.msra.mxu0 %v3378
    %4868 = vmatprep.subr.bf16.mxu0 %v3383
    %4869 = vmatpush1.bf16.msra.mxu0 %v3382
    %4870 = vmatprep.subr.bf16.mxu0 %v3387
    %4871 = vmatpush1.bf16.msra.mxu0 %v3386
    %4872 = vmatprep.subr.bf16.mxu0 %v3391
    %4873 = vmatpush1.bf16.msra.mxu0 %v3390
    %4874 = vmatprep.subr.bf16.mxu0 %v3395
    %4875 = vmatpush1.bf16.msra.mxu0 %v3394
    %4876 = vmatprep.subr.bf16.mxu0 %v3399
    %4877 = vmatpush1.bf16.msra.mxu0 %v3398
    %4878 = vmatprep.subr.bf16.mxu0 %v3403
    %4879 = vmatpush1.bf16.msra.mxu0 %v3402
    %4880 = vmatprep.subr.bf16.mxu0 %v3407
    %4881 = vmatpush1.bf16.msra.mxu0 %v3406
    %4882 = vmatprep.subr.bf16.mxu0 %v3411
    %4883 = vmatpush1.bf16.msra.mxu0 %v3410
    %4884 = vmatprep.subr.bf16.mxu0 %v3415
    %4885 = vmatpush1.bf16.msra.mxu0 %v3414
    %4886 = vmatprep.subr.bf16.mxu0 %v3419
    %4887 = vmatpush1.bf16.msra.mxu0 %v3418
    %4888 = vmatprep.subr.bf16.mxu0 %v3423
    %4889 = vmatpush1.bf16.msra.mxu0 %v3422
    %4890 = vmatprep.subr.bf16.mxu0 %v3427
    %4891 = vmatpush1.bf16.msra.mxu0 %v3426
    %4892 = vmatprep.subr.bf16.mxu0 %v3431
    %4893 = vmatpush1.bf16.msra.mxu0 %v3430
    %4894 = vmatprep.subr.bf16.mxu0 %v3435
    %4895 = vmatpush1.bf16.msra.mxu0 %v3434
    %4896 = vmatprep.mubr.bf16.mxu0 %v133
    %4897 = vmatmul.mubr.bf16.gmra.mrb[0].mxu0 %v132
    %v4898 = vpop.f32.mrb[0].mxu0
    %v4899 = vadd.f32 %v4858, %v4898
    %v4900 = vpop.f32.mrb[0].mxu0
    %v4901 = vadd.f32 %v4860, %v4900
    %v4902 = vpop.f32.mrb[0].mxu0
    %v4903 = vpop.f32.mrb[0].mxu0
    %4904 = vdwg.mxu0
    %4905 = vmatprep.subr.bf16.mxu0 %v3439
    %4906 = vmatpush1.bf16.msra.mxu0 %v3438
    %4907 = vmatprep.subr.bf16.mxu0 %v3443
    %4908 = vmatpush1.bf16.msra.mxu0 %v3442
    %4909 = vmatprep.subr.bf16.mxu0 %v3447
    %4910 = vmatpush1.bf16.msra.mxu0 %v3446
    %4911 = vmatprep.subr.bf16.mxu0 %v3451
    %4912 = vmatpush1.bf16.msra.mxu0 %v3450
    %4913 = vmatprep.subr.bf16.mxu0 %v3455
    %4914 = vmatpush1.bf16.msra.mxu0 %v3454
    %4915 = vmatprep.subr.bf16.mxu0 %v3459
    %4916 = vmatpush1.bf16.msra.mxu0 %v3458
    %4917 = vmatprep.subr.bf16.mxu0 %v3463
    %4918 = vmatpush1.bf16.msra.mxu0 %v3462
    %4919 = vmatprep.subr.bf16.mxu0 %v3467
    %4920 = vmatpush1.bf16.msra.mxu0 %v3466
    %4921 = vmatprep.subr.bf16.mxu0 %v3471
    %4922 = vmatpush1.bf16.msra.mxu0 %v3470
    %4923 = vmatprep.subr.bf16.mxu0 %v3475
    %4924 = vmatpush1.bf16.msra.mxu0 %v3474
    %4925 = vmatprep.subr.bf16.mxu0 %v3479
    %4926 = vmatpush1.bf16.msra.mxu0 %v3478
    %4927 = vmatprep.subr.bf16.mxu0 %v3483
    %4928 = vmatpush1.bf16.msra.mxu0 %v3482
    %4929 = vmatprep.subr.bf16.mxu0 %v3487
    %4930 = vmatpush1.bf16.msra.mxu0 %v3486
    %4931 = vmatprep.subr.bf16.mxu0 %v3491
    %4932 = vmatpush1.bf16.msra.mxu0 %v3490
    %4933 = vmatprep.subr.bf16.mxu0 %v3495
    %4934 = vmatpush1.bf16.msra.mxu0 %v3494
    %4935 = vmatprep.subr.bf16.mxu0 %v3499
    %4936 = vmatpush1.bf16.msra.mxu0 %v3498
    %4937 = vmatprep.mubr.bf16.mxu0 %v135
    %4938 = vmatmul.mubr.bf16.gmra.mrb[0].mxu0 %v134
    %v4939 = vpop.f32.mrb[0].mxu0
    %v4940 = vadd.f32 %v4899, %v4939
    %v4941 = vpop.f32.mrb[0].mxu0
    %v4942 = vadd.f32 %v4901, %v4941
    %v4943 = vpop.f32.mrb[0].mxu0
    %v4944 = vpop.f32.mrb[0].mxu0
    %4945 = vdwg.mxu0
    %4946 = vmatprep.subr.bf16.mxu0 %v3503
    %4947 = vmatpush1.bf16.msra.mxu0 %v3502
    %4948 = vmatprep.subr.bf16.mxu0 %v3507
    %4949 = vmatpush1.bf16.msra.mxu0 %v3506
    %4950 = vmatprep.subr.bf16.mxu0 %v3511
    %4951 = vmatpush1.bf16.msra.mxu0 %v3510
    %4952 = vmatprep.subr.bf16.mxu0 %v3515
    %4953 = vmatpush1.bf16.msra.mxu0 %v3514
    %4954 = vmatprep.subr.bf16.mxu0 %v3519
    %4955 = vmatpush1.bf16.msra.mxu0 %v3518
    %4956 = vmatprep.subr.bf16.mxu0 %v3523
    %4957 = vmatpush1.bf16.msra.mxu0 %v3522
    %4958 = vmatprep.subr.bf16.mxu0 %v3527
    %4959 = vmatpush1.bf16.msra.mxu0 %v3526
    %4960 = vmatprep.subr.bf16.mxu0 %v3531
    %4961 = vmatpush1.bf16.msra.mxu0 %v3530
    %4962 = vmatprep.subr.bf16.mxu0 %v3535
    %4963 = vmatpush1.bf16.msra.mxu0 %v3534
    %4964 = vmatprep.subr.bf16.mxu0 %v3539
    %4965 = vmatpush1.bf16.msra.mxu0 %v3538
    %4966 = vmatprep.subr.bf16.mxu0 %v3543
    %4967 = vmatpush1.bf16.msra.mxu0 %v3542
    %4968 = vmatprep.subr.bf16.mxu0 %v3547
    %4969 = vmatpush1.bf16.msra.mxu0 %v3546
    %4970 = vmatprep.subr.bf16.mxu0 %v3551
    %4971 = vmatpush1.bf16.msra.mxu0 %v3550
    %4972 = vmatprep.subr.bf16.mxu0 %v3555
    %4973 = vmatpush1.bf16.msra.mxu0 %v3554
    %4974 = vmatprep.subr.bf16.mxu0 %v3559
    %4975 = vmatpush1.bf16.msra.mxu0 %v3558
    %4976 = vmatprep.subr.bf16.mxu0 %v3563
    %4977 = vmatpush1.bf16.msra.mxu0 %v3562
    %4978 = vmatprep.mubr.bf16.mxu0 %v137
    %4979 = vmatmul.mubr.bf16.gmra.mrb[0].mxu0 %v136
    %v4980 = vpop.f32.mrb[0].mxu0
    %v4981 = vadd.f32 %v4940, %v4980
    %v4982 = vpop.f32.mrb[0].mxu0
    %v4983 = vadd.f32 %v4942, %v4982
    %v4984 = vpop.f32.mrb[0].mxu0
    %v4985 = vpop.f32.mrb[0].mxu0
    %4986 = vdwg.mxu0
    %4987 = vmatprep.subr.bf16.mxu0 %v3567
    %4988 = vmatpush1.bf16.msra.mxu0 %v3566
    %4989 = vmatprep.subr.bf16.mxu0 %v3571
    %4990 = vmatpush1.bf16.msra.mxu0 %v3570
    %4991 = vmatprep.subr.bf16.mxu0 %v3575
    %4992 = vmatpush1.bf16.msra.mxu0 %v3574
    %4993 = vmatprep.subr.bf16.mxu0 %v3579
    %4994 = vmatpush1.bf16.msra.mxu0 %v3578
    %4995 = vmatprep.subr.bf16.mxu0 %v3583
    %4996 = vmatpush1.bf16.msra.mxu0 %v3582
    %4997 = vmatprep.subr.bf16.mxu0 %v3587
    %4998 = vmatpush1.bf16.msra.mxu0 %v3586
    %4999 = vmatprep.subr.bf16.mxu0 %v3591
    %5000 = vmatpush1.bf16.msra.mxu0 %v3590
    %5001 = vmatprep.subr.bf16.mxu0 %v3595
    %5002 = vmatpush1.bf16.msra.mxu0 %v3594
    %5003 = vmatprep.subr.bf16.mxu0 %v3599
    %5004 = vmatpush1.bf16.msra.mxu0 %v3598
    %5005 = vmatprep.subr.bf16.mxu0 %v3603
    %5006 = vmatpush1.bf16.msra.mxu0 %v3602
    %5007 = vmatprep.subr.bf16.mxu0 %v3607
    %5008 = vmatpush1.bf16.msra.mxu0 %v3606
    %5009 = vmatprep.subr.bf16.mxu0 %v3611
    %5010 = vmatpush1.bf16.msra.mxu0 %v3610
    %5011 = vmatprep.subr.bf16.mxu0 %v3615
    %5012 = vmatpush1.bf16.msra.mxu0 %v3614
    %5013 = vmatprep.subr.bf16.mxu0 %v3619
    %5014 = vmatpush1.bf16.msra.mxu0 %v3618
    %5015 = vmatprep.subr.bf16.mxu0 %v3623
    %5016 = vmatpush1.bf16.msra.mxu0 %v3622
    %5017 = vmatprep.subr.bf16.mxu0 %v3627
    %5018 = vmatpush1.bf16.msra.mxu0 %v3626
    %5019 = vmatprep.mubr.bf16.mxu0 %v139
    %5020 = vmatmul.mubr.bf16.gmra.mrb[0].mxu0 %v138
    %v5021 = vpop.f32.mrb[0].mxu0
    %v5022 = vadd.f32 %v4981, %v5021
    %v5023 = vpop.f32.mrb[0].mxu0
    %v5024 = vadd.f32 %v4983, %v5023
    %v5025 = vpop.f32.mrb[0].mxu0
    %v5026 = vpop.f32.mrb[0].mxu0
    %5027 = vdwg.mxu0
    %5028 = vmatprep.subr.bf16.mxu0 %v3631
    %5029 = vmatpush1.bf16.msra.mxu0 %v3630
    %5030 = vmatprep.subr.bf16.mxu0 %v3635
    %5031 = vmatpush1.bf16.msra.mxu0 %v3634
    %5032 = vmatprep.subr.bf16.mxu0 %v3639
    %5033 = vmatpush1.bf16.msra.mxu0 %v3638
    %5034 = vmatprep.subr.bf16.mxu0 %v3643
    %5035 = vmatpush1.bf16.msra.mxu0 %v3642
    %5036 = vmatprep.subr.bf16.mxu0 %v3647
    %5037 = vmatpush1.bf16.msra.mxu0 %v3646
    %5038 = vmatprep.subr.bf16.mxu0 %v3651
    %5039 = vmatpush1.bf16.msra.mxu0 %v3650
    %5040 = vmatprep.subr.bf16.mxu0 %v3655
    %5041 = vmatpush1.bf16.msra.mxu0 %v3654
    %5042 = vmatprep.subr.bf16.mxu0 %v3659
    %5043 = vmatpush1.bf16.msra.mxu0 %v3658
    %5044 = vmatprep.subr.bf16.mxu0 %v3663
    %5045 = vmatpush1.bf16.msra.mxu0 %v3662
    %5046 = vmatprep.subr.bf16.mxu0 %v3667
    %5047 = vmatpush1.bf16.msra.mxu0 %v3666
    %5048 = vmatprep.subr.bf16.mxu0 %v3671
    %5049 = vmatpush1.bf16.msra.mxu0 %v3670
    %5050 = vmatprep.subr.bf16.mxu0 %v3675
    %5051 = vmatpush1.bf16.msra.mxu0 %v3674
    %5052 = vmatprep.subr.bf16.mxu0 %v3679
    %5053 = vmatpush1.bf16.msra.mxu0 %v3678
    %5054 = vmatprep.subr.bf16.mxu0 %v3683
    %5055 = vmatpush1.bf16.msra.mxu0 %v3682
    %5056 = vmatprep.subr.bf16.mxu0 %v3687
    %5057 = vmatpush1.bf16.msra.mxu0 %v3686
    %5058 = vmatprep.subr.bf16.mxu0 %v3691
    %5059 = vmatpush1.bf16.msra.mxu0 %v3690
    %5060 = vmatprep.mubr.bf16.mxu0 %v141
    %5061 = vmatmul.mubr.bf16.gmra.mrb[0].mxu0 %v140
    %v5062 = vpop.f32.mrb[0].mxu0
    %v5063 = vadd.f32 %v5022, %v5062
    %v5064 = vpop.f32.mrb[0].mxu0
    %v5065 = vadd.f32 %v5024, %v5064
    %v5066 = vpop.f32.mrb[0].mxu0
    %v5067 = vpop.f32.mrb[0].mxu0
    %5068 = vdwg.mxu0
    %5069 = vmatprep.subr.bf16.mxu0 %v3695
    %5070 = vmatpush1.bf16.msra.mxu0 %v3694
    %5071 = vmatprep.subr.bf16.mxu0 %v3699
    %5072 = vmatpush1.bf16.msra.mxu0 %v3698
    %5073 = vmatprep.subr.bf16.mxu0 %v3703
    %5074 = vmatpush1.bf16.msra.mxu0 %v3702
    %5075 = vmatprep.subr.bf16.mxu0 %v3707
    %5076 = vmatpush1.bf16.msra.mxu0 %v3706
    %5077 = vmatprep.subr.bf16.mxu0 %v3711
    %5078 = vmatpush1.bf16.msra.mxu0 %v3710
    %5079 = vmatprep.subr.bf16.mxu0 %v3715
    %5080 = vmatpush1.bf16.msra.mxu0 %v3714
    %5081 = vmatprep.subr.bf16.mxu0 %v3719
    %5082 = vmatpush1.bf16.msra.mxu0 %v3718
    %5083 = vmatprep.subr.bf16.mxu0 %v3723
    %5084 = vmatpush1.bf16.msra.mxu0 %v3722
    %5085 = vmatprep.subr.bf16.mxu0 %v3727
    %5086 = vmatpush1.bf16.msra.mxu0 %v3726
    %5087 = vmatprep.subr.bf16.mxu0 %v3731
    %5088 = vmatpush1.bf16.msra.mxu0 %v3730
    %5089 = vmatprep.subr.bf16.mxu0 %v3735
    %5090 = vmatpush1.bf16.msra.mxu0 %v3734
    %5091 = vmatprep.subr.bf16.mxu0 %v3739
    %5092 = vmatpush1.bf16.msra.mxu0 %v3738
    %5093 = vmatprep.subr.bf16.mxu0 %v3743
    %5094 = vmatpush1.bf16.msra.mxu0 %v3742
    %5095 = vmatprep.subr.bf16.mxu0 %v3747
    %5096 = vmatpush1.bf16.msra.mxu0 %v3746
    %5097 = vmatprep.subr.bf16.mxu0 %v3751
    %5098 = vmatpush1.bf16.msra.mxu0 %v3750
    %5099 = vmatprep.subr.bf16.mxu0 %v3755
    %5100 = vmatpush1.bf16.msra.mxu0 %v3754
    %5101 = vmatprep.mubr.bf16.mxu0 %v143
    %5102 = vmatmul.mubr.bf16.gmra.mrb[0].mxu0 %v142
    %v5103 = vpop.f32.mrb[0].mxu0
    %v5104 = vadd.f32 %v5063, %v5103
    %v5105 = vpop.f32.mrb[0].mxu0
    %v5106 = vadd.f32 %v5065, %v5105
    %v5107 = vpop.f32.mrb[0].mxu0
    %v5108 = vpop.f32.mrb[0].mxu0
    %5109 = vdwg.mxu0
    %5110 = vmatprep.subr.bf16.mxu0 %v3759
    %5111 = vmatpush1.bf16.msra.mxu0 %v3758
    %5112 = vmatprep.subr.bf16.mxu0 %v3763
    %5113 = vmatpush1.bf16.msra.mxu0 %v3762
    %5114 = vmatprep.subr.bf16.mxu0 %v3767
    %5115 = vmatpush1.bf16.msra.mxu0 %v3766
    %5116 = vmatprep.subr.bf16.mxu0 %v3771
    %5117 = vmatpush1.bf16.msra.mxu0 %v3770
    %5118 = vmatprep.subr.bf16.mxu0 %v3775
    %5119 = vmatpush1.bf16.msra.mxu0 %v3774
    %5120 = vmatprep.subr.bf16.mxu0 %v3779
    %5121 = vmatpush1.bf16.msra.mxu0 %v3778
    %5122 = vmatprep.subr.bf16.mxu0 %v3783
    %5123 = vmatpush1.bf16.msra.mxu0 %v3782
    %5124 = vmatprep.subr.bf16.mxu0 %v3787
    %5125 = vmatpush1.bf16.msra.mxu0 %v3786
    %5126 = vmatprep.subr.bf16.mxu0 %v3791
    %5127 = vmatpush1.bf16.msra.mxu0 %v3790
    %5128 = vmatprep.subr.bf16.mxu0 %v3795
    %5129 = vmatpush1.bf16.msra.mxu0 %v3794
    %5130 = vmatprep.subr.bf16.mxu0 %v3799
    %5131 = vmatpush1.bf16.msra.mxu0 %v3798
    %5132 = vmatprep.subr.bf16.mxu0 %v3803
    %5133 = vmatpush1.bf16.msra.mxu0 %v3802
    %5134 = vmatprep.subr.bf16.mxu0 %v3807
    %5135 = vmatpush1.bf16.msra.mxu0 %v3806
    %5136 = vmatprep.subr.bf16.mxu0 %v3811
    %5137 = vmatpush1.bf16.msra.mxu0 %v3810
    %5138 = vmatprep.subr.bf16.mxu0 %v3815
    %5139 = vmatpush1.bf16.msra.mxu0 %v3814
    %5140 = vmatprep.subr.bf16.mxu0 %v3819
    %5141 = vmatpush1.bf16.msra.mxu0 %v3818
    %5142 = vmatprep.mubr.bf16.mxu0 %v145
    %5143 = vmatmul.mubr.bf16.gmra.mrb[0].mxu0 %v144
    %v5144 = vpop.f32.mrb[0].mxu0
    %v5145 = vadd.f32 %v5104, %v5144
    %v5146 = vpop.f32.mrb[0].mxu0
    %v5147 = vadd.f32 %v5106, %v5146
    %v5148 = vpop.f32.mrb[0].mxu0
    %v5149 = vpop.f32.mrb[0].mxu0
    %5150 = vdwg.mxu0
    %5151 = vmatprep.subr.bf16.mxu0 %v3823
    %5152 = vmatpush1.bf16.msra.mxu0 %v3822
    %5153 = vmatprep.subr.bf16.mxu0 %v3827
    %5154 = vmatpush1.bf16.msra.mxu0 %v3826
    %5155 = vmatprep.subr.bf16.mxu0 %v3831
    %5156 = vmatpush1.bf16.msra.mxu0 %v3830
    %5157 = vmatprep.subr.bf16.mxu0 %v3835
    %5158 = vmatpush1.bf16.msra.mxu0 %v3834
    %5159 = vmatprep.subr.bf16.mxu0 %v3839
    %5160 = vmatpush1.bf16.msra.mxu0 %v3838
    %5161 = vmatprep.subr.bf16.mxu0 %v3843
    %5162 = vmatpush1.bf16.msra.mxu0 %v3842
    %5163 = vmatprep.subr.bf16.mxu0 %v3847
    %5164 = vmatpush1.bf16.msra.mxu0 %v3846
    %5165 = vmatprep.subr.bf16.mxu0 %v3851
    %5166 = vmatpush1.bf16.msra.mxu0 %v3850
    %5167 = vmatprep.subr.bf16.mxu0 %v3855
    %5168 = vmatpush1.bf16.msra.mxu0 %v3854
    %5169 = vmatprep.subr.bf16.mxu0 %v3859
    %5170 = vmatpush1.bf16.msra.mxu0 %v3858
    %5171 = vmatprep.subr.bf16.mxu0 %v3863
    %5172 = vmatpush1.bf16.msra.mxu0 %v3862
    %5173 = vmatprep.subr.bf16.mxu0 %v3867
    %5174 = vmatpush1.bf16.msra.mxu0 %v3866
    %5175 = vmatprep.subr.bf16.mxu0 %v3871
    %5176 = vmatpush1.bf16.msra.mxu0 %v3870
    %5177 = vmatprep.subr.bf16.mxu0 %v3875
    %5178 = vmatpush1.bf16.msra.mxu0 %v3874
    %5179 = vmatprep.subr.bf16.mxu0 %v3879
    %5180 = vmatpush1.bf16.msra.mxu0 %v3878
    %5181 = vmatprep.subr.bf16.mxu0 %v3883
    %5182 = vmatpush1.bf16.msra.mxu0 %v3882
    %5183 = vmatprep.mubr.bf16.mxu0 %v147
    %5184 = vmatmul.mubr.bf16.gmra.mrb[0].mxu0 %v146
    %v5185 = vpop.f32.mrb[0].mxu0
    %v5186 = vadd.f32 %v5145, %v5185
    %v5187 = vpop.f32.mrb[0].mxu0
    %v5188 = vadd.f32 %v5147, %v5187
    %v5189 = vpop.f32.mrb[0].mxu0
    %v5190 = vpop.f32.mrb[0].mxu0
    %5191 = vdwg.mxu0
    %5192 = vmatprep.subr.bf16.mxu0 %v3887
    %5193 = vmatpush1.bf16.msra.mxu0 %v3886
    %5194 = vmatprep.subr.bf16.mxu0 %v3891
    %5195 = vmatpush1.bf16.msra.mxu0 %v3890
    %5196 = vmatprep.subr.bf16.mxu0 %v3895
    %5197 = vmatpush1.bf16.msra.mxu0 %v3894
    %5198 = vmatprep.subr.bf16.mxu0 %v3899
    %5199 = vmatpush1.bf16.msra.mxu0 %v3898
    %5200 = vmatprep.subr.bf16.mxu0 %v3903
    %5201 = vmatpush1.bf16.msra.mxu0 %v3902
    %5202 = vmatprep.subr.bf16.mxu0 %v3907
    %5203 = vmatpush1.bf16.msra.mxu0 %v3906
    %5204 = vmatprep.subr.bf16.mxu0 %v3911
    %5205 = vmatpush1.bf16.msra.mxu0 %v3910
    %5206 = vmatprep.subr.bf16.mxu0 %v3915
    %5207 = vmatpush1.bf16.msra.mxu0 %v3914
    %5208 = vmatprep.subr.bf16.mxu0 %v3919
    %5209 = vmatpush1.bf16.msra.mxu0 %v3918
    %5210 = vmatprep.subr.bf16.mxu0 %v3923
    %5211 = vmatpush1.bf16.msra.mxu0 %v3922
    %5212 = vmatprep.subr.bf16.mxu0 %v3927
    %5213 = vmatpush1.bf16.msra.mxu0 %v3926
    %5214 = vmatprep.subr.bf16.mxu0 %v3931
    %5215 = vmatpush1.bf16.msra.mxu0 %v3930
    %5216 = vmatprep.subr.bf16.mxu0 %v3935
    %5217 = vmatpush1.bf16.msra.mxu0 %v3934
    %5218 = vmatprep.subr.bf16.mxu0 %v3939
    %5219 = vmatpush1.bf16.msra.mxu0 %v3938
    %5220 = vmatprep.subr.bf16.mxu0 %v3943
    %5221 = vmatpush1.bf16.msra.mxu0 %v3942
    %5222 = vmatprep.subr.bf16.mxu0 %v3947
    %5223 = vmatpush1.bf16.msra.mxu0 %v3946
    %5224 = vmatprep.mubr.bf16.mxu0 %v149
    %5225 = vmatmul.mubr.bf16.gmra.mrb[0].mxu0 %v148
    %v5226 = vpop.f32.mrb[0].mxu0
    %v5227 = vadd.f32 %v5186, %v5226
    %v5228 = vpop.f32.mrb[0].mxu0
    %v5229 = vadd.f32 %v5188, %v5228
    %v5230 = vpop.f32.mrb[0].mxu0
    %v5231 = vpop.f32.mrb[0].mxu0
    %5232 = vdwg.mxu0
    %5233 = vmatprep.subr.bf16.mxu0 %v3951
    %5234 = vmatpush1.bf16.msra.mxu0 %v3950
    %5235 = vmatprep.subr.bf16.mxu0 %v3955
    %5236 = vmatpush1.bf16.msra.mxu0 %v3954
    %5237 = vmatprep.subr.bf16.mxu0 %v3959
    %5238 = vmatpush1.bf16.msra.mxu0 %v3958
    %5239 = vmatprep.subr.bf16.mxu0 %v3963
    %5240 = vmatpush1.bf16.msra.mxu0 %v3962
    %5241 = vmatprep.subr.bf16.mxu0 %v3967
    %5242 = vmatpush1.bf16.msra.mxu0 %v3966
    %5243 = vmatprep.subr.bf16.mxu0 %v3971
    %5244 = vmatpush1.bf16.msra.mxu0 %v3970
    %5245 = vmatprep.subr.bf16.mxu0 %v3975
    %5246 = vmatpush1.bf16.msra.mxu0 %v3974
    %5247 = vmatprep.subr.bf16.mxu0 %v3979
    %5248 = vmatpush1.bf16.msra.mxu0 %v3978
    %5249 = vmatprep.subr.bf16.mxu0 %v3983
    %5250 = vmatpush1.bf16.msra.mxu0 %v3982
    %5251 = vmatprep.subr.bf16.mxu0 %v3987
    %5252 = vmatpush1.bf16.msra.mxu0 %v3986
    %5253 = vmatprep.subr.bf16.mxu0 %v3991
    %5254 = vmatpush1.bf16.msra.mxu0 %v3990
    %5255 = vmatprep.subr.bf16.mxu0 %v3995
    %5256 = vmatpush1.bf16.msra.mxu0 %v3994
    %5257 = vmatprep.subr.bf16.mxu0 %v3999
    %5258 = vmatpush1.bf16.msra.mxu0 %v3998
    %5259 = vmatprep.subr.bf16.mxu0 %v4003
    %5260 = vmatpush1.bf16.msra.mxu0 %v4002
    %5261 = vmatprep.subr.bf16.mxu0 %v4007
    %5262 = vmatpush1.bf16.msra.mxu0 %v4006
    %5263 = vmatprep.subr.bf16.mxu0 %v4011
    %5264 = vmatpush1.bf16.msra.mxu0 %v4010
    %5265 = vmatprep.mubr.bf16.mxu0 %v151
    %5266 = vmatmul.mubr.bf16.gmra.mrb[0].mxu0 %v150
    %v5267 = vpop.f32.mrb[0].mxu0
    %v5268 = vadd.f32 %v5227, %v5267
    %v5269 = vpop.f32.mrb[0].mxu0
    %v5270 = vadd.f32 %v5229, %v5269
    %v5271 = vpop.f32.mrb[0].mxu0
    %v5272 = vpop.f32.mrb[0].mxu0
    %5273 = vdwg.mxu0
    %5274 = vmatprep.subr.bf16.mxu0 %v3249
    %5275 = vmatpush1.bf16.msra.mxu0 %v3248
    %5276 = vmatprep.subr.bf16.mxu0 %v3253
    %5277 = vmatpush1.bf16.msra.mxu0 %v3252
    %5278 = vmatprep.subr.bf16.mxu0 %v3257
    %5279 = vmatpush1.bf16.msra.mxu0 %v3256
    %5280 = vmatprep.subr.bf16.mxu0 %v3261
    %5281 = vmatpush1.bf16.msra.mxu0 %v3260
    %5282 = vmatprep.subr.bf16.mxu0 %v3265
    %5283 = vmatpush1.bf16.msra.mxu0 %v3264
    %5284 = vmatprep.subr.bf16.mxu0 %v3269
    %5285 = vmatpush1.bf16.msra.mxu0 %v3268
    %5286 = vmatprep.subr.bf16.mxu0 %v3273
    %5287 = vmatpush1.bf16.msra.mxu0 %v3272
    %5288 = vmatprep.subr.bf16.mxu0 %v3277
    %5289 = vmatpush1.bf16.msra.mxu0 %v3276
    %5290 = vmatprep.subr.bf16.mxu0 %v3281
    %5291 = vmatpush1.bf16.msra.mxu0 %v3280
    %5292 = vmatprep.subr.bf16.mxu0 %v3285
    %5293 = vmatpush1.bf16.msra.mxu0 %v3284
    %5294 = vmatprep.subr.bf16.mxu0 %v3289
    %5295 = vmatpush1.bf16.msra.mxu0 %v3288
    %5296 = vmatprep.subr.bf16.mxu0 %v3293
    %5297 = vmatpush1.bf16.msra.mxu0 %v3292
    %5298 = vmatprep.subr.bf16.mxu0 %v3297
    %5299 = vmatpush1.bf16.msra.mxu0 %v3296
    %5300 = vmatprep.subr.bf16.mxu0 %v3301
    %5301 = vmatpush1.bf16.msra.mxu0 %v3300
    %5302 = vmatprep.subr.bf16.mxu0 %v3305
    %5303 = vmatpush1.bf16.msra.mxu0 %v3304
    %5304 = vmatprep.subr.bf16.mxu0 %v3309
    %5305 = vmatpush1.bf16.msra.mxu0 %v3308
    %5306 = vmatprep.mubr.bf16.mxu0 %v129
    %5307 = vmatmul.mubr.bf16.gmra.mrb[0].mxu0 %v128
    %v5308 = vpop.f32.mrb[0].mxu0
    %v5309 = vadd.f32 %v933, %v5308
    %v5310 = vpop.f32.mrb[0].mxu0
    %v5311 = vadd.f32 %v937, %v5310
    %v5312 = vpop.f32.mrb[0].mxu0
    %v5313 = vpop.f32.mrb[0].mxu0
    %5314 = vdwg.mxu0
    %5315 = vmatprep.subr.bf16.mxu0 %v3313
    %5316 = vmatpush1.bf16.msra.mxu0 %v3312
    %5317 = vmatprep.subr.bf16.mxu0 %v3317
    %5318 = vmatpush1.bf16.msra.mxu0 %v3316
    %5319 = vmatprep.subr.bf16.mxu0 %v3321
    %5320 = vmatpush1.bf16.msra.mxu0 %v3320
    %5321 = vmatprep.subr.bf16.mxu0 %v3325
    %5322 = vmatpush1.bf16.msra.mxu0 %v3324
    %5323 = vmatprep.subr.bf16.mxu0 %v3329
    %5324 = vmatpush1.bf16.msra.mxu0 %v3328
    %5325 = vmatprep.subr.bf16.mxu0 %v3333
    %5326 = vmatpush1.bf16.msra.mxu0 %v3332
    %5327 = vmatprep.subr.bf16.mxu0 %v3337
    %5328 = vmatpush1.bf16.msra.mxu0 %v3336
    %5329 = vmatprep.subr.bf16.mxu0 %v3341
    %5330 = vmatpush1.bf16.msra.mxu0 %v3340
    %5331 = vmatprep.subr.bf16.mxu0 %v3345
    %5332 = vmatpush1.bf16.msra.mxu0 %v3344
    %5333 = vmatprep.subr.bf16.mxu0 %v3349
    %5334 = vmatpush1.bf16.msra.mxu0 %v3348
    %5335 = vmatprep.subr.bf16.mxu0 %v3353
    %5336 = vmatpush1.bf16.msra.mxu0 %v3352
    %5337 = vmatprep.subr.bf16.mxu0 %v3357
    %5338 = vmatpush1.bf16.msra.mxu0 %v3356
    %5339 = vmatprep.subr.bf16.mxu0 %v3361
    %5340 = vmatpush1.bf16.msra.mxu0 %v3360
    %5341 = vmatprep.subr.bf16.mxu0 %v3365
    %5342 = vmatpush1.bf16.msra.mxu0 %v3364
    %5343 = vmatprep.subr.bf16.mxu0 %v3369
    %5344 = vmatpush1.bf16.msra.mxu0 %v3368
    %5345 = vmatprep.subr.bf16.mxu0 %v3373
    %5346 = vmatpush1.bf16.msra.mxu0 %v3372
    %5347 = vmatprep.mubr.bf16.mxu0 %v131
    %5348 = vmatmul.mubr.bf16.gmra.mrb[0].mxu0 %v130
    %v5349 = vpop.f32.mrb[0].mxu0
    %v5350 = vadd.f32 %v5309, %v5349
    %v5351 = vpop.f32.mrb[0].mxu0
    %v5352 = vadd.f32 %v5311, %v5351
    %v5353 = vpop.f32.mrb[0].mxu0
    %v5354 = vpop.f32.mrb[0].mxu0
    %5355 = vdwg.mxu0
    %5356 = vmatprep.subr.bf16.mxu0 %v3377
    %5357 = vmatpush1.bf16.msra.mxu0 %v3376
    %5358 = vmatprep.subr.bf16.mxu0 %v3381
    %5359 = vmatpush1.bf16.msra.mxu0 %v3380
    %5360 = vmatprep.subr.bf16.mxu0 %v3385
    %5361 = vmatpush1.bf16.msra.mxu0 %v3384
    %5362 = vmatprep.subr.bf16.mxu0 %v3389
    %5363 = vmatpush1.bf16.msra.mxu0 %v3388
    %5364 = vmatprep.subr.bf16.mxu0 %v3393
    %5365 = vmatpush1.bf16.msra.mxu0 %v3392
    %5366 = vmatprep.subr.bf16.mxu0 %v3397
    %5367 = vmatpush1.bf16.msra.mxu0 %v3396
    %5368 = vmatprep.subr.bf16.mxu0 %v3401
    %5369 = vmatpush1.bf16.msra.mxu0 %v3400
    %5370 = vmatprep.subr.bf16.mxu0 %v3405
    %5371 = vmatpush1.bf16.msra.mxu0 %v3404
    %5372 = vmatprep.subr.bf16.mxu0 %v3409
    %5373 = vmatpush1.bf16.msra.mxu0 %v3408
    %5374 = vmatprep.subr.bf16.mxu0 %v3413
    %5375 = vmatpush1.bf16.msra.mxu0 %v3412
    %5376 = vmatprep.subr.bf16.mxu0 %v3417
    %5377 = vmatpush1.bf16.msra.mxu0 %v3416
    %5378 = vmatprep.subr.bf16.mxu0 %v3421
    %5379 = vmatpush1.bf16.msra.mxu0 %v3420
    %5380 = vmatprep.subr.bf16.mxu0 %v3425
    %5381 = vmatpush1.bf16.msra.mxu0 %v3424
    %5382 = vmatprep.subr.bf16.mxu0 %v3429
    %5383 = vmatpush1.bf16.msra.mxu0 %v3428
    %5384 = vmatprep.subr.bf16.mxu0 %v3433
    %5385 = vmatpush1.bf16.msra.mxu0 %v3432
    %5386 = vmatprep.subr.bf16.mxu0 %v3437
    %5387 = vmatpush1.bf16.msra.mxu0 %v3436
    %5388 = vmatprep.mubr.bf16.mxu0 %v133
    %5389 = vmatmul.mubr.bf16.gmra.mrb[0].mxu0 %v132
    %v5390 = vpop.f32.mrb[0].mxu0
    %v5391 = vadd.f32 %v5350, %v5390
    %v5392 = vpop.f32.mrb[0].mxu0
    %v5393 = vadd.f32 %v5352, %v5392
    %v5394 = vpop.f32.mrb[0].mxu0
    %v5395 = vpop.f32.mrb[0].mxu0
    %5396 = vdwg.mxu0
    %5397 = vmatprep.subr.bf16.mxu0 %v3441
    %5398 = vmatpush1.bf16.msra.mxu0 %v3440
    %5399 = vmatprep.subr.bf16.mxu0 %v3445
    %5400 = vmatpush1.bf16.msra.mxu0 %v3444
    %5401 = vmatprep.subr.bf16.mxu0 %v3449
    %5402 = vmatpush1.bf16.msra.mxu0 %v3448
    %5403 = vmatprep.subr.bf16.mxu0 %v3453
    %5404 = vmatpush1.bf16.msra.mxu0 %v3452
    %5405 = vmatprep.subr.bf16.mxu0 %v3457
    %5406 = vmatpush1.bf16.msra.mxu0 %v3456
    %5407 = vmatprep.subr.bf16.mxu0 %v3461
    %5408 = vmatpush1.bf16.msra.mxu0 %v3460
    %5409 = vmatprep.subr.bf16.mxu0 %v3465
    %5410 = vmatpush1.bf16.msra.mxu0 %v3464
    %5411 = vmatprep.subr.bf16.mxu0 %v3469
    %5412 = vmatpush1.bf16.msra.mxu0 %v3468
    %5413 = vmatprep.subr.bf16.mxu0 %v3473
    %5414 = vmatpush1.bf16.msra.mxu0 %v3472
    %5415 = vmatprep.subr.bf16.mxu0 %v3477
    %5416 = vmatpush1.bf16.msra.mxu0 %v3476
    %5417 = vmatprep.subr.bf16.mxu0 %v3481
    %5418 = vmatpush1.bf16.msra.mxu0 %v3480
    %5419 = vmatprep.subr.bf16.mxu0 %v3485
    %5420 = vmatpush1.bf16.msra.mxu0 %v3484
    %5421 = vmatprep.subr.bf16.mxu0 %v3489
    %5422 = vmatpush1.bf16.msra.mxu0 %v3488
    %5423 = vmatprep.subr.bf16.mxu0 %v3493
    %5424 = vmatpush1.bf16.msra.mxu0 %v3492
    %5425 = vmatprep.subr.bf16.mxu0 %v3497
    %5426 = vmatpush1.bf16.msra.mxu0 %v3496
    %5427 = vmatprep.subr.bf16.mxu0 %v3501
    %5428 = vmatpush1.bf16.msra.mxu0 %v3500
    %5429 = vmatprep.mubr.bf16.mxu0 %v135
    %5430 = vmatmul.mubr.bf16.gmra.mrb[0].mxu0 %v134
    %v5431 = vpop.f32.mrb[0].mxu0
    %v5432 = vadd.f32 %v5391, %v5431
    %v5433 = vpop.f32.mrb[0].mxu0
    %v5434 = vadd.f32 %v5393, %v5433
    %v5435 = vpop.f32.mrb[0].mxu0
    %v5436 = vpop.f32.mrb[0].mxu0
    %5437 = vdwg.mxu0
    %5438 = vmatprep.subr.bf16.mxu0 %v3505
    %5439 = vmatpush1.bf16.msra.mxu0 %v3504
    %5440 = vmatprep.subr.bf16.mxu0 %v3509
    %5441 = vmatpush1.bf16.msra.mxu0 %v3508
    %5442 = vmatprep.subr.bf16.mxu0 %v3513
    %5443 = vmatpush1.bf16.msra.mxu0 %v3512
    %5444 = vmatprep.subr.bf16.mxu0 %v3517
    %5445 = vmatpush1.bf16.msra.mxu0 %v3516
    %5446 = vmatprep.subr.bf16.mxu0 %v3521
    %5447 = vmatpush1.bf16.msra.mxu0 %v3520
    %5448 = vmatprep.subr.bf16.mxu0 %v3525
    %5449 = vmatpush1.bf16.msra.mxu0 %v3524
    %5450 = vmatprep.subr.bf16.mxu0 %v3529
    %5451 = vmatpush1.bf16.msra.mxu0 %v3528
    %5452 = vmatprep.subr.bf16.mxu0 %v3533
    %5453 = vmatpush1.bf16.msra.mxu0 %v3532
    %5454 = vmatprep.subr.bf16.mxu0 %v3537
    %5455 = vmatpush1.bf16.msra.mxu0 %v3536
    %5456 = vmatprep.subr.bf16.mxu0 %v3541
    %5457 = vmatpush1.bf16.msra.mxu0 %v3540
    %5458 = vmatprep.subr.bf16.mxu0 %v3545
    %5459 = vmatpush1.bf16.msra.mxu0 %v3544
    %5460 = vmatprep.subr.bf16.mxu0 %v3549
    %5461 = vmatpush1.bf16.msra.mxu0 %v3548
    %5462 = vmatprep.subr.bf16.mxu0 %v3553
    %5463 = vmatpush1.bf16.msra.mxu0 %v3552
    %5464 = vmatprep.subr.bf16.mxu0 %v3557
    %5465 = vmatpush1.bf16.msra.mxu0 %v3556
    %5466 = vmatprep.subr.bf16.mxu0 %v3561
    %5467 = vmatpush1.bf16.msra.mxu0 %v3560
    %5468 = vmatprep.subr.bf16.mxu0 %v3565
    %5469 = vmatpush1.bf16.msra.mxu0 %v3564
    %5470 = vmatprep.mubr.bf16.mxu0 %v137
    %5471 = vmatmul.mubr.bf16.gmra.mrb[0].mxu0 %v136
    %v5472 = vpop.f32.mrb[0].mxu0
    %v5473 = vadd.f32 %v5432, %v5472
    %v5474 = vpop.f32.mrb[0].mxu0
    %v5475 = vadd.f32 %v5434, %v5474
    %v5476 = vpop.f32.mrb[0].mxu0
    %v5477 = vpop.f32.mrb[0].mxu0
    %5478 = vdwg.mxu0
    %5479 = vmatprep.subr.bf16.mxu0 %v3569
    %5480 = vmatpush1.bf16.msra.mxu0 %v3568
    %5481 = vmatprep.subr.bf16.mxu0 %v3573
    %5482 = vmatpush1.bf16.msra.mxu0 %v3572
    %5483 = vmatprep.subr.bf16.mxu0 %v3577
    %5484 = vmatpush1.bf16.msra.mxu0 %v3576
    %5485 = vmatprep.subr.bf16.mxu0 %v3581
    %5486 = vmatpush1.bf16.msra.mxu0 %v3580
    %5487 = vmatprep.subr.bf16.mxu0 %v3585
    %5488 = vmatpush1.bf16.msra.mxu0 %v3584
    %5489 = vmatprep.subr.bf16.mxu0 %v3589
    %5490 = vmatpush1.bf16.msra.mxu0 %v3588
    %5491 = vmatprep.subr.bf16.mxu0 %v3593
    %5492 = vmatpush1.bf16.msra.mxu0 %v3592
    %5493 = vmatprep.subr.bf16.mxu0 %v3597
    %5494 = vmatpush1.bf16.msra.mxu0 %v3596
    %5495 = vmatprep.subr.bf16.mxu0 %v3601
    %5496 = vmatpush1.bf16.msra.mxu0 %v3600
    %5497 = vmatprep.subr.bf16.mxu0 %v3605
    %5498 = vmatpush1.bf16.msra.mxu0 %v3604
    %5499 = vmatprep.subr.bf16.mxu0 %v3609
    %5500 = vmatpush1.bf16.msra.mxu0 %v3608
    %5501 = vmatprep.subr.bf16.mxu0 %v3613
    %5502 = vmatpush1.bf16.msra.mxu0 %v3612
    %5503 = vmatprep.subr.bf16.mxu0 %v3617
    %5504 = vmatpush1.bf16.msra.mxu0 %v3616
    %5505 = vmatprep.subr.bf16.mxu0 %v3621
    %5506 = vmatpush1.bf16.msra.mxu0 %v3620
    %5507 = vmatprep.subr.bf16.mxu0 %v3625
    %5508 = vmatpush1.bf16.msra.mxu0 %v3624
    %5509 = vmatprep.subr.bf16.mxu0 %v3629
    %5510 = vmatpush1.bf16.msra.mxu0 %v3628
    %5511 = vmatprep.mubr.bf16.mxu0 %v139
    %5512 = vmatmul.mubr.bf16.gmra.mrb[0].mxu0 %v138
    %v5513 = vpop.f32.mrb[0].mxu0
    %v5514 = vadd.f32 %v5473, %v5513
    %v5515 = vpop.f32.mrb[0].mxu0
    %v5516 = vadd.f32 %v5475, %v5515
    %v5517 = vpop.f32.mrb[0].mxu0
    %v5518 = vpop.f32.mrb[0].mxu0
    %5519 = vdwg.mxu0
    %5520 = vmatprep.subr.bf16.mxu0 %v3633
    %5521 = vmatpush1.bf16.msra.mxu0 %v3632
    %5522 = vmatprep.subr.bf16.mxu0 %v3637
    %5523 = vmatpush1.bf16.msra.mxu0 %v3636
    %5524 = vmatprep.subr.bf16.mxu0 %v3641
    %5525 = vmatpush1.bf16.msra.mxu0 %v3640
    %5526 = vmatprep.subr.bf16.mxu0 %v3645
    %5527 = vmatpush1.bf16.msra.mxu0 %v3644
    %5528 = vmatprep.subr.bf16.mxu0 %v3649
    %5529 = vmatpush1.bf16.msra.mxu0 %v3648
    %5530 = vmatprep.subr.bf16.mxu0 %v3653
    %5531 = vmatpush1.bf16.msra.mxu0 %v3652
    %5532 = vmatprep.subr.bf16.mxu0 %v3657
    %5533 = vmatpush1.bf16.msra.mxu0 %v3656
    %5534 = vmatprep.subr.bf16.mxu0 %v3661
    %5535 = vmatpush1.bf16.msra.mxu0 %v3660
    %5536 = vmatprep.subr.bf16.mxu0 %v3665
    %5537 = vmatpush1.bf16.msra.mxu0 %v3664
    %5538 = vmatprep.subr.bf16.mxu0 %v3669
    %5539 = vmatpush1.bf16.msra.mxu0 %v3668
    %5540 = vmatprep.subr.bf16.mxu0 %v3673
    %5541 = vmatpush1.bf16.msra.mxu0 %v3672
    %5542 = vmatprep.subr.bf16.mxu0 %v3677
    %5543 = vmatpush1.bf16.msra.mxu0 %v3676
    %5544 = vmatprep.subr.bf16.mxu0 %v3681
    %5545 = vmatpush1.bf16.msra.mxu0 %v3680
    %5546 = vmatprep.subr.bf16.mxu0 %v3685
    %5547 = vmatpush1.bf16.msra.mxu0 %v3684
    %5548 = vmatprep.subr.bf16.mxu0 %v3689
    %5549 = vmatpush1.bf16.msra.mxu0 %v3688
    %5550 = vmatprep.subr.bf16.mxu0 %v3693
    %5551 = vmatpush1.bf16.msra.mxu0 %v3692
    %5552 = vmatprep.mubr.bf16.mxu0 %v141
    %5553 = vmatmul.mubr.bf16.gmra.mrb[0].mxu0 %v140
    %v5554 = vpop.f32.mrb[0].mxu0
    %v5555 = vadd.f32 %v5514, %v5554
    %v5556 = vpop.f32.mrb[0].mxu0
    %v5557 = vadd.f32 %v5516, %v5556
    %v5558 = vpop.f32.mrb[0].mxu0
    %v5559 = vpop.f32.mrb[0].mxu0
    %5560 = vdwg.mxu0
    %5561 = vmatprep.subr.bf16.mxu0 %v3697
    %5562 = vmatpush1.bf16.msra.mxu0 %v3696
    %5563 = vmatprep.subr.bf16.mxu0 %v3701
    %5564 = vmatpush1.bf16.msra.mxu0 %v3700
    %5565 = vmatprep.subr.bf16.mxu0 %v3705
    %5566 = vmatpush1.bf16.msra.mxu0 %v3704
    %5567 = vmatprep.subr.bf16.mxu0 %v3709
    %5568 = vmatpush1.bf16.msra.mxu0 %v3708
    %5569 = vmatprep.subr.bf16.mxu0 %v3713
    %5570 = vmatpush1.bf16.msra.mxu0 %v3712
    %5571 = vmatprep.subr.bf16.mxu0 %v3717
    %5572 = vmatpush1.bf16.msra.mxu0 %v3716
    %5573 = vmatprep.subr.bf16.mxu0 %v3721
    %5574 = vmatpush1.bf16.msra.mxu0 %v3720
    %5575 = vmatprep.subr.bf16.mxu0 %v3725
    %5576 = vmatpush1.bf16.msra.mxu0 %v3724
    %5577 = vmatprep.subr.bf16.mxu0 %v3729
    %5578 = vmatpush1.bf16.msra.mxu0 %v3728
    %5579 = vmatprep.subr.bf16.mxu0 %v3733
    %5580 = vmatpush1.bf16.msra.mxu0 %v3732
    %5581 = vmatprep.subr.bf16.mxu0 %v3737
    %5582 = vmatpush1.bf16.msra.mxu0 %v3736
    %5583 = vmatprep.subr.bf16.mxu0 %v3741
    %5584 = vmatpush1.bf16.msra.mxu0 %v3740
    %5585 = vmatprep.subr.bf16.mxu0 %v3745
    %5586 = vmatpush1.bf16.msra.mxu0 %v3744
    %5587 = vmatprep.subr.bf16.mxu0 %v3749
    %5588 = vmatpush1.bf16.msra.mxu0 %v3748
    %5589 = vmatprep.subr.bf16.mxu0 %v3753
    %5590 = vmatpush1.bf16.msra.mxu0 %v3752
    %5591 = vmatprep.subr.bf16.mxu0 %v3757
    %5592 = vmatpush1.bf16.msra.mxu0 %v3756
    %5593 = vmatprep.mubr.bf16.mxu0 %v143
    %5594 = vmatmul.mubr.bf16.gmra.mrb[0].mxu0 %v142
    %v5595 = vpop.f32.mrb[0].mxu0
    %v5596 = vadd.f32 %v5555, %v5595
    %v5597 = vpop.f32.mrb[0].mxu0
    %v5598 = vadd.f32 %v5557, %v5597
    %v5599 = vpop.f32.mrb[0].mxu0
    %v5600 = vpop.f32.mrb[0].mxu0
    %5601 = vdwg.mxu0
    %5602 = vmatprep.subr.bf16.mxu0 %v3761
    %5603 = vmatpush1.bf16.msra.mxu0 %v3760
    %5604 = vmatprep.subr.bf16.mxu0 %v3765
    %5605 = vmatpush1.bf16.msra.mxu0 %v3764
    %5606 = vmatprep.subr.bf16.mxu0 %v3769
    %5607 = vmatpush1.bf16.msra.mxu0 %v3768
    %5608 = vmatprep.subr.bf16.mxu0 %v3773
    %5609 = vmatpush1.bf16.msra.mxu0 %v3772
    %5610 = vmatprep.subr.bf16.mxu0 %v3777
    %5611 = vmatpush1.bf16.msra.mxu0 %v3776
    %5612 = vmatprep.subr.bf16.mxu0 %v3781
    %5613 = vmatpush1.bf16.msra.mxu0 %v3780
    %5614 = vmatprep.subr.bf16.mxu0 %v3785
    %5615 = vmatpush1.bf16.msra.mxu0 %v3784
    %5616 = vmatprep.subr.bf16.mxu0 %v3789
    %5617 = vmatpush1.bf16.msra.mxu0 %v3788
    %5618 = vmatprep.subr.bf16.mxu0 %v3793
    %5619 = vmatpush1.bf16.msra.mxu0 %v3792
    %5620 = vmatprep.subr.bf16.mxu0 %v3797
    %5621 = vmatpush1.bf16.msra.mxu0 %v3796
    %5622 = vmatprep.subr.bf16.mxu0 %v3801
    %5623 = vmatpush1.bf16.msra.mxu0 %v3800
    %5624 = vmatprep.subr.bf16.mxu0 %v3805
    %5625 = vmatpush1.bf16.msra.mxu0 %v3804
    %5626 = vmatprep.subr.bf16.mxu0 %v3809
    %5627 = vmatpush1.bf16.msra.mxu0 %v3808
    %5628 = vmatprep.subr.bf16.mxu0 %v3813
    %5629 = vmatpush1.bf16.msra.mxu0 %v3812
    %5630 = vmatprep.subr.bf16.mxu0 %v3817
    %5631 = vmatpush1.bf16.msra.mxu0 %v3816
    %5632 = vmatprep.subr.bf16.mxu0 %v3821
    %5633 = vmatpush1.bf16.msra.mxu0 %v3820
    %5634 = vmatprep.mubr.bf16.mxu0 %v145
    %5635 = vmatmul.mubr.bf16.gmra.mrb[0].mxu0 %v144
    %v5636 = vpop.f32.mrb[0].mxu0
    %v5637 = vadd.f32 %v5596, %v5636
    %v5638 = vpop.f32.mrb[0].mxu0
    %v5639 = vadd.f32 %v5598, %v5638
    %v5640 = vpop.f32.mrb[0].mxu0
    %v5641 = vpop.f32.mrb[0].mxu0
    %5642 = vdwg.mxu0
    %5643 = vmatprep.subr.bf16.mxu0 %v3825
    %5644 = vmatpush1.bf16.msra.mxu0 %v3824
    %5645 = vmatprep.subr.bf16.mxu0 %v3829
    %5646 = vmatpush1.bf16.msra.mxu0 %v3828
    %5647 = vmatprep.subr.bf16.mxu0 %v3833
    %5648 = vmatpush1.bf16.msra.mxu0 %v3832
    %5649 = vmatprep.subr.bf16.mxu0 %v3837
    %5650 = vmatpush1.bf16.msra.mxu0 %v3836
    %5651 = vmatprep.subr.bf16.mxu0 %v3841
    %5652 = vmatpush1.bf16.msra.mxu0 %v3840
    %5653 = vmatprep.subr.bf16.mxu0 %v3845
    %5654 = vmatpush1.bf16.msra.mxu0 %v3844
    %5655 = vmatprep.subr.bf16.mxu0 %v3849
    %5656 = vmatpush1.bf16.msra.mxu0 %v3848
    %5657 = vmatprep.subr.bf16.mxu0 %v3853
    %5658 = vmatpush1.bf16.msra.mxu0 %v3852
    %5659 = vmatprep.subr.bf16.mxu0 %v3857
    %5660 = vmatpush1.bf16.msra.mxu0 %v3856
    %5661 = vmatprep.subr.bf16.mxu0 %v3861
    %5662 = vmatpush1.bf16.msra.mxu0 %v3860
    %5663 = vmatprep.subr.bf16.mxu0 %v3865
    %5664 = vmatpush1.bf16.msra.mxu0 %v3864
    %5665 = vmatprep.subr.bf16.mxu0 %v3869
    %5666 = vmatpush1.bf16.msra.mxu0 %v3868
    %5667 = vmatprep.subr.bf16.mxu0 %v3873
    %5668 = vmatpush1.bf16.msra.mxu0 %v3872
    %5669 = vmatprep.subr.bf16.mxu0 %v3877
    %5670 = vmatpush1.bf16.msra.mxu0 %v3876
    %5671 = vmatprep.subr.bf16.mxu0 %v3881
    %5672 = vmatpush1.bf16.msra.mxu0 %v3880
    %5673 = vmatprep.subr.bf16.mxu0 %v3885
    %5674 = vmatpush1.bf16.msra.mxu0 %v3884
    %5675 = vmatprep.mubr.bf16.mxu0 %v147
    %5676 = vmatmul.mubr.bf16.gmra.mrb[0].mxu0 %v146
    %v5677 = vpop.f32.mrb[0].mxu0
    %v5678 = vadd.f32 %v5637, %v5677
    %v5679 = vpop.f32.mrb[0].mxu0
    %v5680 = vadd.f32 %v5639, %v5679
    %v5681 = vpop.f32.mrb[0].mxu0
    %v5682 = vpop.f32.mrb[0].mxu0
    %5683 = vdwg.mxu0
    %5684 = vmatprep.subr.bf16.mxu0 %v3889
    %5685 = vmatpush1.bf16.msra.mxu0 %v3888
    %5686 = vmatprep.subr.bf16.mxu0 %v3893
    %5687 = vmatpush1.bf16.msra.mxu0 %v3892
    %5688 = vmatprep.subr.bf16.mxu0 %v3897
    %5689 = vmatpush1.bf16.msra.mxu0 %v3896
    %5690 = vmatprep.subr.bf16.mxu0 %v3901
    %5691 = vmatpush1.bf16.msra.mxu0 %v3900
    %5692 = vmatprep.subr.bf16.mxu0 %v3905
    %5693 = vmatpush1.bf16.msra.mxu0 %v3904
    %5694 = vmatprep.subr.bf16.mxu0 %v3909
    %5695 = vmatpush1.bf16.msra.mxu0 %v3908
    %5696 = vmatprep.subr.bf16.mxu0 %v3913
    %5697 = vmatpush1.bf16.msra.mxu0 %v3912
    %5698 = vmatprep.subr.bf16.mxu0 %v3917
    %5699 = vmatpush1.bf16.msra.mxu0 %v3916
    %5700 = vmatprep.subr.bf16.mxu0 %v3921
    %5701 = vmatpush1.bf16.msra.mxu0 %v3920
    %5702 = vmatprep.subr.bf16.mxu0 %v3925
    %5703 = vmatpush1.bf16.msra.mxu0 %v3924
    %5704 = vmatprep.subr.bf16.mxu0 %v3929
    %5705 = vmatpush1.bf16.msra.mxu0 %v3928
    %5706 = vmatprep.subr.bf16.mxu0 %v3933
    %5707 = vmatpush1.bf16.msra.mxu0 %v3932
    %5708 = vmatprep.subr.bf16.mxu0 %v3937
    %5709 = vmatpush1.bf16.msra.mxu0 %v3936
    %5710 = vmatprep.subr.bf16.mxu0 %v3941
    %5711 = vmatpush1.bf16.msra.mxu0 %v3940
    %5712 = vmatprep.subr.bf16.mxu0 %v3945
    %5713 = vmatpush1.bf16.msra.mxu0 %v3944
    %5714 = vmatprep.subr.bf16.mxu0 %v3949
    %5715 = vmatpush1.bf16.msra.mxu0 %v3948
    %5716 = vmatprep.mubr.bf16.mxu0 %v149
    %5717 = vmatmul.mubr.bf16.gmra.mrb[0].mxu0 %v148
    %v5718 = vpop.f32.mrb[0].mxu0
    %v5719 = vadd.f32 %v5678, %v5718
    %v5720 = vpop.f32.mrb[0].mxu0
    %v5721 = vadd.f32 %v5680, %v5720
    %v5722 = vpop.f32.mrb[0].mxu0
    %v5723 = vpop.f32.mrb[0].mxu0
    %5724 = vdwg.mxu0
    %5725 = vmatprep.subr.bf16.mxu0 %v3953
    %5726 = vmatpush1.bf16.msra.mxu0 %v3952
    %5727 = vmatprep.subr.bf16.mxu0 %v3957
    %5728 = vmatpush1.bf16.msra.mxu0 %v3956
    %5729 = vmatprep.subr.bf16.mxu0 %v3961
    %5730 = vmatpush1.bf16.msra.mxu0 %v3960
    %5731 = vmatprep.subr.bf16.mxu0 %v3965
    %5732 = vmatpush1.bf16.msra.mxu0 %v3964
    %5733 = vmatprep.subr.bf16.mxu0 %v3969
    %5734 = vmatpush1.bf16.msra.mxu0 %v3968
    %5735 = vmatprep.subr.bf16.mxu0 %v3973
    %5736 = vmatpush1.bf16.msra.mxu0 %v3972
    %5737 = vmatprep.subr.bf16.mxu0 %v3977
    %5738 = vmatpush1.bf16.msra.mxu0 %v3976
    %5739 = vmatprep.subr.bf16.mxu0 %v3981
    %5740 = vmatpush1.bf16.msra.mxu0 %v3980
    %5741 = vmatprep.subr.bf16.mxu0 %v3985
    %5742 = vmatpush1.bf16.msra.mxu0 %v3984
    %5743 = vmatprep.subr.bf16.mxu0 %v3989
    %5744 = vmatpush1.bf16.msra.mxu0 %v3988
    %5745 = vmatprep.subr.bf16.mxu0 %v3993
    %5746 = vmatpush1.bf16.msra.mxu0 %v3992
    %5747 = vmatprep.subr.bf16.mxu0 %v3997
    %5748 = vmatpush1.bf16.msra.mxu0 %v3996
    %5749 = vmatprep.subr.bf16.mxu0 %v4001
    %5750 = vmatpush1.bf16.msra.mxu0 %v4000
    %5751 = vmatprep.subr.bf16.mxu0 %v4005
    %5752 = vmatpush1.bf16.msra.mxu0 %v4004
    %5753 = vmatprep.subr.bf16.mxu0 %v4009
    %5754 = vmatpush1.bf16.msra.mxu0 %v4008
    %5755 = vmatprep.subr.bf16.mxu0 %v4013
    %5756 = vmatpush1.bf16.msra.mxu0 %v4012
    %5757 = vmatprep.mubr.bf16.mxu0 %v151
    %5758 = vmatmul.mubr.bf16.gmra.mrb[0].mxu0 %v150
    %v5759 = vpop.f32.mrb[0].mxu0
    %v5760 = vadd.f32 %v5719, %v5759
    %v5761 = vpop.f32.mrb[0].mxu0
    %v5762 = vadd.f32 %v5721, %v5761
    %v5763 = vpop.f32.mrb[0].mxu0
    %v5764 = vpop.f32.mrb[0].mxu0
    %5765 = vdwg.mxu0
    %v5766 = vmax.f32 %v5268, 0.0
    %v5767 = vmax.f32 %v5270, 0.0
    %v5768 = vmax.f32 %v5760, 0.0
    %v5769 = vmax.f32 %v5762, 0.0
    %v5770 = vpack.c.bf16 %v5766, %v5766
    %v5771 = vpack.c.bf16 %v5767, %v5767
    %v5772 = vpack.c.bf16 %v5768, %v5768
    %v5773 = vpack.c.bf16 %v5769, %v5769
    %v5774 = vld [vmem:[#allocation7] sm:$0xff]
    %v5775 = vld [vmem:[#allocation7 + $0x8] sm:$0xff]
    %v5776 = vld [vmem:[#allocation7 + $0x10] sm:$0xff]
    %v5777 = vld [vmem:[#allocation7 + $0x18] sm:$0xff]
    %v5778 = vld [vmem:[#allocation7 + $0x20] sm:$0xff]
    %v5779 = vld [vmem:[#allocation7 + $0x28] sm:$0xff]
    %v5780 = vld [vmem:[#allocation7 + $0x30] sm:$0xff]
    %v5781 = vld [vmem:[#allocation7 + $0x38] sm:$0xff]
    %v5782 = vld [vmem:[#allocation7 + $0x40] sm:$0xff]
    %v5783 = vld [vmem:[#allocation7 + $0x48] sm:$0xff]
    %v5784 = vld [vmem:[#allocation7 + $0x50] sm:$0xff]
    %v5785 = vld [vmem:[#allocation7 + $0x58] sm:$0xff]
    %v5786 = vld [vmem:[#allocation7 + $0x60] sm:$0xff]
    %v5787 = vld [vmem:[#allocation7 + $0x68] sm:$0xff]
    %v5788 = vld [vmem:[#allocation7 + $0x70] sm:$0xff]
    %v5789 = vld [vmem:[#allocation7 + $0x78] sm:$0xff]
    %v5790 = vld [vmem:[#allocation7 + $0x80] sm:$0xff]
    %v5791 = vld [vmem:[#allocation7 + $0x88] sm:$0xff]
    %v5792 = vld [vmem:[#allocation7 + $0x90] sm:$0xff]
    %v5793 = vld [vmem:[#allocation7 + $0x98] sm:$0xff]
    %v5794 = vld [vmem:[#allocation7 + $0xa0] sm:$0xff]
    %v5795 = vld [vmem:[#allocation7 + $0xa8] sm:$0xff]
    %v5796 = vld [vmem:[#allocation7 + $0xb0] sm:$0xff]
    %v5797 = vld [vmem:[#allocation7 + $0xb8] sm:$0xff]
    %v5798 = vld [vmem:[#allocation7 + $0xc0] sm:$0xff]
    %v5799 = vld [vmem:[#allocation7 + $0xc8] sm:$0xff]
    %v5800 = vld [vmem:[#allocation7 + $0xd0] sm:$0xff]
    %v5801 = vld [vmem:[#allocation7 + $0xd8] sm:$0xff]
    %v5802 = vld [vmem:[#allocation7 + $0xe0] sm:$0xff]
    %v5803 = vld [vmem:[#allocation7 + $0xe8] sm:$0xff]
    %v5804 = vld [vmem:[#allocation7 + $0xf0] sm:$0xff]
    %v5805 = vld [vmem:[#allocation7 + $0xf8] sm:$0xff]
    %v5806 = vld [vmem:[#allocation7 + $0x100] sm:$0xff]
    %v5807 = vld [vmem:[#allocation7 + $0x108] sm:$0xff]
    %v5808 = vld [vmem:[#allocation7 + $0x110] sm:$0xff]
    %v5809 = vld [vmem:[#allocation7 + $0x118] sm:$0xff]
    %v5810 = vld [vmem:[#allocation7 + $0x120] sm:$0xff]
    %v5811 = vld [vmem:[#allocation7 + $0x128] sm:$0xff]
    %v5812 = vld [vmem:[#allocation7 + $0x130] sm:$0xff]
    %v5813 = vld [vmem:[#allocation7 + $0x138] sm:$0xff]
    %v5814 = vld [vmem:[#allocation7 + $0x140] sm:$0xff]
    %v5815 = vld [vmem:[#allocation7 + $0x148] sm:$0xff]
    %v5816 = vld [vmem:[#allocation7 + $0x150] sm:$0xff]
    %v5817 = vld [vmem:[#allocation7 + $0x158] sm:$0xff]
    %v5818 = vld [vmem:[#allocation7 + $0x160] sm:$0xff]
    %v5819 = vld [vmem:[#allocation7 + $0x168] sm:$0xff]
    %v5820 = vld [vmem:[#allocation7 + $0x170] sm:$0xff]
    %v5821 = vld [vmem:[#allocation7 + $0x178] sm:$0xff]
    %v5822 = vld [vmem:[#allocation7 + $0x180] sm:$0xff]
    %v5823 = vld [vmem:[#allocation7 + $0x188] sm:$0xff]
    %v5824 = vld [vmem:[#allocation7 + $0x190] sm:$0xff]
    %v5825 = vld [vmem:[#allocation7 + $0x198] sm:$0xff]
    %v5826 = vld [vmem:[#allocation7 + $0x1a0] sm:$0xff]
    %v5827 = vld [vmem:[#allocation7 + $0x1a8] sm:$0xff]
    %v5828 = vld [vmem:[#allocation7 + $0x1b0] sm:$0xff]
    %v5829 = vld [vmem:[#allocation7 + $0x1b8] sm:$0xff]
    %v5830 = vld [vmem:[#allocation7 + $0x1c0] sm:$0xff]
    %v5831 = vld [vmem:[#allocation7 + $0x1c8] sm:$0xff]
    %v5832 = vld [vmem:[#allocation7 + $0x1d0] sm:$0xff]
    %v5833 = vld [vmem:[#allocation7 + $0x1d8] sm:$0xff]
    %v5834 = vld [vmem:[#allocation7 + $0x1e0] sm:$0xff]
    %v5835 = vld [vmem:[#allocation7 + $0x1e8] sm:$0xff]
    %v5836 = vld [vmem:[#allocation7 + $0x1f0] sm:$0xff]
    %v5837 = vld [vmem:[#allocation7 + $0x1f8] sm:$0xff]
    %v5838 = vld [vmem:[#allocation8] sm:$0x3]
    %v5840 = vlaneseq
    %v5841 = vshrl.u32 %v5840, 7
    %v5842 = vsub.s32 0, %v5841
    %v5843 = vrot.slane %v5838, %v5842
    %v5844 = vlaneseq
    %v5845 = vshrl.u32 %v5844, 7
    %v5846 = vsub.s32 1, %v5845
    %v5847 = vrot.slane %v5838, %v5846
    %v5914 = vunpack.c.l.b16 %v5774
    %v5915 = vunpack.c.h.b16 %v5774
    %v5916 = vunpack.c.l.b16 %v5775
    %v5917 = vunpack.c.h.b16 %v5775
    %v5918 = vunpack.c.l.b16 %v5776
    %v5919 = vunpack.c.h.b16 %v5776
    %v5920 = vunpack.c.l.b16 %v5777
    %v5921 = vunpack.c.h.b16 %v5777
    %v5922 = vunpack.c.l.b16 %v5778
    %v5923 = vunpack.c.h.b16 %v5778
    %v5924 = vunpack.c.l.b16 %v5779
    %v5925 = vunpack.c.h.b16 %v5779
    %v5926 = vunpack.c.l.b16 %v5780
    %v5927 = vunpack.c.h.b16 %v5780
    %v5928 = vunpack.c.l.b16 %v5781
    %v5929 = vunpack.c.h.b16 %v5781
    %v5930 = vunpack.c.l.b16 %v5782
    %v5931 = vunpack.c.h.b16 %v5782
    %v5932 = vunpack.c.l.b16 %v5783
    %v5933 = vunpack.c.h.b16 %v5783
    %v5934 = vunpack.c.l.b16 %v5784
    %v5935 = vunpack.c.h.b16 %v5784
    %v5936 = vunpack.c.l.b16 %v5785
    %v5937 = vunpack.c.h.b16 %v5785
    %v5938 = vunpack.c.l.b16 %v5786
    %v5939 = vunpack.c.h.b16 %v5786
    %v5940 = vunpack.c.l.b16 %v5787
    %v5941 = vunpack.c.h.b16 %v5787
    %v5942 = vunpack.c.l.b16 %v5788
    %v5943 = vunpack.c.h.b16 %v5788
    %v5944 = vunpack.c.l.b16 %v5789
    %v5945 = vunpack.c.h.b16 %v5789
    %v5946 = vunpack.c.l.b16 %v5790
    %v5947 = vunpack.c.h.b16 %v5790
    %v5948 = vunpack.c.l.b16 %v5791
    %v5949 = vunpack.c.h.b16 %v5791
    %v5950 = vunpack.c.l.b16 %v5792
    %v5951 = vunpack.c.h.b16 %v5792
    %v5952 = vunpack.c.l.b16 %v5793
    %v5953 = vunpack.c.h.b16 %v5793
    %v5954 = vunpack.c.l.b16 %v5794
    %v5955 = vunpack.c.h.b16 %v5794
    %v5956 = vunpack.c.l.b16 %v5795
    %v5957 = vunpack.c.h.b16 %v5795
    %v5958 = vunpack.c.l.b16 %v5796
    %v5959 = vunpack.c.h.b16 %v5796
    %v5960 = vunpack.c.l.b16 %v5797
    %v5961 = vunpack.c.h.b16 %v5797
    %v5962 = vunpack.c.l.b16 %v5798
    %v5963 = vunpack.c.h.b16 %v5798
    %v5964 = vunpack.c.l.b16 %v5799
    %v5965 = vunpack.c.h.b16 %v5799
    %v5966 = vunpack.c.l.b16 %v5800
    %v5967 = vunpack.c.h.b16 %v5800
    %v5968 = vunpack.c.l.b16 %v5801
    %v5969 = vunpack.c.h.b16 %v5801
    %v5970 = vunpack.c.l.b16 %v5802
    %v5971 = vunpack.c.h.b16 %v5802
    %v5972 = vunpack.c.l.b16 %v5803
    %v5973 = vunpack.c.h.b16 %v5803
    %v5974 = vunpack.c.l.b16 %v5804
    %v5975 = vunpack.c.h.b16 %v5804
    %v5976 = vunpack.c.l.b16 %v5805
    %v5977 = vunpack.c.h.b16 %v5805
    %v5978 = vunpack.c.l.b16 %v5806
    %v5979 = vunpack.c.h.b16 %v5806
    %v5980 = vunpack.c.l.b16 %v5807
    %v5981 = vunpack.c.h.b16 %v5807
    %v5982 = vunpack.c.l.b16 %v5808
    %v5983 = vunpack.c.h.b16 %v5808
    %v5984 = vunpack.c.l.b16 %v5809
    %v5985 = vunpack.c.h.b16 %v5809
    %v5986 = vunpack.c.l.b16 %v5810
    %v5987 = vunpack.c.h.b16 %v5810
    %v5988 = vunpack.c.l.b16 %v5811
    %v5989 = vunpack.c.h.b16 %v5811
    %v5990 = vunpack.c.l.b16 %v5812
    %v5991 = vunpack.c.h.b16 %v5812
    %v5992 = vunpack.c.l.b16 %v5813
    %v5993 = vunpack.c.h.b16 %v5813
    %v5994 = vunpack.c.l.b16 %v5814
    %v5995 = vunpack.c.h.b16 %v5814
    %v5996 = vunpack.c.l.b16 %v5815
    %v5997 = vunpack.c.h.b16 %v5815
    %v5998 = vunpack.c.l.b16 %v5816
    %v5999 = vunpack.c.h.b16 %v5816
    %v6000 = vunpack.c.l.b16 %v5817
    %v6001 = vunpack.c.h.b16 %v5817
    %v6002 = vunpack.c.l.b16 %v5818
    %v6003 = vunpack.c.h.b16 %v5818
    %v6004 = vunpack.c.l.b16 %v5819
    %v6005 = vunpack.c.h.b16 %v5819
    %v6006 = vunpack.c.l.b16 %v5820
    %v6007 = vunpack.c.h.b16 %v5820
    %v6008 = vunpack.c.l.b16 %v5821
    %v6009 = vunpack.c.h.b16 %v5821
    %v6010 = vunpack.c.l.b16 %v5822
    %v6011 = vunpack.c.h.b16 %v5822
    %v6012 = vunpack.c.l.b16 %v5823
    %v6013 = vunpack.c.h.b16 %v5823
    %v6014 = vunpack.c.l.b16 %v5824
    %v6015 = vunpack.c.h.b16 %v5824
    %v6016 = vunpack.c.l.b16 %v5825
    %v6017 = vunpack.c.h.b16 %v5825
    %v6018 = vunpack.c.l.b16 %v5826
    %v6019 = vunpack.c.h.b16 %v5826
    %v6020 = vunpack.c.l.b16 %v5827
    %v6021 = vunpack.c.h.b16 %v5827
    %v6022 = vunpack.c.l.b16 %v5828
    %v6023 = vunpack.c.h.b16 %v5828
    %v6024 = vunpack.c.l.b16 %v5829
    %v6025 = vunpack.c.h.b16 %v5829
    %v6026 = vunpack.c.l.b16 %v5830
    %v6027 = vunpack.c.h.b16 %v5830
    %v6028 = vunpack.c.l.b16 %v5831
    %v6029 = vunpack.c.h.b16 %v5831
    %v6030 = vunpack.c.l.b16 %v5832
    %v6031 = vunpack.c.h.b16 %v5832
    %v6032 = vunpack.c.l.b16 %v5833
    %v6033 = vunpack.c.h.b16 %v5833
    %v6034 = vunpack.c.l.b16 %v5834
    %v6035 = vunpack.c.h.b16 %v5834
    %v6036 = vunpack.c.l.b16 %v5835
    %v6037 = vunpack.c.h.b16 %v5835
    %v6038 = vunpack.c.l.b16 %v5836
    %v6039 = vunpack.c.h.b16 %v5836
    %v6040 = vunpack.c.l.b16 %v5837
    %v6041 = vunpack.c.h.b16 %v5837
    %v6042 = vpack.c.b16 %v5916, %v5914
    %v6043 = vpack.c.b16 %v5917, %v5915
    %v6044 = vpack.c.b16 %v5920, %v5918
    %v6045 = vpack.c.b16 %v5921, %v5919
    %v6046 = vpack.c.b16 %v5924, %v5922
    %v6047 = vpack.c.b16 %v5925, %v5923
    %v6048 = vpack.c.b16 %v5928, %v5926
    %v6049 = vpack.c.b16 %v5929, %v5927
    %v6050 = vpack.c.b16 %v5932, %v5930
    %v6051 = vpack.c.b16 %v5933, %v5931
    %v6052 = vpack.c.b16 %v5936, %v5934
    %v6053 = vpack.c.b16 %v5937, %v5935
    %v6054 = vpack.c.b16 %v5940, %v5938
    %v6055 = vpack.c.b16 %v5941, %v5939
    %v6056 = vpack.c.b16 %v5944, %v5942
    %v6057 = vpack.c.b16 %v5945, %v5943
    %v6058 = vpack.c.b16 %v5948, %v5946
    %v6059 = vpack.c.b16 %v5949, %v5947
    %v6060 = vpack.c.b16 %v5952, %v5950
    %v6061 = vpack.c.b16 %v5953, %v5951
    %v6062 = vpack.c.b16 %v5956, %v5954
    %v6063 = vpack.c.b16 %v5957, %v5955
    %v6064 = vpack.c.b16 %v5960, %v5958
    %v6065 = vpack.c.b16 %v5961, %v5959
    %v6066 = vpack.c.b16 %v5964, %v5962
    %v6067 = vpack.c.b16 %v5965, %v5963
    %v6068 = vpack.c.b16 %v5968, %v5966
    %v6069 = vpack.c.b16 %v5969, %v5967
    %v6070 = vpack.c.b16 %v5972, %v5970
    %v6071 = vpack.c.b16 %v5973, %v5971
    %v6072 = vpack.c.b16 %v5976, %v5974
    %v6073 = vpack.c.b16 %v5977, %v5975
    %v6074 = vpack.c.b16 %v5980, %v5978
    %v6075 = vpack.c.b16 %v5981, %v5979
    %v6076 = vpack.c.b16 %v5984, %v5982
    %v6077 = vpack.c.b16 %v5985, %v5983
    %v6078 = vpack.c.b16 %v5988, %v5986
    %v6079 = vpack.c.b16 %v5989, %v5987
    %v6080 = vpack.c.b16 %v5992, %v5990
    %v6081 = vpack.c.b16 %v5993, %v5991
    %v6082 = vpack.c.b16 %v5996, %v5994
    %v6083 = vpack.c.b16 %v5997, %v5995
    %v6084 = vpack.c.b16 %v6000, %v5998
    %v6085 = vpack.c.b16 %v6001, %v5999
    %v6086 = vpack.c.b16 %v6004, %v6002
    %v6087 = vpack.c.b16 %v6005, %v6003
    %v6088 = vpack.c.b16 %v6008, %v6006
    %v6089 = vpack.c.b16 %v6009, %v6007
    %v6090 = vpack.c.b16 %v6012, %v6010
    %v6091 = vpack.c.b16 %v6013, %v6011
    %v6092 = vpack.c.b16 %v6016, %v6014
    %v6093 = vpack.c.b16 %v6017, %v6015
    %v6094 = vpack.c.b16 %v6020, %v6018
    %v6095 = vpack.c.b16 %v6021, %v6019
    %v6096 = vpack.c.b16 %v6024, %v6022
    %v6097 = vpack.c.b16 %v6025, %v6023
    %v6098 = vpack.c.b16 %v6028, %v6026
    %v6099 = vpack.c.b16 %v6029, %v6027
    %v6100 = vpack.c.b16 %v6032, %v6030
    %v6101 = vpack.c.b16 %v6033, %v6031
    %v6102 = vpack.c.b16 %v6036, %v6034
    %v6103 = vpack.c.b16 %v6037, %v6035
    %v6104 = vpack.c.b16 %v6040, %v6038
    %v6105 = vpack.c.b16 %v6041, %v6039
    %6170 = vmatprep.subr.bf16.mxu0 %v6043
    %6171 = vmatpush1.bf16.msra.mxu0 %v6042
    %6172 = vmatprep.subr.bf16.mxu0 %v6045
    %6173 = vmatpush1.bf16.msra.mxu0 %v6044
    %6174 = vmatprep.subr.bf16.mxu0 %v6047
    %6175 = vmatpush1.bf16.msra.mxu0 %v6046
    %6176 = vmatprep.subr.bf16.mxu0 %v6049
    %6177 = vmatpush1.bf16.msra.mxu0 %v6048
    %6178 = vmatprep.subr.bf16.mxu0 %v6051
    %6179 = vmatpush1.bf16.msra.mxu0 %v6050
    %6180 = vmatprep.subr.bf16.mxu0 %v6053
    %6181 = vmatpush1.bf16.msra.mxu0 %v6052
    %6182 = vmatprep.subr.bf16.mxu0 %v6055
    %6183 = vmatpush1.bf16.msra.mxu0 %v6054
    %6184 = vmatprep.subr.bf16.mxu0 %v6057
    %6185 = vmatpush1.bf16.msra.mxu0 %v6056
    %6186 = vmatprep.subr.bf16.mxu0 %v6059
    %6187 = vmatpush1.bf16.msra.mxu0 %v6058
    %6188 = vmatprep.subr.bf16.mxu0 %v6061
    %6189 = vmatpush1.bf16.msra.mxu0 %v6060
    %6190 = vmatprep.subr.bf16.mxu0 %v6063
    %6191 = vmatpush1.bf16.msra.mxu0 %v6062
    %6192 = vmatprep.subr.bf16.mxu0 %v6065
    %6193 = vmatpush1.bf16.msra.mxu0 %v6064
    %6194 = vmatprep.subr.bf16.mxu0 %v6067
    %6195 = vmatpush1.bf16.msra.mxu0 %v6066
    %6196 = vmatprep.subr.bf16.mxu0 %v6069
    %6197 = vmatpush1.bf16.msra.mxu0 %v6068
    %6198 = vmatprep.subr.bf16.mxu0 %v6071
    %6199 = vmatpush1.bf16.msra.mxu0 %v6070
    %6200 = vmatprep.subr.bf16.mxu0 %v6073
    %6201 = vmatpush1.bf16.msra.mxu0 %v6072
    %6202 = vmatprep.mubr.bf16.mxu0 %v5771
    %6203 = vmatmul.mubr.bf16.gmra.mrb[0].mxu0 %v5770
    %v6204 = vpop.f32.mrb[0].mxu0
    %v6205 = vadd.f32 %v5843, %v6204
    %v6206 = vpop.f32.mrb[0].mxu0
    %v6207 = vadd.f32 %v5847, %v6206
    %v6208 = vpop.f32.mrb[0].mxu0
    %v6209 = vpop.f32.mrb[0].mxu0
    %6210 = vdwg.mxu0
    %6211 = vmatprep.subr.bf16.mxu0 %v6075
    %6212 = vmatpush1.bf16.msra.mxu0 %v6074
    %6213 = vmatprep.subr.bf16.mxu0 %v6077
    %6214 = vmatpush1.bf16.msra.mxu0 %v6076
    %6215 = vmatprep.subr.bf16.mxu0 %v6079
    %6216 = vmatpush1.bf16.msra.mxu0 %v6078
    %6217 = vmatprep.subr.bf16.mxu0 %v6081
    %6218 = vmatpush1.bf16.msra.mxu0 %v6080
    %6219 = vmatprep.subr.bf16.mxu0 %v6083
    %6220 = vmatpush1.bf16.msra.mxu0 %v6082
    %6221 = vmatprep.subr.bf16.mxu0 %v6085
    %6222 = vmatpush1.bf16.msra.mxu0 %v6084
    %6223 = vmatprep.subr.bf16.mxu0 %v6087
    %6224 = vmatpush1.bf16.msra.mxu0 %v6086
    %6225 = vmatprep.subr.bf16.mxu0 %v6089
    %6226 = vmatpush1.bf16.msra.mxu0 %v6088
    %6227 = vmatprep.subr.bf16.mxu0 %v6091
    %6228 = vmatpush1.bf16.msra.mxu0 %v6090
    %6229 = vmatprep.subr.bf16.mxu0 %v6093
    %6230 = vmatpush1.bf16.msra.mxu0 %v6092
    %6231 = vmatprep.subr.bf16.mxu0 %v6095
    %6232 = vmatpush1.bf16.msra.mxu0 %v6094
    %6233 = vmatprep.subr.bf16.mxu0 %v6097
    %6234 = vmatpush1.bf16.msra.mxu0 %v6096
    %6235 = vmatprep.subr.bf16.mxu0 %v6099
    %6236 = vmatpush1.bf16.msra.mxu0 %v6098
    %6237 = vmatprep.subr.bf16.mxu0 %v6101
    %6238 = vmatpush1.bf16.msra.mxu0 %v6100
    %6239 = vmatprep.subr.bf16.mxu0 %v6103
    %6240 = vmatpush1.bf16.msra.mxu0 %v6102
    %6241 = vmatprep.subr.bf16.mxu0 %v6105
    %6242 = vmatpush1.bf16.msra.mxu0 %v6104
    %6243 = vmatprep.mubr.bf16.mxu0 %v5773
    %6244 = vmatmul.mubr.bf16.gmra.mrb[0].mxu0 %v5772
    %v6245 = vpop.f32.mrb[0].mxu0
    %v6246 = vadd.f32 %v6205, %v6245
    %v6247 = vpop.f32.mrb[0].mxu0
    %v6248 = vadd.f32 %v6207, %v6247
    %v6249 = vpop.f32.mrb[0].mxu0
    %v6250 = vpop.f32.mrb[0].mxu0
    %6251 = vdwg.mxu0
    %v6252 = vmax.f32 %v6246, 0.0
    %v6253 = vmax.f32 %v6248, 0.0
    %v6254 = vpack.c.bf16 %v6252, %v6252
    %v6255 = vpack.c.bf16 %v6253, %v6253
    %v6256 = vld [vmem:[#allocation10] sm:$0xf]
    %v6257 = vld [vmem:[#allocation10 + $0x4] sm:$0xf]
    %v6258 = vld [vmem:[#allocation10 + $0x8] sm:$0xf]
    %v6259 = vld [vmem:[#allocation10 + $0xc] sm:$0xf]
    %v6260 = vld [vmem:[#allocation10 + $0x10] sm:$0xf]
    %v6261 = vld [vmem:[#allocation10 + $0x14] sm:$0xf]
    %v6262 = vld [vmem:[#allocation10 + $0x18] sm:$0xf]
    %v6263 = vld [vmem:[#allocation10 + $0x1c] sm:$0xf]
    %v6264 = vld [vmem:[#allocation10 + $0x20] sm:$0xf]
    %v6265 = vld [vmem:[#allocation10 + $0x24] sm:$0xf]
    %v6266 = vld [vmem:[#allocation10 + $0x28] sm:$0xf]
    %v6267 = vld [vmem:[#allocation10 + $0x2c] sm:$0xf]
    %v6268 = vld [vmem:[#allocation10 + $0x30] sm:$0xf]
    %v6269 = vld [vmem:[#allocation10 + $0x34] sm:$0xf]
    %v6270 = vld [vmem:[#allocation10 + $0x38] sm:$0xf]
    %v6271 = vld [vmem:[#allocation10 + $0x3c] sm:$0xf]
    %v6272 = vld [vmem:[#allocation10 + $0x40] sm:$0xf]
    %v6273 = vld [vmem:[#allocation10 + $0x44] sm:$0xf]
    %v6274 = vld [vmem:[#allocation10 + $0x48] sm:$0xf]
    %v6275 = vld [vmem:[#allocation10 + $0x4c] sm:$0xf]
    %v6276 = vld [vmem:[#allocation10 + $0x50] sm:$0xf]
    %v6277 = vld [vmem:[#allocation10 + $0x54] sm:$0xf]
    %v6278 = vld [vmem:[#allocation10 + $0x58] sm:$0xf]
    %v6279 = vld [vmem:[#allocation10 + $0x5c] sm:$0xf]
    %v6280 = vld [vmem:[#allocation10 + $0x60] sm:$0xf]
    %v6281 = vld [vmem:[#allocation10 + $0x64] sm:$0xf]
    %v6282 = vld [vmem:[#allocation10 + $0x68] sm:$0xf]
    %v6283 = vld [vmem:[#allocation10 + $0x6c] sm:$0xf]
    %v6284 = vld [vmem:[#allocation10 + $0x70] sm:$0xf]
    %v6285 = vld [vmem:[#allocation10 + $0x74] sm:$0xf]
    %v6286 = vld [vmem:[#allocation10 + $0x78] sm:$0xf]
    %v6287 = vld [vmem:[#allocation10 + $0x7c] sm:$0xf]
    %v6288 = vld [vmem:[#allocation11] sm:$0x1]
    %v6290 = vlaneseq
    %v6291 = vshrl.u32 %v6290, 7
    %v6292 = vsub.s32 0, %v6291
    %v6293 = vrot.slane %v6288, %v6292
    %v6327 = vunpack.c.l.b16 %v6256
    %v6328 = vunpack.c.l.b16 %v6257
    %v6329 = vunpack.c.l.b16 %v6258
    %v6330 = vunpack.c.l.b16 %v6259
    %v6331 = vunpack.c.l.b16 %v6260
    %v6332 = vunpack.c.l.b16 %v6261
    %v6333 = vunpack.c.l.b16 %v6262
    %v6334 = vunpack.c.l.b16 %v6263
    %v6335 = vunpack.c.l.b16 %v6264
    %v6336 = vunpack.c.l.b16 %v6265
    %v6337 = vunpack.c.l.b16 %v6266
    %v6338 = vunpack.c.l.b16 %v6267
    %v6339 = vunpack.c.l.b16 %v6268
    %v6340 = vunpack.c.l.b16 %v6269
    %v6341 = vunpack.c.l.b16 %v6270
    %v6342 = vunpack.c.l.b16 %v6271
    %v6343 = vunpack.c.l.b16 %v6272
    %v6344 = vunpack.c.l.b16 %v6273
    %v6345 = vunpack.c.l.b16 %v6274
    %v6346 = vunpack.c.l.b16 %v6275
    %v6347 = vunpack.c.l.b16 %v6276
    %v6348 = vunpack.c.l.b16 %v6277
    %v6349 = vunpack.c.l.b16 %v6278
    %v6350 = vunpack.c.l.b16 %v6279
    %v6351 = vunpack.c.l.b16 %v6280
    %v6352 = vunpack.c.l.b16 %v6281
    %v6353 = vunpack.c.l.b16 %v6282
    %v6354 = vunpack.c.l.b16 %v6283
    %v6355 = vunpack.c.l.b16 %v6284
    %v6356 = vunpack.c.l.b16 %v6285
    %v6357 = vunpack.c.l.b16 %v6286
    %v6358 = vunpack.c.l.b16 %v6287
    %v6359 = vpack.c.b16 %v6328, %v6327
    %v6360 = vpack.c.b16 %v6330, %v6329
    %v6361 = vpack.c.b16 %v6332, %v6331
    %v6362 = vpack.c.b16 %v6334, %v6333
    %v6363 = vpack.c.b16 %v6336, %v6335
    %v6364 = vpack.c.b16 %v6338, %v6337
    %v6365 = vpack.c.b16 %v6340, %v6339
    %v6366 = vpack.c.b16 %v6342, %v6341
    %v6367 = vpack.c.b16 %v6344, %v6343
    %v6368 = vpack.c.b16 %v6346, %v6345
    %v6369 = vpack.c.b16 %v6348, %v6347
    %v6370 = vpack.c.b16 %v6350, %v6349
    %v6371 = vpack.c.b16 %v6352, %v6351
    %v6372 = vpack.c.b16 %v6354, %v6353
    %v6373 = vpack.c.b16 %v6356, %v6355
    %v6374 = vpack.c.b16 %v6358, %v6357
    %6391 = vmatprep.subr.bf16.mxu0 0
    %6392 = vmatpush1.bf16.msra.mxu0 %v6359
    %6393 = vmatprep.subr.bf16.mxu0 0
    %6394 = vmatpush1.bf16.msra.mxu0 %v6360
    %6395 = vmatprep.subr.bf16.mxu0 0
    %6396 = vmatpush1.bf16.msra.mxu0 %v6361
    %6397 = vmatprep.subr.bf16.mxu0 0
    %6398 = vmatpush1.bf16.msra.mxu0 %v6362
    %6399 = vmatprep.subr.bf16.mxu0 0
    %6400 = vmatpush1.bf16.msra.mxu0 %v6363
    %6401 = vmatprep.subr.bf16.mxu0 0
    %6402 = vmatpush1.bf16.msra.mxu0 %v6364
    %6403 = vmatprep.subr.bf16.mxu0 0
    %6404 = vmatpush1.bf16.msra.mxu0 %v6365
    %6405 = vmatprep.subr.bf16.mxu0 0
    %6406 = vmatpush1.bf16.msra.mxu0 %v6366
    %6407 = vmatprep.subr.bf16.mxu0 0
    %6408 = vmatpush1.bf16.msra.mxu0 %v6367
    %6409 = vmatprep.subr.bf16.mxu0 0
    %6410 = vmatpush1.bf16.msra.mxu0 %v6368
    %6411 = vmatprep.subr.bf16.mxu0 0
    %6412 = vmatpush1.bf16.msra.mxu0 %v6369
    %6413 = vmatprep.subr.bf16.mxu0 0
    %6414 = vmatpush1.bf16.msra.mxu0 %v6370
    %6415 = vmatprep.subr.bf16.mxu0 0
    %6416 = vmatpush1.bf16.msra.mxu0 %v6371
    %6417 = vmatprep.subr.bf16.mxu0 0
    %6418 = vmatpush1.bf16.msra.mxu0 %v6372
    %6419 = vmatprep.subr.bf16.mxu0 0
    %6420 = vmatpush1.bf16.msra.mxu0 %v6373
    %6421 = vmatprep.subr.bf16.mxu0 0
    %6422 = vmatpush1.bf16.msra.mxu0 %v6374
    %6423 = vmatprep.mubr.bf16.mxu0 %v6255
    %6424 = vmatmul.mubr.bf16.gmra.mrb[0].mxu0 %v6254
    %v6425 = vpop.f32.mrb[0].mxu0
    %v6426 = vadd.f32 %v6293, %v6425
    %v6427 = vpop.f32.mrb[0].mxu0
    %v6428 = vpop.f32.mrb[0].mxu0
    %v6429 = vpop.f32.mrb[0].mxu0
    %6430 = vdwg.mxu0
    %6431 = vst [vmem:[#allocation13] sm:$0xff] %v6426
    // Predicated region
    $region54: #{mlp_forward.1} parent=1 // pred_check
      _
    $region55: #{mlp_forward.1} parent=1 // pred_check_branch
      %6433 = sbr.rel (0) target = $region57
    $region56: #{mlp_forward.1} parent=1 // pred_region
      %s6435 = ssub.s32 128, 128
      %6436 = vsyncadd [#allocation4], %s6435
      %s6438 = sshll.u32 [#allocation13], 4
      %s6439 = int_to_ptr.vmem [resolvable:$true] %s6438
      %6441 = dma.vmem_to_hbm [thread:$0]  %s6439, 128, %s7, [#allocation4]
    $region57: #{mlp_forward.1} parent=1 // pred_fallthru
      _
    // Predicated region
    $region58: #{mlp_forward.1} parent=1 // pred_check
      _
    $region59: #{mlp_forward.1} parent=1 // pred_check_branch
      %6443 = sbr.rel (0) target = $region61
    $region60: #{mlp_forward.1} parent=1 // pred_region
      %6444 = dma.done [#allocation4], 128
    $region61: #{mlp_forward.1} parent=1 // pred_fallthru
      _
    %6445 = vsyncpa [#allocation3], 1
    %6446 = vsyncpa [#allocation6], 1
    %6447 = vsyncpa [#allocation9], 1
    %6448 = vsyncpa [#allocation12], 1
    %6449 = vsyncpa [#allocation4], 1

</llo_original>
